<compile_context>
chip_gen: v7x
topology: tpu7x:2x2x1
jax: 0.10.0
libtpu: 0.0.40
codegen_flags: <defaults>
</compile_context>

<pallas_src>
import functools

import jax
import jax.numpy as jnp
import numpy as np
from jax.experimental import pallas as pl
from jax.experimental.pallas import tpu as pltpu


def _shift_lanes(x, s, n):
    """y[..., p] = x[..., p + s] if 0 <= p + s < n else 0. `s` is a static int."""
    if s == 0:
        return x
    pad = jnp.zeros(x.shape[:-1] + (abs(s),), x.dtype)
    if s > 0:
        return jnp.concatenate([x[..., s:], pad], axis=-1)
    return jnp.concatenate([pad, x[..., : n + s]], axis=-1)


def _rdb_kernel(*refs, Cin, G, n_dense, D, H, W, K):
    # refs = (x, masks, w0, b0, ..., w_{n-1}, b_{n-1}, w1x1, out, feat, patch)
    x_ref, masks_ref = refs[0], refs[1]
    dense_w = [refs[2 + 2 * i] for i in range(n_dense)]
    dense_b = [refs[3 + 2 * i] for i in range(n_dense)]
    w1x1_ref = refs[2 + 2 * n_dense]
    o_ref = refs[3 + 2 * n_dense]
    feat_ref = refs[4 + 2 * n_dense]
    patch_ref = refs[5 + 2 * n_dense]

    DHW = D * H * W
    P = (K - 1) // 2
    C_max = Cin + (n_dense - 1) * G          # widest dense-layer input width
    offs = [k - P for k in range(K)]
    taps = [(dd, dh, dw) for dd in offs for dh in offs for dw in offs]

    # Patch rows for channels not produced yet must read as exact zero (their
    # weight columns are zero-padded, but 0 * uninitialized-VMEM could be NaN).
    patch_ref[...] = jnp.zeros_like(patch_ref)

    # Seed the VMEM-resident feature map with the input channels (written once).
    feat_ref[pl.ds(0, Cin), :] = x_ref[0].astype(jnp.float32)

    # Hoist per-tap validity masks (shape (1, DHW)); reused by every layer.
    mask_rows = [masks_ref[pl.ds(t, 1), :] for t in range(len(taps))]

    def fill_patch(c0, cn):
        """Append channels [c0, c0+cn) of `feat` to the im2col patch, all taps."""
        blk = feat_ref[pl.ds(c0, cn), :]                        # (cn, DHW)
        for t, (dd, dh, dw) in enumerate(taps):
            s = dd * H * W + dh * W + dw
            sh = _shift_lanes(blk, s, DHW)                      # neighbour values
            patch_ref[pl.ds(t * C_max + c0, cn), :] = sh * mask_rows[t]

    fill_patch(0, Cin)
    c = Cin
    for i in range(n_dense):
        # One deep matmul per dense layer: (G, K^3*C_max) . (K^3*C_max, DHW).
        y = jnp.dot(dense_w[i][...], patch_ref[...],
                    preferred_element_type=jnp.float32)         # (G, DHW)
        y = jnp.maximum(y + dense_b[i][...], 0.0)               # bias + ReLU
        feat_ref[pl.ds(c, G), :] = y                            # channel concat
        if i + 1 < n_dense:
            fill_patch(c, G)                                    # only new channels
        c += G

    # 1x1x1 conv (no bias): pure channel contraction, lane-dense output.
    out = jnp.dot(w1x1_ref[...], feat_ref[...],
                  preferred_element_type=jnp.float32)           # (Cout, DHW)
    o_ref[0] = out.astype(o_ref.dtype)


def _tap_masks(D, H, W, K):
    """(K^3, D*H*W) f32 validity mask per conv tap (zero-padding realized here)."""
    P = (K - 1) // 2
    d = np.arange(D)[:, None, None]
    h = np.arange(H)[None, :, None]
    w = np.arange(W)[None, None, :]
    rows = []
    for kd in range(K):
        for kh in range(K):
            for kw in range(K):
                dd, dh, dw = kd - P, kh - P, kw - P
                m = ((d + dd >= 0) & (d + dd < D) &
                     (h + dh >= 0) & (h + dh < H) &
                     (w + dw >= 0) & (w + dw < W))
                rows.append(m.reshape(-1))
    return jnp.asarray(np.stack(rows), dtype=jnp.float32)


def rdb_forward(x, params):
    """x: (N, Cin, D, H, W) float32 -- NCDHW, identical to the PyTorch module."""
    N, Cin, D, H, W = x.shape
    dense = params["dense"]
    n_dense = len(dense)
    G = dense[0][0].shape[0]
    K = dense[0][0].shape[2]
    w1x1 = params["conv1x1"]
    Cout, C_total = w1x1.shape
    assert C_total == Cin + n_dense * G
    C_max = Cin + (n_dense - 1) * G
    DHW = D * H * W

    masks = _tap_masks(D, H, W, K)
    x_flat = x.reshape(N, Cin, DHW)          # free reshape, keeps NCDHW order

    # Per-layer (G, K^3*C_max) weight matrices matching the patch row order
    # (tap-major, channel-minor); channels beyond each layer's input width are
    # zero-padded (their patch rows are zeroed in-kernel).
    wargs = []
    for i, (w, b) in enumerate(dense):
        Ci = Cin + i * G
        wt = jnp.transpose(w, (0, 2, 3, 4, 1))                  # (G, K, K, K, Ci)
        wt = jnp.pad(wt, ((0, 0), (0, 0), (0, 0), (0, 0), (0, C_max - Ci)))
        wargs.append(wt.reshape(G, K ** 3 * C_max))
        wargs.append(b.reshape(G, 1))

    kernel = functools.partial(_rdb_kernel, Cin=Cin, G=G, n_dense=n_dense,
                               D=D, H=H, W=W, K=K)

    in_specs = [pl.BlockSpec((1, Cin, DHW), lambda n: (n, 0, 0)),     # x
                pl.BlockSpec((K ** 3, DHW), lambda n: (0, 0))]        # tap masks
    for _ in range(n_dense):
        in_specs.append(pl.BlockSpec((G, K ** 3 * C_max), lambda n: (0, 0)))
        in_specs.append(pl.BlockSpec((G, 1), lambda n: (0, 0)))
    in_specs.append(pl.BlockSpec((Cout, C_total), lambda n: (0, 0)))  # 1x1x1 conv

    out = pl.pallas_call(
        kernel,
        out_shape=jax.ShapeDtypeStruct((N, Cout, DHW), x.dtype),
        grid=(N,),
        in_specs=in_specs,
        out_specs=pl.BlockSpec((1, Cout, DHW), lambda n: (n, 0, 0)),
        scratch_shapes=[
            pltpu.VMEM((C_total, DHW), jnp.float32),         # growing feature map
            pltpu.VMEM((K ** 3 * C_max, DHW), jnp.float32),  # im2col patch
        ],
        compiler_params=pltpu.CompilerParams(
            dimension_semantics=("parallel",)),              # batch over TCs
    )(x_flat, masks, *wargs, w1x1)

    return out.reshape(N, Cout, D, H, W)


# ---------------------------------------------------------------------------
# Parameters (PyTorch OIDHW layout) + pure-JAX reference for verification.
# ---------------------------------------------------------------------------
def init_rdb_params(key, in_channels, out_channels, n_dense, growth_rate, ksize=3):
    params = {"dense": []}
    c = in_channels
    keys = jax.random.split(key, n_dense + 1)
    for i in range(n_dense):
        wk, bk = jax.random.split(keys[i])
        w = 0.1 * jax.random.normal(wk, (growth_rate, c, ksize, ksize, ksize),
                                    jnp.float32)            # (O, I, kD, kH, kW)
        b = 0.1 * jax.random.normal(bk, (growth_rate,), jnp.float32)
        params["dense"].append((w, b))
        c += growth_rate
    params["conv1x1"] = 0.1 * jax.random.normal(keys[-1], (out_channels, c),
                                                jnp.float32)
    return params


def rdb_reference(x, params):
    out = x
    for (w, b) in params["dense"]:
        y = jax.lax.conv_general_dilated(
            out, w, window_strides=(1, 1, 1), padding="SAME",
            dimension_numbers=("NCDHW", "OIDHW", "NCDHW"))
        y = jax.nn.relu(y + b.reshape(1, -1, 1, 1, 1))
        out = jnp.concatenate([out, y], axis=1)
    return jnp.einsum("ncdhw,oc->nodhw", out, params["conv1x1"])


if __name__ == "__main__":
    # RDB(inChannels=4, outChannels=4, nDenseLayer=3, GrowthRate=4)
    in_channels, out_channels, n_dense, growth = 4, 4, 3, 4
    N, D, H, W = 2, 4, 8, 8            # D*H*W = 256 -> lane-dense spatial axis

    key = jax.random.PRNGKey(0)
    pkey, xkey = jax.random.split(key)
    params = init_rdb_params(pkey, in_channels, out_channels, n_dense, growth)
    x = jax.random.normal(xkey, (N, in_channels, D, H, W), jnp.float32)  # NCDHW

    out = jax.block_until_ready(rdb_forward(x, params))
    ref = jax.block_until_ready(rdb_reference(x, params))

    assert out.shape == (N, out_channels, D, H, W), out.shape
    np.testing.assert_allclose(np.asarray(out), np.asarray(ref),
                               rtol=1e-4, atol=1e-4)
    print("KERNEL_OK")
</pallas_src>

<mosaic_0001>
module attributes {stable_mosaic.version = 11 : i64} {
  func.func @_rdb_kernel(%arg0: i32, %arg1: memref<1x4x256xf32, #tpu.memory_space<vmem>>, %arg2: memref<27x256xf32, #tpu.memory_space<vmem>>, %arg3: memref<4x324xf32, #tpu.memory_space<vmem>>, %arg4: memref<4x1xf32, #tpu.memory_space<vmem>>, %arg5: memref<4x324xf32, #tpu.memory_space<vmem>>, %arg6: memref<4x1xf32, #tpu.memory_space<vmem>>, %arg7: memref<4x324xf32, #tpu.memory_space<vmem>>, %arg8: memref<4x1xf32, #tpu.memory_space<vmem>>, %arg9: memref<4x16xf32, #tpu.memory_space<vmem>>, %arg10: memref<1x4x256xf32, #tpu.memory_space<vmem>>, %arg11: memref<16x256xf32, #tpu.memory_space<vmem>>, %arg12: memref<324x256xf32, #tpu.memory_space<vmem>>) attributes {dimension_semantics = [#tpu.dimension_semantics<parallel>], iteration_bounds = array<i64: 2>, scalar_prefetch = 0 : i64, scratch_operands = 2 : i64, tpu.core_type = #tpu.core_type<tc>, window_params = [{transform_indices = @transform_0, window_bounds = array<i64: 1, 4, 256>}, {pipeline_mode = #tpu.pipeline_mode<synchronous>, transform_indices = @transform_1, window_bounds = array<i64: 27, 256>}, {pipeline_mode = #tpu.pipeline_mode<synchronous>, transform_indices = @transform_2, window_bounds = array<i64: 4, 324>}, {pipeline_mode = #tpu.pipeline_mode<synchronous>, transform_indices = @transform_3, window_bounds = array<i64: 4, 1>}, {pipeline_mode = #tpu.pipeline_mode<synchronous>, transform_indices = @transform_4, window_bounds = array<i64: 4, 324>}, {pipeline_mode = #tpu.pipeline_mode<synchronous>, transform_indices = @transform_5, window_bounds = array<i64: 4, 1>}, {pipeline_mode = #tpu.pipeline_mode<synchronous>, transform_indices = @transform_6, window_bounds = array<i64: 4, 324>}, {pipeline_mode = #tpu.pipeline_mode<synchronous>, transform_indices = @transform_7, window_bounds = array<i64: 4, 1>}, {pipeline_mode = #tpu.pipeline_mode<synchronous>, transform_indices = @transform_8, window_bounds = array<i64: 4, 16>}, {transform_indices = @transform_9, window_bounds = array<i64: 1, 4, 256>}]} {
    %cst = arith.constant 0.000000e+00 : f32
    %0 = vector.broadcast %cst : f32 to vector<324x256xf32>
    %c0 = arith.constant 0 : index
    %c0_0 = arith.constant 0 : index
    %1 = vector.load %arg12[%c0, %c0_0] : memref<324x256xf32, #tpu.memory_space<vmem>>, vector<324x256xf32>
    tpu.vector_store %arg12[%c0, %c0_0], %0 {strides = array<i32>} : memref<324x256xf32, #tpu.memory_space<vmem>>, vector<324x256xf32>,
    %c0_1 = arith.constant 0 : index
    %c0_2 = arith.constant 0 : index
    %c0_3 = arith.constant 0 : index
    %2 = vector.load %arg1[%c0_1, %c0_2, %c0_3] : memref<1x4x256xf32, #tpu.memory_space<vmem>>, vector<1x4x256xf32>
    %3 = vector.shape_cast %2 : vector<1x4x256xf32> to vector<4x256xf32>
    %c0_4 = arith.constant 0 : index
    %c0_5 = arith.constant 0 : index
    %4 = vector.load %arg11[%c0_4, %c0_5] : memref<16x256xf32, #tpu.memory_space<vmem>>, vector<4x256xf32>
    tpu.vector_store %arg11[%c0_4, %c0_5], %3 {strides = array<i32>} : memref<16x256xf32, #tpu.memory_space<vmem>>, vector<4x256xf32>,
    %c0_6 = arith.constant 0 : index
    %c0_7 = arith.constant 0 : index
    %5 = vector.load %arg2[%c0_6, %c0_7] : memref<27x256xf32, #tpu.memory_space<vmem>>, vector<1x256xf32>
    %c1 = arith.constant 1 : index
    %c0_8 = arith.constant 0 : index
    %6 = vector.load %arg2[%c1, %c0_8] : memref<27x256xf32, #tpu.memory_space<vmem>>, vector<1x256xf32>
    %c2 = arith.constant 2 : index
    %c0_9 = arith.constant 0 : index
    %7 = vector.load %arg2[%c2, %c0_9] : memref<27x256xf32, #tpu.memory_space<vmem>>, vector<1x256xf32>
    %c3 = arith.constant 3 : index
    %c0_10 = arith.constant 0 : index
    %8 = vector.load %arg2[%c3, %c0_10] : memref<27x256xf32, #tpu.memory_space<vmem>>, vector<1x256xf32>
    %c4 = arith.constant 4 : index
    %c0_11 = arith.constant 0 : index
    %9 = vector.load %arg2[%c4, %c0_11] : memref<27x256xf32, #tpu.memory_space<vmem>>, vector<1x256xf32>
    %c5 = arith.constant 5 : index
    %c0_12 = arith.constant 0 : index
    %10 = vector.load %arg2[%c5, %c0_12] : memref<27x256xf32, #tpu.memory_space<vmem>>, vector<1x256xf32>
    %c6 = arith.constant 6 : index
    %c0_13 = arith.constant 0 : index
    %11 = vector.load %arg2[%c6, %c0_13] : memref<27x256xf32, #tpu.memory_space<vmem>>, vector<1x256xf32>
    %c7 = arith.constant 7 : index
    %c0_14 = arith.constant 0 : index
    %12 = vector.load %arg2[%c7, %c0_14] : memref<27x256xf32, #tpu.memory_space<vmem>>, vector<1x256xf32>
    %c8 = arith.constant 8 : index
    %c0_15 = arith.constant 0 : index
    %13 = vector.load %arg2[%c8, %c0_15] : memref<27x256xf32, #tpu.memory_space<vmem>>, vector<1x256xf32>
    %c9 = arith.constant 9 : index
    %c0_16 = arith.constant 0 : index
    %14 = vector.load %arg2[%c9, %c0_16] : memref<27x256xf32, #tpu.memory_space<vmem>>, vector<1x256xf32>
    %c10 = arith.constant 10 : index
    %c0_17 = arith.constant 0 : index
    %15 = vector.load %arg2[%c10, %c0_17] : memref<27x256xf32, #tpu.memory_space<vmem>>, vector<1x256xf32>
    %c11 = arith.constant 11 : index
    %c0_18 = arith.constant 0 : index
    %16 = vector.load %arg2[%c11, %c0_18] : memref<27x256xf32, #tpu.memory_space<vmem>>, vector<1x256xf32>
    %c12 = arith.constant 12 : index
    %c0_19 = arith.constant 0 : index
    %17 = vector.load %arg2[%c12, %c0_19] : memref<27x256xf32, #tpu.memory_space<vmem>>, vector<1x256xf32>
    %c13 = arith.constant 13 : index
    %c0_20 = arith.constant 0 : index
    %18 = vector.load %arg2[%c13, %c0_20] : memref<27x256xf32, #tpu.memory_space<vmem>>, vector<1x256xf32>
    %c14 = arith.constant 14 : index
    %c0_21 = arith.constant 0 : index
    %19 = vector.load %arg2[%c14, %c0_21] : memref<27x256xf32, #tpu.memory_space<vmem>>, vector<1x256xf32>
    %c15 = arith.constant 15 : index
    %c0_22 = arith.constant 0 : index
    %20 = vector.load %arg2[%c15, %c0_22] : memref<27x256xf32, #tpu.memory_space<vmem>>, vector<1x256xf32>
    %c16 = arith.constant 16 : index
    %c0_23 = arith.constant 0 : index
    %21 = vector.load %arg2[%c16, %c0_23] : memref<27x256xf32, #tpu.memory_space<vmem>>, vector<1x256xf32>
    %c17 = arith.constant 17 : index
    %c0_24 = arith.constant 0 : index
    %22 = vector.load %arg2[%c17, %c0_24] : memref<27x256xf32, #tpu.memory_space<vmem>>, vector<1x256xf32>
    %c18 = arith.constant 18 : index
    %c0_25 = arith.constant 0 : index
    %23 = vector.load %arg2[%c18, %c0_25] : memref<27x256xf32, #tpu.memory_space<vmem>>, vector<1x256xf32>
    %c19 = arith.constant 19 : index
    %c0_26 = arith.constant 0 : index
    %24 = vector.load %arg2[%c19, %c0_26] : memref<27x256xf32, #tpu.memory_space<vmem>>, vector<1x256xf32>
    %c20 = arith.constant 20 : index
    %c0_27 = arith.constant 0 : index
    %25 = vector.load %arg2[%c20, %c0_27] : memref<27x256xf32, #tpu.memory_space<vmem>>, vector<1x256xf32>
    %c21 = arith.constant 21 : index
    %c0_28 = arith.constant 0 : index
    %26 = vector.load %arg2[%c21, %c0_28] : memref<27x256xf32, #tpu.memory_space<vmem>>, vector<1x256xf32>
    %c22 = arith.constant 22 : index
    %c0_29 = arith.constant 0 : index
    %27 = vector.load %arg2[%c22, %c0_29] : memref<27x256xf32, #tpu.memory_space<vmem>>, vector<1x256xf32>
    %c23 = arith.constant 23 : index
    %c0_30 = arith.constant 0 : index
    %28 = vector.load %arg2[%c23, %c0_30] : memref<27x256xf32, #tpu.memory_space<vmem>>, vector<1x256xf32>
    %c24 = arith.constant 24 : index
    %c0_31 = arith.constant 0 : index
    %29 = vector.load %arg2[%c24, %c0_31] : memref<27x256xf32, #tpu.memory_space<vmem>>, vector<1x256xf32>
    %c25 = arith.constant 25 : index
    %c0_32 = arith.constant 0 : index
    %30 = vector.load %arg2[%c25, %c0_32] : memref<27x256xf32, #tpu.memory_space<vmem>>, vector<1x256xf32>
    %c26 = arith.constant 26 : index
    %c0_33 = arith.constant 0 : index
    %31 = vector.load %arg2[%c26, %c0_33] : memref<27x256xf32, #tpu.memory_space<vmem>>, vector<1x256xf32>
    %c0_34 = arith.constant 0 : index
    %c0_35 = arith.constant 0 : index
    %32 = vector.load %arg11[%c0_34, %c0_35] : memref<16x256xf32, #tpu.memory_space<vmem>>, vector<4x256xf32>
    %cst_36 = arith.constant 0.000000e+00 : f32
    %33 = vector.broadcast %cst_36 : f32 to vector<4x73xf32>
    %34 = vector.extract_strided_slice %32 {offsets = [0, 0], sizes = [4, 183], strides = [1, 1]} : vector<4x256xf32> to vector<4x183xf32>
    %35 = tpu.concatenate %33, %34 in 1 : vector<4x73xf32>, vector<4x183xf32> -> vector<4x256xf32>
    %36 = vector.broadcast %5 : vector<1x256xf32> to vector<4x256xf32>
    %37 = arith.mulf %35, %36 : vector<4x256xf32>
    %c0_37 = arith.constant 0 : index
    %c0_38 = arith.constant 0 : index
    %38 = vector.load %arg12[%c0_37, %c0_38] : memref<324x256xf32, #tpu.memory_space<vmem>>, vector<4x256xf32>
    tpu.vector_store %arg12[%c0_37, %c0_38], %37 {strides = array<i32>} : memref<324x256xf32, #tpu.memory_space<vmem>>, vector<4x256xf32>,
    %cst_39 = arith.constant 0.000000e+00 : f32
    %39 = vector.broadcast %cst_39 : f32 to vector<4x72xf32>
    %40 = vector.extract_strided_slice %32 {offsets = [0, 0], sizes = [4, 184], strides = [1, 1]} : vector<4x256xf32> to vector<4x184xf32>
    %41 = tpu.concatenate %39, %40 in 1 : vector<4x72xf32>, vector<4x184xf32> -> vector<4x256xf32>
    %42 = vector.broadcast %6 : vector<1x256xf32> to vector<4x256xf32>
    %43 = arith.mulf %41, %42 : vector<4x256xf32>
    %c12_40 = arith.constant 12 : index
    %c0_41 = arith.constant 0 : index
    %44 = vector.load %arg12[%c12_40, %c0_41] : memref<324x256xf32, #tpu.memory_space<vmem>>, vector<4x256xf32>
    tpu.vector_store %arg12[%c12_40, %c0_41], %43 {strides = array<i32>} : memref<324x256xf32, #tpu.memory_space<vmem>>, vector<4x256xf32>,
    %cst_42 = arith.constant 0.000000e+00 : f32
    %45 = vector.broadcast %cst_42 : f32 to vector<4x71xf32>
    %46 = vector.extract_strided_slice %32 {offsets = [0, 0], sizes = [4, 185], strides = [1, 1]} : vector<4x256xf32> to vector<4x185xf32>
    %47 = tpu.concatenate %45, %46 in 1 : vector<4x71xf32>, vector<4x185xf32> -> vector<4x256xf32>
    %48 = vector.broadcast %7 : vector<1x256xf32> to vector<4x256xf32>
    %49 = arith.mulf %47, %48 : vector<4x256xf32>
    %c24_43 = arith.constant 24 : index
    %c0_44 = arith.constant 0 : index
    %50 = vector.load %arg12[%c24_43, %c0_44] : memref<324x256xf32, #tpu.memory_space<vmem>>, vector<4x256xf32>
    tpu.vector_store %arg12[%c24_43, %c0_44], %49 {strides = array<i32>} : memref<324x256xf32, #tpu.memory_space<vmem>>, vector<4x256xf32>,
    %cst_45 = arith.constant 0.000000e+00 : f32
    %51 = vector.broadcast %cst_45 : f32 to vector<4x65xf32>
    %52 = vector.extract_strided_slice %32 {offsets = [0, 0], sizes = [4, 191], strides = [1, 1]} : vector<4x256xf32> to vector<4x191xf32>
    %53 = tpu.concatenate %51, %52 in 1 : vector<4x65xf32>, vector<4x191xf32> -> vector<4x256xf32>
    %54 = vector.broadcast %8 : vector<1x256xf32> to vector<4x256xf32>
    %55 = arith.mulf %53, %54 : vector<4x256xf32>
    %c36 = arith.constant 36 : index
    %c0_46 = arith.constant 0 : index
    %56 = vector.load %arg12[%c36, %c0_46] : memref<324x256xf32, #tpu.memory_space<vmem>>, vector<4x256xf32>
    tpu.vector_store %arg12[%c36, %c0_46], %55 {strides = array<i32>} : memref<324x256xf32, #tpu.memory_space<vmem>>, vector<4x256xf32>,
    %cst_47 = arith.constant 0.000000e+00 : f32
    %57 = vector.broadcast %cst_47 : f32 to vector<4x64xf32>
    %58 = vector.extract_strided_slice %32 {offsets = [0, 0], sizes = [4, 192], strides = [1, 1]} : vector<4x256xf32> to vector<4x192xf32>
    %59 = tpu.concatenate %57, %58 in 1 : vector<4x64xf32>, vector<4x192xf32> -> vector<4x256xf32>
    %60 = vector.broadcast %9 : vector<1x256xf32> to vector<4x256xf32>
    %61 = arith.mulf %59, %60 : vector<4x256xf32>
    %c48 = arith.constant 48 : index
    %c0_48 = arith.constant 0 : index
    %62 = vector.load %arg12[%c48, %c0_48] : memref<324x256xf32, #tpu.memory_space<vmem>>, vector<4x256xf32>
    tpu.vector_store %arg12[%c48, %c0_48], %61 {strides = array<i32>} : memref<324x256xf32, #tpu.memory_space<vmem>>, vector<4x256xf32>,
    %cst_49 = arith.constant 0.000000e+00 : f32
    %63 = vector.broadcast %cst_49 : f32 to vector<4x63xf32>
    %64 = vector.extract_strided_slice %32 {offsets = [0, 0], sizes = [4, 193], strides = [1, 1]} : vector<4x256xf32> to vector<4x193xf32>
    %65 = tpu.concatenate %63, %64 in 1 : vector<4x63xf32>, vector<4x193xf32> -> vector<4x256xf32>
    %66 = vector.broadcast %10 : vector<1x256xf32> to vector<4x256xf32>
    %67 = arith.mulf %65, %66 : vector<4x256xf32>
    %c60 = arith.constant 60 : index
    %c0_50 = arith.constant 0 : index
    %68 = vector.load %arg12[%c60, %c0_50] : memref<324x256xf32, #tpu.memory_space<vmem>>, vector<4x256xf32>
    tpu.vector_store %arg12[%c60, %c0_50], %67 {strides = array<i32>} : memref<324x256xf32, #tpu.memory_space<vmem>>, vector<4x256xf32>,
    %cst_51 = arith.constant 0.000000e+00 : f32
    %69 = vector.broadcast %cst_51 : f32 to vector<4x57xf32>
    %70 = vector.extract_strided_slice %32 {offsets = [0, 0], sizes = [4, 199], strides = [1, 1]} : vector<4x256xf32> to vector<4x199xf32>
    %71 = tpu.concatenate %69, %70 in 1 : vector<4x57xf32>, vector<4x199xf32> -> vector<4x256xf32>
    %72 = vector.broadcast %11 : vector<1x256xf32> to vector<4x256xf32>
    %73 = arith.mulf %71, %72 : vector<4x256xf32>
    %c72 = arith.constant 72 : index
    %c0_52 = arith.constant 0 : index
    %74 = vector.load %arg12[%c72, %c0_52] : memref<324x256xf32, #tpu.memory_space<vmem>>, vector<4x256xf32>
    tpu.vector_store %arg12[%c72, %c0_52], %73 {strides = array<i32>} : memref<324x256xf32, #tpu.memory_space<vmem>>, vector<4x256xf32>,
    %cst_53 = arith.constant 0.000000e+00 : f32
    %75 = vector.broadcast %cst_53 : f32 to vector<4x56xf32>
    %76 = vector.extract_strided_slice %32 {offsets = [0, 0], sizes = [4, 200], strides = [1, 1]} : vector<4x256xf32> to vector<4x200xf32>
    %77 = tpu.concatenate %75, %76 in 1 : vector<4x56xf32>, vector<4x200xf32> -> vector<4x256xf32>
    %78 = vector.broadcast %12 : vector<1x256xf32> to vector<4x256xf32>
    %79 = arith.mulf %77, %78 : vector<4x256xf32>
    %c84 = arith.constant 84 : index
    %c0_54 = arith.constant 0 : index
    %80 = vector.load %arg12[%c84, %c0_54] : memref<324x256xf32, #tpu.memory_space<vmem>>, vector<4x256xf32>
    tpu.vector_store %arg12[%c84, %c0_54], %79 {strides = array<i32>} : memref<324x256xf32, #tpu.memory_space<vmem>>, vector<4x256xf32>,
    %cst_55 = arith.constant 0.000000e+00 : f32
    %81 = vector.broadcast %cst_55 : f32 to vector<4x55xf32>
    %82 = vector.extract_strided_slice %32 {offsets = [0, 0], sizes = [4, 201], strides = [1, 1]} : vector<4x256xf32> to vector<4x201xf32>
    %83 = tpu.concatenate %81, %82 in 1 : vector<4x55xf32>, vector<4x201xf32> -> vector<4x256xf32>
    %84 = vector.broadcast %13 : vector<1x256xf32> to vector<4x256xf32>
    %85 = arith.mulf %83, %84 : vector<4x256xf32>
    %c96 = arith.constant 96 : index
    %c0_56 = arith.constant 0 : index
    %86 = vector.load %arg12[%c96, %c0_56] : memref<324x256xf32, #tpu.memory_space<vmem>>, vector<4x256xf32>
    tpu.vector_store %arg12[%c96, %c0_56], %85 {strides = array<i32>} : memref<324x256xf32, #tpu.memory_space<vmem>>, vector<4x256xf32>,
    %cst_57 = arith.constant 0.000000e+00 : f32
    %87 = vector.broadcast %cst_57 : f32 to vector<4x9xf32>
    %88 = vector.extract_strided_slice %32 {offsets = [0, 0], sizes = [4, 247], strides = [1, 1]} : vector<4x256xf32> to vector<4x247xf32>
    %89 = tpu.concatenate %87, %88 in 1 : vector<4x9xf32>, vector<4x247xf32> -> vector<4x256xf32>
    %90 = vector.broadcast %14 : vector<1x256xf32> to vector<4x256xf32>
    %91 = arith.mulf %89, %90 : vector<4x256xf32>
    %c108 = arith.constant 108 : index
    %c0_58 = arith.constant 0 : index
    %92 = vector.load %arg12[%c108, %c0_58] : memref<324x256xf32, #tpu.memory_space<vmem>>, vector<4x256xf32>
    tpu.vector_store %arg12[%c108, %c0_58], %91 {strides = array<i32>} : memref<324x256xf32, #tpu.memory_space<vmem>>, vector<4x256xf32>,
    %cst_59 = arith.constant 0.000000e+00 : f32
    %93 = vector.broadcast %cst_59 : f32 to vector<4x8xf32>
    %94 = vector.extract_strided_slice %32 {offsets = [0, 0], sizes = [4, 248], strides = [1, 1]} : vector<4x256xf32> to vector<4x248xf32>
    %95 = tpu.concatenate %93, %94 in 1 : vector<4x8xf32>, vector<4x248xf32> -> vector<4x256xf32>
    %96 = vector.broadcast %15 : vector<1x256xf32> to vector<4x256xf32>
    %97 = arith.mulf %95, %96 : vector<4x256xf32>
    %c120 = arith.constant 120 : index
    %c0_60 = arith.constant 0 : index
    %98 = vector.load %arg12[%c120, %c0_60] : memref<324x256xf32, #tpu.memory_space<vmem>>, vector<4x256xf32>
    tpu.vector_store %arg12[%c120, %c0_60], %97 {strides = array<i32>} : memref<324x256xf32, #tpu.memory_space<vmem>>, vector<4x256xf32>,
    %cst_61 = arith.constant 0.000000e+00 : f32
    %99 = vector.broadcast %cst_61 : f32 to vector<4x7xf32>
    %100 = vector.extract_strided_slice %32 {offsets = [0, 0], sizes = [4, 249], strides = [1, 1]} : vector<4x256xf32> to vector<4x249xf32>
    %101 = tpu.concatenate %99, %100 in 1 : vector<4x7xf32>, vector<4x249xf32> -> vector<4x256xf32>
    %102 = vector.broadcast %16 : vector<1x256xf32> to vector<4x256xf32>
    %103 = arith.mulf %101, %102 : vector<4x256xf32>
    %c132 = arith.constant 132 : index
    %c0_62 = arith.constant 0 : index
    %104 = vector.load %arg12[%c132, %c0_62] : memref<324x256xf32, #tpu.memory_space<vmem>>, vector<4x256xf32>
    tpu.vector_store %arg12[%c132, %c0_62], %103 {strides = array<i32>} : memref<324x256xf32, #tpu.memory_space<vmem>>, vector<4x256xf32>,
    %cst_63 = arith.constant 0.000000e+00 : f32
    %105 = vector.broadcast %cst_63 : f32 to vector<4x1xf32>
    %106 = vector.extract_strided_slice %32 {offsets = [0, 0], sizes = [4, 255], strides = [1, 1]} : vector<4x256xf32> to vector<4x255xf32>
    %107 = tpu.concatenate %105, %106 in 1 : vector<4x1xf32>, vector<4x255xf32> -> vector<4x256xf32>
    %108 = vector.broadcast %17 : vector<1x256xf32> to vector<4x256xf32>
    %109 = arith.mulf %107, %108 : vector<4x256xf32>
    %c144 = arith.constant 144 : index
    %c0_64 = arith.constant 0 : index
    %110 = vector.load %arg12[%c144, %c0_64] : memref<324x256xf32, #tpu.memory_space<vmem>>, vector<4x256xf32>
    tpu.vector_store %arg12[%c144, %c0_64], %109 {strides = array<i32>} : memref<324x256xf32, #tpu.memory_space<vmem>>, vector<4x256xf32>,
    %111 = vector.broadcast %18 : vector<1x256xf32> to vector<4x256xf32>
    %112 = arith.mulf %32, %111 : vector<4x256xf32>
    %c156 = arith.constant 156 : index
    %c0_65 = arith.constant 0 : index
    %113 = vector.load %arg12[%c156, %c0_65] : memref<324x256xf32, #tpu.memory_space<vmem>>, vector<4x256xf32>
    tpu.vector_store %arg12[%c156, %c0_65], %112 {strides = array<i32>} : memref<324x256xf32, #tpu.memory_space<vmem>>, vector<4x256xf32>,
    %cst_66 = arith.constant 0.000000e+00 : f32
    %114 = vector.broadcast %cst_66 : f32 to vector<4x1xf32>
    %115 = vector.extract_strided_slice %32 {offsets = [0, 1], sizes = [4, 255], strides = [1, 1]} : vector<4x256xf32> to vector<4x255xf32>
    %116 = tpu.concatenate %115, %114 in 1 : vector<4x255xf32>, vector<4x1xf32> -> vector<4x256xf32>
    %117 = vector.broadcast %19 : vector<1x256xf32> to vector<4x256xf32>
    %118 = arith.mulf %116, %117 : vector<4x256xf32>
    %c168 = arith.constant 168 : index
    %c0_67 = arith.constant 0 : index
    %119 = vector.load %arg12[%c168, %c0_67] : memref<324x256xf32, #tpu.memory_space<vmem>>, vector<4x256xf32>
    tpu.vector_store %arg12[%c168, %c0_67], %118 {strides = array<i32>} : memref<324x256xf32, #tpu.memory_space<vmem>>, vector<4x256xf32>,
    %cst_68 = arith.constant 0.000000e+00 : f32
    %120 = vector.broadcast %cst_68 : f32 to vector<4x7xf32>
    %121 = vector.extract_strided_slice %32 {offsets = [0, 7], sizes = [4, 249], strides = [1, 1]} : vector<4x256xf32> to vector<4x249xf32>
    %122 = tpu.concatenate %121, %120 in 1 : vector<4x249xf32>, vector<4x7xf32> -> vector<4x256xf32>
    %123 = vector.broadcast %20 : vector<1x256xf32> to vector<4x256xf32>
    %124 = arith.mulf %122, %123 : vector<4x256xf32>
    %c180 = arith.constant 180 : index
    %c0_69 = arith.constant 0 : index
    %125 = vector.load %arg12[%c180, %c0_69] : memref<324x256xf32, #tpu.memory_space<vmem>>, vector<4x256xf32>
    tpu.vector_store %arg12[%c180, %c0_69], %124 {strides = array<i32>} : memref<324x256xf32, #tpu.memory_space<vmem>>, vector<4x256xf32>,
    %cst_70 = arith.constant 0.000000e+00 : f32
    %126 = vector.broadcast %cst_70 : f32 to vector<4x8xf32>
    %127 = vector.extract_strided_slice %32 {offsets = [0, 8], sizes = [4, 248], strides = [1, 1]} : vector<4x256xf32> to vector<4x248xf32>
    %128 = tpu.concatenate %127, %126 in 1 : vector<4x248xf32>, vector<4x8xf32> -> vector<4x256xf32>
    %129 = vector.broadcast %21 : vector<1x256xf32> to vector<4x256xf32>
    %130 = arith.mulf %128, %129 : vector<4x256xf32>
    %c192 = arith.constant 192 : index
    %c0_71 = arith.constant 0 : index
    %131 = vector.load %arg12[%c192, %c0_71] : memref<324x256xf32, #tpu.memory_space<vmem>>, vector<4x256xf32>
    tpu.vector_store %arg12[%c192, %c0_71], %130 {strides = array<i32>} : memref<324x256xf32, #tpu.memory_space<vmem>>, vector<4x256xf32>,
    %cst_72 = arith.constant 0.000000e+00 : f32
    %132 = vector.broadcast %cst_72 : f32 to vector<4x9xf32>
    %133 = vector.extract_strided_slice %32 {offsets = [0, 9], sizes = [4, 247], strides = [1, 1]} : vector<4x256xf32> to vector<4x247xf32>
    %134 = tpu.concatenate %133, %132 in 1 : vector<4x247xf32>, vector<4x9xf32> -> vector<4x256xf32>
    %135 = vector.broadcast %22 : vector<1x256xf32> to vector<4x256xf32>
    %136 = arith.mulf %134, %135 : vector<4x256xf32>
    %c204 = arith.constant 204 : index
    %c0_73 = arith.constant 0 : index
    %137 = vector.load %arg12[%c204, %c0_73] : memref<324x256xf32, #tpu.memory_space<vmem>>, vector<4x256xf32>
    tpu.vector_store %arg12[%c204, %c0_73], %136 {strides = array<i32>} : memref<324x256xf32, #tpu.memory_space<vmem>>, vector<4x256xf32>,
    %cst_74 = arith.constant 0.000000e+00 : f32
    %138 = vector.broadcast %cst_74 : f32 to vector<4x55xf32>
    %139 = vector.extract_strided_slice %32 {offsets = [0, 55], sizes = [4, 201], strides = [1, 1]} : vector<4x256xf32> to vector<4x201xf32>
    %140 = tpu.concatenate %139, %138 in 1 : vector<4x201xf32>, vector<4x55xf32> -> vector<4x256xf32>
    %141 = vector.broadcast %23 : vector<1x256xf32> to vector<4x256xf32>
    %142 = arith.mulf %140, %141 : vector<4x256xf32>
    %c216 = arith.constant 216 : index
    %c0_75 = arith.constant 0 : index
    %143 = vector.load %arg12[%c216, %c0_75] : memref<324x256xf32, #tpu.memory_space<vmem>>, vector<4x256xf32>
    tpu.vector_store %arg12[%c216, %c0_75], %142 {strides = array<i32>} : memref<324x256xf32, #tpu.memory_space<vmem>>, vector<4x256xf32>,
    %cst_76 = arith.constant 0.000000e+00 : f32
    %144 = vector.broadcast %cst_76 : f32 to vector<4x56xf32>
    %145 = vector.extract_strided_slice %32 {offsets = [0, 56], sizes = [4, 200], strides = [1, 1]} : vector<4x256xf32> to vector<4x200xf32>
    %146 = tpu.concatenate %145, %144 in 1 : vector<4x200xf32>, vector<4x56xf32> -> vector<4x256xf32>
    %147 = vector.broadcast %24 : vector<1x256xf32> to vector<4x256xf32>
    %148 = arith.mulf %146, %147 : vector<4x256xf32>
    %c228 = arith.constant 228 : index
    %c0_77 = arith.constant 0 : index
    %149 = vector.load %arg12[%c228, %c0_77] : memref<324x256xf32, #tpu.memory_space<vmem>>, vector<4x256xf32>
    tpu.vector_store %arg12[%c228, %c0_77], %148 {strides = array<i32>} : memref<324x256xf32, #tpu.memory_space<vmem>>, vector<4x256xf32>,
    %cst_78 = arith.constant 0.000000e+00 : f32
    %150 = vector.broadcast %cst_78 : f32 to vector<4x57xf32>
    %151 = vector.extract_strided_slice %32 {offsets = [0, 57], sizes = [4, 199], strides = [1, 1]} : vector<4x256xf32> to vector<4x199xf32>
    %152 = tpu.concatenate %151, %150 in 1 : vector<4x199xf32>, vector<4x57xf32> -> vector<4x256xf32>
    %153 = vector.broadcast %25 : vector<1x256xf32> to vector<4x256xf32>
    %154 = arith.mulf %152, %153 : vector<4x256xf32>
    %c240 = arith.constant 240 : index
    %c0_79 = arith.constant 0 : index
    %155 = vector.load %arg12[%c240, %c0_79] : memref<324x256xf32, #tpu.memory_space<vmem>>, vector<4x256xf32>
    tpu.vector_store %arg12[%c240, %c0_79], %154 {strides = array<i32>} : memref<324x256xf32, #tpu.memory_space<vmem>>, vector<4x256xf32>,
    %cst_80 = arith.constant 0.000000e+00 : f32
    %156 = vector.broadcast %cst_80 : f32 to vector<4x63xf32>
    %157 = vector.extract_strided_slice %32 {offsets = [0, 63], sizes = [4, 193], strides = [1, 1]} : vector<4x256xf32> to vector<4x193xf32>
    %158 = tpu.concatenate %157, %156 in 1 : vector<4x193xf32>, vector<4x63xf32> -> vector<4x256xf32>
    %159 = vector.broadcast %26 : vector<1x256xf32> to vector<4x256xf32>
    %160 = arith.mulf %158, %159 : vector<4x256xf32>
    %c252 = arith.constant 252 : index
    %c0_81 = arith.constant 0 : index
    %161 = vector.load %arg12[%c252, %c0_81] : memref<324x256xf32, #tpu.memory_space<vmem>>, vector<4x256xf32>
    tpu.vector_store %arg12[%c252, %c0_81], %160 {strides = array<i32>} : memref<324x256xf32, #tpu.memory_space<vmem>>, vector<4x256xf32>,
    %cst_82 = arith.constant 0.000000e+00 : f32
    %162 = vector.broadcast %cst_82 : f32 to vector<4x64xf32>
    %163 = vector.extract_strided_slice %32 {offsets = [0, 64], sizes = [4, 192], strides = [1, 1]} : vector<4x256xf32> to vector<4x192xf32>
    %164 = tpu.concatenate %163, %162 in 1 : vector<4x192xf32>, vector<4x64xf32> -> vector<4x256xf32>
    %165 = vector.broadcast %27 : vector<1x256xf32> to vector<4x256xf32>
    %166 = arith.mulf %164, %165 : vector<4x256xf32>
    %c264 = arith.constant 264 : index
    %c0_83 = arith.constant 0 : index
    %167 = vector.load %arg12[%c264, %c0_83] : memref<324x256xf32, #tpu.memory_space<vmem>>, vector<4x256xf32>
    tpu.vector_store %arg12[%c264, %c0_83], %166 {strides = array<i32>} : memref<324x256xf32, #tpu.memory_space<vmem>>, vector<4x256xf32>,
    %cst_84 = arith.constant 0.000000e+00 : f32
    %168 = vector.broadcast %cst_84 : f32 to vector<4x65xf32>
    %169 = vector.extract_strided_slice %32 {offsets = [0, 65], sizes = [4, 191], strides = [1, 1]} : vector<4x256xf32> to vector<4x191xf32>
    %170 = tpu.concatenate %169, %168 in 1 : vector<4x191xf32>, vector<4x65xf32> -> vector<4x256xf32>
    %171 = vector.broadcast %28 : vector<1x256xf32> to vector<4x256xf32>
    %172 = arith.mulf %170, %171 : vector<4x256xf32>
    %c276 = arith.constant 276 : index
    %c0_85 = arith.constant 0 : index
    %173 = vector.load %arg12[%c276, %c0_85] : memref<324x256xf32, #tpu.memory_space<vmem>>, vector<4x256xf32>
    tpu.vector_store %arg12[%c276, %c0_85], %172 {strides = array<i32>} : memref<324x256xf32, #tpu.memory_space<vmem>>, vector<4x256xf32>,
    %cst_86 = arith.constant 0.000000e+00 : f32
    %174 = vector.broadcast %cst_86 : f32 to vector<4x71xf32>
    %175 = vector.extract_strided_slice %32 {offsets = [0, 71], sizes = [4, 185], strides = [1, 1]} : vector<4x256xf32> to vector<4x185xf32>
    %176 = tpu.concatenate %175, %174 in 1 : vector<4x185xf32>, vector<4x71xf32> -> vector<4x256xf32>
    %177 = vector.broadcast %29 : vector<1x256xf32> to vector<4x256xf32>
    %178 = arith.mulf %176, %177 : vector<4x256xf32>
    %c288 = arith.constant 288 : index
    %c0_87 = arith.constant 0 : index
    %179 = vector.load %arg12[%c288, %c0_87] : memref<324x256xf32, #tpu.memory_space<vmem>>, vector<4x256xf32>
    tpu.vector_store %arg12[%c288, %c0_87], %178 {strides = array<i32>} : memref<324x256xf32, #tpu.memory_space<vmem>>, vector<4x256xf32>,
    %cst_88 = arith.constant 0.000000e+00 : f32
    %180 = vector.broadcast %cst_88 : f32 to vector<4x72xf32>
    %181 = vector.extract_strided_slice %32 {offsets = [0, 72], sizes = [4, 184], strides = [1, 1]} : vector<4x256xf32> to vector<4x184xf32>
    %182 = tpu.concatenate %181, %180 in 1 : vector<4x184xf32>, vector<4x72xf32> -> vector<4x256xf32>
    %183 = vector.broadcast %30 : vector<1x256xf32> to vector<4x256xf32>
    %184 = arith.mulf %182, %183 : vector<4x256xf32>
    %c300 = arith.constant 300 : index
    %c0_89 = arith.constant 0 : index
    %185 = vector.load %arg12[%c300, %c0_89] : memref<324x256xf32, #tpu.memory_space<vmem>>, vector<4x256xf32>
    tpu.vector_store %arg12[%c300, %c0_89], %184 {strides = array<i32>} : memref<324x256xf32, #tpu.memory_space<vmem>>, vector<4x256xf32>,
    %cst_90 = arith.constant 0.000000e+00 : f32
    %186 = vector.broadcast %cst_90 : f32 to vector<4x73xf32>
    %187 = vector.extract_strided_slice %32 {offsets = [0, 73], sizes = [4, 183], strides = [1, 1]} : vector<4x256xf32> to vector<4x183xf32>
    %188 = tpu.concatenate %187, %186 in 1 : vector<4x183xf32>, vector<4x73xf32> -> vector<4x256xf32>
    %189 = vector.broadcast %31 : vector<1x256xf32> to vector<4x256xf32>
    %190 = arith.mulf %188, %189 : vector<4x256xf32>
    %c312 = arith.constant 312 : index
    %c0_91 = arith.constant 0 : index
    %191 = vector.load %arg12[%c312, %c0_91] : memref<324x256xf32, #tpu.memory_space<vmem>>, vector<4x256xf32>
    tpu.vector_store %arg12[%c312, %c0_91], %190 {strides = array<i32>} : memref<324x256xf32, #tpu.memory_space<vmem>>, vector<4x256xf32>,
    %c0_92 = arith.constant 0 : index
    %c0_93 = arith.constant 0 : index
    %192 = vector.load %arg3[%c0_92, %c0_93] : memref<4x324xf32, #tpu.memory_space<vmem>>, vector<4x324xf32>
    %c0_94 = arith.constant 0 : index
    %c0_95 = arith.constant 0 : index
    %193 = vector.load %arg12[%c0_94, %c0_95] : memref<324x256xf32, #tpu.memory_space<vmem>>, vector<324x256xf32>
    %cst_96 = arith.constant dense<0.000000e+00> : vector<4x256xf32>
    %194 = tpu.matmul %192, %193, %cst_96 {dimension_numbers = #tpu.dot_dimension_numbers<[1], [0], [0], [1], [0, 0, 1, 1], [], []>} : vector<4x324xf32>, vector<324x256xf32>, vector<4x256xf32> -> vector<4x256xf32>
    %c0_97 = arith.constant 0 : index
    %c0_98 = arith.constant 0 : index
    %195 = vector.load %arg4[%c0_97, %c0_98] : memref<4x1xf32, #tpu.memory_space<vmem>>, vector<4x1xf32>
    %196 = vector.broadcast %195 : vector<4x1xf32> to vector<4x256xf32>
    %197 = arith.addf %194, %196 : vector<4x256xf32>
    %cst_99 = arith.constant 0.000000e+00 : f32
    %198 = vector.broadcast %cst_99 : f32 to vector<4x256xf32>
    %199 = arith.maximumf %197, %198 : vector<4x256xf32>
    %c4_100 = arith.constant 4 : index
    %c0_101 = arith.constant 0 : index
    %200 = vector.load %arg11[%c4_100, %c0_101] : memref<16x256xf32, #tpu.memory_space<vmem>>, vector<4x256xf32>
    tpu.vector_store %arg11[%c4_100, %c0_101], %199 {strides = array<i32>} : memref<16x256xf32, #tpu.memory_space<vmem>>, vector<4x256xf32>,
    %c4_102 = arith.constant 4 : index
    %c0_103 = arith.constant 0 : index
    %201 = vector.load %arg11[%c4_102, %c0_103] : memref<16x256xf32, #tpu.memory_space<vmem>>, vector<4x256xf32>
    %cst_104 = arith.constant 0.000000e+00 : f32
    %202 = vector.broadcast %cst_104 : f32 to vector<4x73xf32>
    %203 = vector.extract_strided_slice %201 {offsets = [0, 0], sizes = [4, 183], strides = [1, 1]} : vector<4x256xf32> to vector<4x183xf32>
    %204 = tpu.concatenate %202, %203 in 1 : vector<4x73xf32>, vector<4x183xf32> -> vector<4x256xf32>
    %205 = vector.broadcast %5 : vector<1x256xf32> to vector<4x256xf32>
    %206 = arith.mulf %204, %205 : vector<4x256xf32>
    %c4_105 = arith.constant 4 : index
    %c0_106 = arith.constant 0 : index
    %207 = vector.load %arg12[%c4_105, %c0_106] : memref<324x256xf32, #tpu.memory_space<vmem>>, vector<4x256xf32>
    tpu.vector_store %arg12[%c4_105, %c0_106], %206 {strides = array<i32>} : memref<324x256xf32, #tpu.memory_space<vmem>>, vector<4x256xf32>,
    %cst_107 = arith.constant 0.000000e+00 : f32
    %208 = vector.broadcast %cst_107 : f32 to vector<4x72xf32>
    %209 = vector.extract_strided_slice %201 {offsets = [0, 0], sizes = [4, 184], strides = [1, 1]} : vector<4x256xf32> to vector<4x184xf32>
    %210 = tpu.concatenate %208, %209 in 1 : vector<4x72xf32>, vector<4x184xf32> -> vector<4x256xf32>
    %211 = vector.broadcast %6 : vector<1x256xf32> to vector<4x256xf32>
    %212 = arith.mulf %210, %211 : vector<4x256xf32>
    %c16_108 = arith.constant 16 : index
    %c0_109 = arith.constant 0 : index
    %213 = vector.load %arg12[%c16_108, %c0_109] : memref<324x256xf32, #tpu.memory_space<vmem>>, vector<4x256xf32>
    tpu.vector_store %arg12[%c16_108, %c0_109], %212 {strides = array<i32>} : memref<324x256xf32, #tpu.memory_space<vmem>>, vector<4x256xf32>,
    %cst_110 = arith.constant 0.000000e+00 : f32
    %214 = vector.broadcast %cst_110 : f32 to vector<4x71xf32>
    %215 = vector.extract_strided_slice %201 {offsets = [0, 0], sizes = [4, 185], strides = [1, 1]} : vector<4x256xf32> to vector<4x185xf32>
    %216 = tpu.concatenate %214, %215 in 1 : vector<4x71xf32>, vector<4x185xf32> -> vector<4x256xf32>
    %217 = vector.broadcast %7 : vector<1x256xf32> to vector<4x256xf32>
    %218 = arith.mulf %216, %217 : vector<4x256xf32>
    %c28 = arith.constant 28 : index
    %c0_111 = arith.constant 0 : index
    %219 = vector.load %arg12[%c28, %c0_111] : memref<324x256xf32, #tpu.memory_space<vmem>>, vector<4x256xf32>
    tpu.vector_store %arg12[%c28, %c0_111], %218 {strides = array<i32>} : memref<324x256xf32, #tpu.memory_space<vmem>>, vector<4x256xf32>,
    %cst_112 = arith.constant 0.000000e+00 : f32
    %220 = vector.broadcast %cst_112 : f32 to vector<4x65xf32>
    %221 = vector.extract_strided_slice %201 {offsets = [0, 0], sizes = [4, 191], strides = [1, 1]} : vector<4x256xf32> to vector<4x191xf32>
    %222 = tpu.concatenate %220, %221 in 1 : vector<4x65xf32>, vector<4x191xf32> -> vector<4x256xf32>
    %223 = vector.broadcast %8 : vector<1x256xf32> to vector<4x256xf32>
    %224 = arith.mulf %222, %223 : vector<4x256xf32>
    %c40 = arith.constant 40 : index
    %c0_113 = arith.constant 0 : index
    %225 = vector.load %arg12[%c40, %c0_113] : memref<324x256xf32, #tpu.memory_space<vmem>>, vector<4x256xf32>
    tpu.vector_store %arg12[%c40, %c0_113], %224 {strides = array<i32>} : memref<324x256xf32, #tpu.memory_space<vmem>>, vector<4x256xf32>,
    %cst_114 = arith.constant 0.000000e+00 : f32
    %226 = vector.broadcast %cst_114 : f32 to vector<4x64xf32>
    %227 = vector.extract_strided_slice %201 {offsets = [0, 0], sizes = [4, 192], strides = [1, 1]} : vector<4x256xf32> to vector<4x192xf32>
    %228 = tpu.concatenate %226, %227 in 1 : vector<4x64xf32>, vector<4x192xf32> -> vector<4x256xf32>
    %229 = vector.broadcast %9 : vector<1x256xf32> to vector<4x256xf32>
    %230 = arith.mulf %228, %229 : vector<4x256xf32>
    %c52 = arith.constant 52 : index
    %c0_115 = arith.constant 0 : index
    %231 = vector.load %arg12[%c52, %c0_115] : memref<324x256xf32, #tpu.memory_space<vmem>>, vector<4x256xf32>
    tpu.vector_store %arg12[%c52, %c0_115], %230 {strides = array<i32>} : memref<324x256xf32, #tpu.memory_space<vmem>>, vector<4x256xf32>,
    %cst_116 = arith.constant 0.000000e+00 : f32
    %232 = vector.broadcast %cst_116 : f32 to vector<4x63xf32>
    %233 = vector.extract_strided_slice %201 {offsets = [0, 0], sizes = [4, 193], strides = [1, 1]} : vector<4x256xf32> to vector<4x193xf32>
    %234 = tpu.concatenate %232, %233 in 1 : vector<4x63xf32>, vector<4x193xf32> -> vector<4x256xf32>
    %235 = vector.broadcast %10 : vector<1x256xf32> to vector<4x256xf32>
    %236 = arith.mulf %234, %235 : vector<4x256xf32>
    %c64 = arith.constant 64 : index
    %c0_117 = arith.constant 0 : index
    %237 = vector.load %arg12[%c64, %c0_117] : memref<324x256xf32, #tpu.memory_space<vmem>>, vector<4x256xf32>
    tpu.vector_store %arg12[%c64, %c0_117], %236 {strides = array<i32>} : memref<324x256xf32, #tpu.memory_space<vmem>>, vector<4x256xf32>,
    %cst_118 = arith.constant 0.000000e+00 : f32
    %238 = vector.broadcast %cst_118 : f32 to vector<4x57xf32>
    %239 = vector.extract_strided_slice %201 {offsets = [0, 0], sizes = [4, 199], strides = [1, 1]} : vector<4x256xf32> to vector<4x199xf32>
    %240 = tpu.concatenate %238, %239 in 1 : vector<4x57xf32>, vector<4x199xf32> -> vector<4x256xf32>
    %241 = vector.broadcast %11 : vector<1x256xf32> to vector<4x256xf32>
    %242 = arith.mulf %240, %241 : vector<4x256xf32>
    %c76 = arith.constant 76 : index
    %c0_119 = arith.constant 0 : index
    %243 = vector.load %arg12[%c76, %c0_119] : memref<324x256xf32, #tpu.memory_space<vmem>>, vector<4x256xf32>
    tpu.vector_store %arg12[%c76, %c0_119], %242 {strides = array<i32>} : memref<324x256xf32, #tpu.memory_space<vmem>>, vector<4x256xf32>,
    %cst_120 = arith.constant 0.000000e+00 : f32
    %244 = vector.broadcast %cst_120 : f32 to vector<4x56xf32>
    %245 = vector.extract_strided_slice %201 {offsets = [0, 0], sizes = [4, 200], strides = [1, 1]} : vector<4x256xf32> to vector<4x200xf32>
    %246 = tpu.concatenate %244, %245 in 1 : vector<4x56xf32>, vector<4x200xf32> -> vector<4x256xf32>
    %247 = vector.broadcast %12 : vector<1x256xf32> to vector<4x256xf32>
    %248 = arith.mulf %246, %247 : vector<4x256xf32>
    %c88 = arith.constant 88 : index
    %c0_121 = arith.constant 0 : index
    %249 = vector.load %arg12[%c88, %c0_121] : memref<324x256xf32, #tpu.memory_space<vmem>>, vector<4x256xf32>
    tpu.vector_store %arg12[%c88, %c0_121], %248 {strides = array<i32>} : memref<324x256xf32, #tpu.memory_space<vmem>>, vector<4x256xf32>,
    %cst_122 = arith.constant 0.000000e+00 : f32
    %250 = vector.broadcast %cst_122 : f32 to vector<4x55xf32>
    %251 = vector.extract_strided_slice %201 {offsets = [0, 0], sizes = [4, 201], strides = [1, 1]} : vector<4x256xf32> to vector<4x201xf32>
    %252 = tpu.concatenate %250, %251 in 1 : vector<4x55xf32>, vector<4x201xf32> -> vector<4x256xf32>
    %253 = vector.broadcast %13 : vector<1x256xf32> to vector<4x256xf32>
    %254 = arith.mulf %252, %253 : vector<4x256xf32>
    %c100 = arith.constant 100 : index
    %c0_123 = arith.constant 0 : index
    %255 = vector.load %arg12[%c100, %c0_123] : memref<324x256xf32, #tpu.memory_space<vmem>>, vector<4x256xf32>
    tpu.vector_store %arg12[%c100, %c0_123], %254 {strides = array<i32>} : memref<324x256xf32, #tpu.memory_space<vmem>>, vector<4x256xf32>,
    %cst_124 = arith.constant 0.000000e+00 : f32
    %256 = vector.broadcast %cst_124 : f32 to vector<4x9xf32>
    %257 = vector.extract_strided_slice %201 {offsets = [0, 0], sizes = [4, 247], strides = [1, 1]} : vector<4x256xf32> to vector<4x247xf32>
    %258 = tpu.concatenate %256, %257 in 1 : vector<4x9xf32>, vector<4x247xf32> -> vector<4x256xf32>
    %259 = vector.broadcast %14 : vector<1x256xf32> to vector<4x256xf32>
    %260 = arith.mulf %258, %259 : vector<4x256xf32>
    %c112 = arith.constant 112 : index
    %c0_125 = arith.constant 0 : index
    %261 = vector.load %arg12[%c112, %c0_125] : memref<324x256xf32, #tpu.memory_space<vmem>>, vector<4x256xf32>
    tpu.vector_store %arg12[%c112, %c0_125], %260 {strides = array<i32>} : memref<324x256xf32, #tpu.memory_space<vmem>>, vector<4x256xf32>,
    %cst_126 = arith.constant 0.000000e+00 : f32
    %262 = vector.broadcast %cst_126 : f32 to vector<4x8xf32>
    %263 = vector.extract_strided_slice %201 {offsets = [0, 0], sizes = [4, 248], strides = [1, 1]} : vector<4x256xf32> to vector<4x248xf32>
    %264 = tpu.concatenate %262, %263 in 1 : vector<4x8xf32>, vector<4x248xf32> -> vector<4x256xf32>
    %265 = vector.broadcast %15 : vector<1x256xf32> to vector<4x256xf32>
    %266 = arith.mulf %264, %265 : vector<4x256xf32>
    %c124 = arith.constant 124 : index
    %c0_127 = arith.constant 0 : index
    %267 = vector.load %arg12[%c124, %c0_127] : memref<324x256xf32, #tpu.memory_space<vmem>>, vector<4x256xf32>
    tpu.vector_store %arg12[%c124, %c0_127], %266 {strides = array<i32>} : memref<324x256xf32, #tpu.memory_space<vmem>>, vector<4x256xf32>,
    %cst_128 = arith.constant 0.000000e+00 : f32
    %268 = vector.broadcast %cst_128 : f32 to vector<4x7xf32>
    %269 = vector.extract_strided_slice %201 {offsets = [0, 0], sizes = [4, 249], strides = [1, 1]} : vector<4x256xf32> to vector<4x249xf32>
    %270 = tpu.concatenate %268, %269 in 1 : vector<4x7xf32>, vector<4x249xf32> -> vector<4x256xf32>
    %271 = vector.broadcast %16 : vector<1x256xf32> to vector<4x256xf32>
    %272 = arith.mulf %270, %271 : vector<4x256xf32>
    %c136 = arith.constant 136 : index
    %c0_129 = arith.constant 0 : index
    %273 = vector.load %arg12[%c136, %c0_129] : memref<324x256xf32, #tpu.memory_space<vmem>>, vector<4x256xf32>
    tpu.vector_store %arg12[%c136, %c0_129], %272 {strides = array<i32>} : memref<324x256xf32, #tpu.memory_space<vmem>>, vector<4x256xf32>,
    %cst_130 = arith.constant 0.000000e+00 : f32
    %274 = vector.broadcast %cst_130 : f32 to vector<4x1xf32>
    %275 = vector.extract_strided_slice %201 {offsets = [0, 0], sizes = [4, 255], strides = [1, 1]} : vector<4x256xf32> to vector<4x255xf32>
    %276 = tpu.concatenate %274, %275 in 1 : vector<4x1xf32>, vector<4x255xf32> -> vector<4x256xf32>
    %277 = vector.broadcast %17 : vector<1x256xf32> to vector<4x256xf32>
    %278 = arith.mulf %276, %277 : vector<4x256xf32>
    %c148 = arith.constant 148 : index
    %c0_131 = arith.constant 0 : index
    %279 = vector.load %arg12[%c148, %c0_131] : memref<324x256xf32, #tpu.memory_space<vmem>>, vector<4x256xf32>
    tpu.vector_store %arg12[%c148, %c0_131], %278 {strides = array<i32>} : memref<324x256xf32, #tpu.memory_space<vmem>>, vector<4x256xf32>,
    %280 = vector.broadcast %18 : vector<1x256xf32> to vector<4x256xf32>
    %281 = arith.mulf %201, %280 : vector<4x256xf32>
    %c160 = arith.constant 160 : index
    %c0_132 = arith.constant 0 : index
    %282 = vector.load %arg12[%c160, %c0_132] : memref<324x256xf32, #tpu.memory_space<vmem>>, vector<4x256xf32>
    tpu.vector_store %arg12[%c160, %c0_132], %281 {strides = array<i32>} : memref<324x256xf32, #tpu.memory_space<vmem>>, vector<4x256xf32>,
    %cst_133 = arith.constant 0.000000e+00 : f32
    %283 = vector.broadcast %cst_133 : f32 to vector<4x1xf32>
    %284 = vector.extract_strided_slice %201 {offsets = [0, 1], sizes = [4, 255], strides = [1, 1]} : vector<4x256xf32> to vector<4x255xf32>
    %285 = tpu.concatenate %284, %283 in 1 : vector<4x255xf32>, vector<4x1xf32> -> vector<4x256xf32>
    %286 = vector.broadcast %19 : vector<1x256xf32> to vector<4x256xf32>
    %287 = arith.mulf %285, %286 : vector<4x256xf32>
    %c172 = arith.constant 172 : index
    %c0_134 = arith.constant 0 : index
    %288 = vector.load %arg12[%c172, %c0_134] : memref<324x256xf32, #tpu.memory_space<vmem>>, vector<4x256xf32>
    tpu.vector_store %arg12[%c172, %c0_134], %287 {strides = array<i32>} : memref<324x256xf32, #tpu.memory_space<vmem>>, vector<4x256xf32>,
    %cst_135 = arith.constant 0.000000e+00 : f32
    %289 = vector.broadcast %cst_135 : f32 to vector<4x7xf32>
    %290 = vector.extract_strided_slice %201 {offsets = [0, 7], sizes = [4, 249], strides = [1, 1]} : vector<4x256xf32> to vector<4x249xf32>
    %291 = tpu.concatenate %290, %289 in 1 : vector<4x249xf32>, vector<4x7xf32> -> vector<4x256xf32>
    %292 = vector.broadcast %20 : vector<1x256xf32> to vector<4x256xf32>
    %293 = arith.mulf %291, %292 : vector<4x256xf32>
    %c184 = arith.constant 184 : index
    %c0_136 = arith.constant 0 : index
    %294 = vector.load %arg12[%c184, %c0_136] : memref<324x256xf32, #tpu.memory_space<vmem>>, vector<4x256xf32>
    tpu.vector_store %arg12[%c184, %c0_136], %293 {strides = array<i32>} : memref<324x256xf32, #tpu.memory_space<vmem>>, vector<4x256xf32>,
    %cst_137 = arith.constant 0.000000e+00 : f32
    %295 = vector.broadcast %cst_137 : f32 to vector<4x8xf32>
    %296 = vector.extract_strided_slice %201 {offsets = [0, 8], sizes = [4, 248], strides = [1, 1]} : vector<4x256xf32> to vector<4x248xf32>
    %297 = tpu.concatenate %296, %295 in 1 : vector<4x248xf32>, vector<4x8xf32> -> vector<4x256xf32>
    %298 = vector.broadcast %21 : vector<1x256xf32> to vector<4x256xf32>
    %299 = arith.mulf %297, %298 : vector<4x256xf32>
    %c196 = arith.constant 196 : index
    %c0_138 = arith.constant 0 : index
    %300 = vector.load %arg12[%c196, %c0_138] : memref<324x256xf32, #tpu.memory_space<vmem>>, vector<4x256xf32>
    tpu.vector_store %arg12[%c196, %c0_138], %299 {strides = array<i32>} : memref<324x256xf32, #tpu.memory_space<vmem>>, vector<4x256xf32>,
    %cst_139 = arith.constant 0.000000e+00 : f32
    %301 = vector.broadcast %cst_139 : f32 to vector<4x9xf32>
    %302 = vector.extract_strided_slice %201 {offsets = [0, 9], sizes = [4, 247], strides = [1, 1]} : vector<4x256xf32> to vector<4x247xf32>
    %303 = tpu.concatenate %302, %301 in 1 : vector<4x247xf32>, vector<4x9xf32> -> vector<4x256xf32>
    %304 = vector.broadcast %22 : vector<1x256xf32> to vector<4x256xf32>
    %305 = arith.mulf %303, %304 : vector<4x256xf32>
    %c208 = arith.constant 208 : index
    %c0_140 = arith.constant 0 : index
    %306 = vector.load %arg12[%c208, %c0_140] : memref<324x256xf32, #tpu.memory_space<vmem>>, vector<4x256xf32>
    tpu.vector_store %arg12[%c208, %c0_140], %305 {strides = array<i32>} : memref<324x256xf32, #tpu.memory_space<vmem>>, vector<4x256xf32>,
    %cst_141 = arith.constant 0.000000e+00 : f32
    %307 = vector.broadcast %cst_141 : f32 to vector<4x55xf32>
    %308 = vector.extract_strided_slice %201 {offsets = [0, 55], sizes = [4, 201], strides = [1, 1]} : vector<4x256xf32> to vector<4x201xf32>
    %309 = tpu.concatenate %308, %307 in 1 : vector<4x201xf32>, vector<4x55xf32> -> vector<4x256xf32>
    %310 = vector.broadcast %23 : vector<1x256xf32> to vector<4x256xf32>
    %311 = arith.mulf %309, %310 : vector<4x256xf32>
    %c220 = arith.constant 220 : index
    %c0_142 = arith.constant 0 : index
    %312 = vector.load %arg12[%c220, %c0_142] : memref<324x256xf32, #tpu.memory_space<vmem>>, vector<4x256xf32>
    tpu.vector_store %arg12[%c220, %c0_142], %311 {strides = array<i32>} : memref<324x256xf32, #tpu.memory_space<vmem>>, vector<4x256xf32>,
    %cst_143 = arith.constant 0.000000e+00 : f32
    %313 = vector.broadcast %cst_143 : f32 to vector<4x56xf32>
    %314 = vector.extract_strided_slice %201 {offsets = [0, 56], sizes = [4, 200], strides = [1, 1]} : vector<4x256xf32> to vector<4x200xf32>
    %315 = tpu.concatenate %314, %313 in 1 : vector<4x200xf32>, vector<4x56xf32> -> vector<4x256xf32>
    %316 = vector.broadcast %24 : vector<1x256xf32> to vector<4x256xf32>
    %317 = arith.mulf %315, %316 : vector<4x256xf32>
    %c232 = arith.constant 232 : index
    %c0_144 = arith.constant 0 : index
    %318 = vector.load %arg12[%c232, %c0_144] : memref<324x256xf32, #tpu.memory_space<vmem>>, vector<4x256xf32>
    tpu.vector_store %arg12[%c232, %c0_144], %317 {strides = array<i32>} : memref<324x256xf32, #tpu.memory_space<vmem>>, vector<4x256xf32>,
    %cst_145 = arith.constant 0.000000e+00 : f32
    %319 = vector.broadcast %cst_145 : f32 to vector<4x57xf32>
    %320 = vector.extract_strided_slice %201 {offsets = [0, 57], sizes = [4, 199], strides = [1, 1]} : vector<4x256xf32> to vector<4x199xf32>
    %321 = tpu.concatenate %320, %319 in 1 : vector<4x199xf32>, vector<4x57xf32> -> vector<4x256xf32>
    %322 = vector.broadcast %25 : vector<1x256xf32> to vector<4x256xf32>
    %323 = arith.mulf %321, %322 : vector<4x256xf32>
    %c244 = arith.constant 244 : index
    %c0_146 = arith.constant 0 : index
    %324 = vector.load %arg12[%c244, %c0_146] : memref<324x256xf32, #tpu.memory_space<vmem>>, vector<4x256xf32>
    tpu.vector_store %arg12[%c244, %c0_146], %323 {strides = array<i32>} : memref<324x256xf32, #tpu.memory_space<vmem>>, vector<4x256xf32>,
    %cst_147 = arith.constant 0.000000e+00 : f32
    %325 = vector.broadcast %cst_147 : f32 to vector<4x63xf32>
    %326 = vector.extract_strided_slice %201 {offsets = [0, 63], sizes = [4, 193], strides = [1, 1]} : vector<4x256xf32> to vector<4x193xf32>
    %327 = tpu.concatenate %326, %325 in 1 : vector<4x193xf32>, vector<4x63xf32> -> vector<4x256xf32>
    %328 = vector.broadcast %26 : vector<1x256xf32> to vector<4x256xf32>
    %329 = arith.mulf %327, %328 : vector<4x256xf32>
    %c256 = arith.constant 256 : index
    %c0_148 = arith.constant 0 : index
    %330 = vector.load %arg12[%c256, %c0_148] : memref<324x256xf32, #tpu.memory_space<vmem>>, vector<4x256xf32>
    tpu.vector_store %arg12[%c256, %c0_148], %329 {strides = array<i32>} : memref<324x256xf32, #tpu.memory_space<vmem>>, vector<4x256xf32>,
    %cst_149 = arith.constant 0.000000e+00 : f32
    %331 = vector.broadcast %cst_149 : f32 to vector<4x64xf32>
    %332 = vector.extract_strided_slice %201 {offsets = [0, 64], sizes = [4, 192], strides = [1, 1]} : vector<4x256xf32> to vector<4x192xf32>
    %333 = tpu.concatenate %332, %331 in 1 : vector<4x192xf32>, vector<4x64xf32> -> vector<4x256xf32>
    %334 = vector.broadcast %27 : vector<1x256xf32> to vector<4x256xf32>
    %335 = arith.mulf %333, %334 : vector<4x256xf32>
    %c268 = arith.constant 268 : index
    %c0_150 = arith.constant 0 : index
    %336 = vector.load %arg12[%c268, %c0_150] : memref<324x256xf32, #tpu.memory_space<vmem>>, vector<4x256xf32>
    tpu.vector_store %arg12[%c268, %c0_150], %335 {strides = array<i32>} : memref<324x256xf32, #tpu.memory_space<vmem>>, vector<4x256xf32>,
    %cst_151 = arith.constant 0.000000e+00 : f32
    %337 = vector.broadcast %cst_151 : f32 to vector<4x65xf32>
    %338 = vector.extract_strided_slice %201 {offsets = [0, 65], sizes = [4, 191], strides = [1, 1]} : vector<4x256xf32> to vector<4x191xf32>
    %339 = tpu.concatenate %338, %337 in 1 : vector<4x191xf32>, vector<4x65xf32> -> vector<4x256xf32>
    %340 = vector.broadcast %28 : vector<1x256xf32> to vector<4x256xf32>
    %341 = arith.mulf %339, %340 : vector<4x256xf32>
    %c280 = arith.constant 280 : index
    %c0_152 = arith.constant 0 : index
    %342 = vector.load %arg12[%c280, %c0_152] : memref<324x256xf32, #tpu.memory_space<vmem>>, vector<4x256xf32>
    tpu.vector_store %arg12[%c280, %c0_152], %341 {strides = array<i32>} : memref<324x256xf32, #tpu.memory_space<vmem>>, vector<4x256xf32>,
    %cst_153 = arith.constant 0.000000e+00 : f32
    %343 = vector.broadcast %cst_153 : f32 to vector<4x71xf32>
    %344 = vector.extract_strided_slice %201 {offsets = [0, 71], sizes = [4, 185], strides = [1, 1]} : vector<4x256xf32> to vector<4x185xf32>
    %345 = tpu.concatenate %344, %343 in 1 : vector<4x185xf32>, vector<4x71xf32> -> vector<4x256xf32>
    %346 = vector.broadcast %29 : vector<1x256xf32> to vector<4x256xf32>
    %347 = arith.mulf %345, %346 : vector<4x256xf32>
    %c292 = arith.constant 292 : index
    %c0_154 = arith.constant 0 : index
    %348 = vector.load %arg12[%c292, %c0_154] : memref<324x256xf32, #tpu.memory_space<vmem>>, vector<4x256xf32>
    tpu.vector_store %arg12[%c292, %c0_154], %347 {strides = array<i32>} : memref<324x256xf32, #tpu.memory_space<vmem>>, vector<4x256xf32>,
    %cst_155 = arith.constant 0.000000e+00 : f32
    %349 = vector.broadcast %cst_155 : f32 to vector<4x72xf32>
    %350 = vector.extract_strided_slice %201 {offsets = [0, 72], sizes = [4, 184], strides = [1, 1]} : vector<4x256xf32> to vector<4x184xf32>
    %351 = tpu.concatenate %350, %349 in 1 : vector<4x184xf32>, vector<4x72xf32> -> vector<4x256xf32>
    %352 = vector.broadcast %30 : vector<1x256xf32> to vector<4x256xf32>
    %353 = arith.mulf %351, %352 : vector<4x256xf32>
    %c304 = arith.constant 304 : index
    %c0_156 = arith.constant 0 : index
    %354 = vector.load %arg12[%c304, %c0_156] : memref<324x256xf32, #tpu.memory_space<vmem>>, vector<4x256xf32>
    tpu.vector_store %arg12[%c304, %c0_156], %353 {strides = array<i32>} : memref<324x256xf32, #tpu.memory_space<vmem>>, vector<4x256xf32>,
    %cst_157 = arith.constant 0.000000e+00 : f32
    %355 = vector.broadcast %cst_157 : f32 to vector<4x73xf32>
    %356 = vector.extract_strided_slice %201 {offsets = [0, 73], sizes = [4, 183], strides = [1, 1]} : vector<4x256xf32> to vector<4x183xf32>
    %357 = tpu.concatenate %356, %355 in 1 : vector<4x183xf32>, vector<4x73xf32> -> vector<4x256xf32>
    %358 = vector.broadcast %31 : vector<1x256xf32> to vector<4x256xf32>
    %359 = arith.mulf %357, %358 : vector<4x256xf32>
    %c316 = arith.constant 316 : index
    %c0_158 = arith.constant 0 : index
    %360 = vector.load %arg12[%c316, %c0_158] : memref<324x256xf32, #tpu.memory_space<vmem>>, vector<4x256xf32>
    tpu.vector_store %arg12[%c316, %c0_158], %359 {strides = array<i32>} : memref<324x256xf32, #tpu.memory_space<vmem>>, vector<4x256xf32>,
    %c0_159 = arith.constant 0 : index
    %c0_160 = arith.constant 0 : index
    %361 = vector.load %arg5[%c0_159, %c0_160] : memref<4x324xf32, #tpu.memory_space<vmem>>, vector<4x324xf32>
    %c0_161 = arith.constant 0 : index
    %c0_162 = arith.constant 0 : index
    %362 = vector.load %arg12[%c0_161, %c0_162] : memref<324x256xf32, #tpu.memory_space<vmem>>, vector<324x256xf32>
    %cst_163 = arith.constant dense<0.000000e+00> : vector<4x256xf32>
    %363 = tpu.matmul %361, %362, %cst_163 {dimension_numbers = #tpu.dot_dimension_numbers<[1], [0], [0], [1], [0, 0, 1, 1], [], []>} : vector<4x324xf32>, vector<324x256xf32>, vector<4x256xf32> -> vector<4x256xf32>
    %c0_164 = arith.constant 0 : index
    %c0_165 = arith.constant 0 : index
    %364 = vector.load %arg6[%c0_164, %c0_165] : memref<4x1xf32, #tpu.memory_space<vmem>>, vector<4x1xf32>
    %365 = vector.broadcast %364 : vector<4x1xf32> to vector<4x256xf32>
    %366 = arith.addf %363, %365 : vector<4x256xf32>
    %cst_166 = arith.constant 0.000000e+00 : f32
    %367 = vector.broadcast %cst_166 : f32 to vector<4x256xf32>
    %368 = arith.maximumf %366, %367 : vector<4x256xf32>
    %c8_167 = arith.constant 8 : index
    %c0_168 = arith.constant 0 : index
    %369 = vector.load %arg11[%c8_167, %c0_168] : memref<16x256xf32, #tpu.memory_space<vmem>>, vector<4x256xf32>
    tpu.vector_store %arg11[%c8_167, %c0_168], %368 {strides = array<i32>} : memref<16x256xf32, #tpu.memory_space<vmem>>, vector<4x256xf32>,
    %c8_169 = arith.constant 8 : index
    %c0_170 = arith.constant 0 : index
    %370 = vector.load %arg11[%c8_169, %c0_170] : memref<16x256xf32, #tpu.memory_space<vmem>>, vector<4x256xf32>
    %cst_171 = arith.constant 0.000000e+00 : f32
    %371 = vector.broadcast %cst_171 : f32 to vector<4x73xf32>
    %372 = vector.extract_strided_slice %370 {offsets = [0, 0], sizes = [4, 183], strides = [1, 1]} : vector<4x256xf32> to vector<4x183xf32>
    %373 = tpu.concatenate %371, %372 in 1 : vector<4x73xf32>, vector<4x183xf32> -> vector<4x256xf32>
    %374 = vector.broadcast %5 : vector<1x256xf32> to vector<4x256xf32>
    %375 = arith.mulf %373, %374 : vector<4x256xf32>
    %c8_172 = arith.constant 8 : index
    %c0_173 = arith.constant 0 : index
    %376 = vector.load %arg12[%c8_172, %c0_173] : memref<324x256xf32, #tpu.memory_space<vmem>>, vector<4x256xf32>
    tpu.vector_store %arg12[%c8_172, %c0_173], %375 {strides = array<i32>} : memref<324x256xf32, #tpu.memory_space<vmem>>, vector<4x256xf32>,
    %cst_174 = arith.constant 0.000000e+00 : f32
    %377 = vector.broadcast %cst_174 : f32 to vector<4x72xf32>
    %378 = vector.extract_strided_slice %370 {offsets = [0, 0], sizes = [4, 184], strides = [1, 1]} : vector<4x256xf32> to vector<4x184xf32>
    %379 = tpu.concatenate %377, %378 in 1 : vector<4x72xf32>, vector<4x184xf32> -> vector<4x256xf32>
    %380 = vector.broadcast %6 : vector<1x256xf32> to vector<4x256xf32>
    %381 = arith.mulf %379, %380 : vector<4x256xf32>
    %c20_175 = arith.constant 20 : index
    %c0_176 = arith.constant 0 : index
    %382 = vector.load %arg12[%c20_175, %c0_176] : memref<324x256xf32, #tpu.memory_space<vmem>>, vector<4x256xf32>
    tpu.vector_store %arg12[%c20_175, %c0_176], %381 {strides = array<i32>} : memref<324x256xf32, #tpu.memory_space<vmem>>, vector<4x256xf32>,
    %cst_177 = arith.constant 0.000000e+00 : f32
    %383 = vector.broadcast %cst_177 : f32 to vector<4x71xf32>
    %384 = vector.extract_strided_slice %370 {offsets = [0, 0], sizes = [4, 185], strides = [1, 1]} : vector<4x256xf32> to vector<4x185xf32>
    %385 = tpu.concatenate %383, %384 in 1 : vector<4x71xf32>, vector<4x185xf32> -> vector<4x256xf32>
    %386 = vector.broadcast %7 : vector<1x256xf32> to vector<4x256xf32>
    %387 = arith.mulf %385, %386 : vector<4x256xf32>
    %c32 = arith.constant 32 : index
    %c0_178 = arith.constant 0 : index
    %388 = vector.load %arg12[%c32, %c0_178] : memref<324x256xf32, #tpu.memory_space<vmem>>, vector<4x256xf32>
    tpu.vector_store %arg12[%c32, %c0_178], %387 {strides = array<i32>} : memref<324x256xf32, #tpu.memory_space<vmem>>, vector<4x256xf32>,
    %cst_179 = arith.constant 0.000000e+00 : f32
    %389 = vector.broadcast %cst_179 : f32 to vector<4x65xf32>
    %390 = vector.extract_strided_slice %370 {offsets = [0, 0], sizes = [4, 191], strides = [1, 1]} : vector<4x256xf32> to vector<4x191xf32>
    %391 = tpu.concatenate %389, %390 in 1 : vector<4x65xf32>, vector<4x191xf32> -> vector<4x256xf32>
    %392 = vector.broadcast %8 : vector<1x256xf32> to vector<4x256xf32>
    %393 = arith.mulf %391, %392 : vector<4x256xf32>
    %c44 = arith.constant 44 : index
    %c0_180 = arith.constant 0 : index
    %394 = vector.load %arg12[%c44, %c0_180] : memref<324x256xf32, #tpu.memory_space<vmem>>, vector<4x256xf32>
    tpu.vector_store %arg12[%c44, %c0_180], %393 {strides = array<i32>} : memref<324x256xf32, #tpu.memory_space<vmem>>, vector<4x256xf32>,
    %cst_181 = arith.constant 0.000000e+00 : f32
    %395 = vector.broadcast %cst_181 : f32 to vector<4x64xf32>
    %396 = vector.extract_strided_slice %370 {offsets = [0, 0], sizes = [4, 192], strides = [1, 1]} : vector<4x256xf32> to vector<4x192xf32>
    %397 = tpu.concatenate %395, %396 in 1 : vector<4x64xf32>, vector<4x192xf32> -> vector<4x256xf32>
    %398 = vector.broadcast %9 : vector<1x256xf32> to vector<4x256xf32>
    %399 = arith.mulf %397, %398 : vector<4x256xf32>
    %c56 = arith.constant 56 : index
    %c0_182 = arith.constant 0 : index
    %400 = vector.load %arg12[%c56, %c0_182] : memref<324x256xf32, #tpu.memory_space<vmem>>, vector<4x256xf32>
    tpu.vector_store %arg12[%c56, %c0_182], %399 {strides = array<i32>} : memref<324x256xf32, #tpu.memory_space<vmem>>, vector<4x256xf32>,
    %cst_183 = arith.constant 0.000000e+00 : f32
    %401 = vector.broadcast %cst_183 : f32 to vector<4x63xf32>
    %402 = vector.extract_strided_slice %370 {offsets = [0, 0], sizes = [4, 193], strides = [1, 1]} : vector<4x256xf32> to vector<4x193xf32>
    %403 = tpu.concatenate %401, %402 in 1 : vector<4x63xf32>, vector<4x193xf32> -> vector<4x256xf32>
    %404 = vector.broadcast %10 : vector<1x256xf32> to vector<4x256xf32>
    %405 = arith.mulf %403, %404 : vector<4x256xf32>
    %c68 = arith.constant 68 : index
    %c0_184 = arith.constant 0 : index
    %406 = vector.load %arg12[%c68, %c0_184] : memref<324x256xf32, #tpu.memory_space<vmem>>, vector<4x256xf32>
    tpu.vector_store %arg12[%c68, %c0_184], %405 {strides = array<i32>} : memref<324x256xf32, #tpu.memory_space<vmem>>, vector<4x256xf32>,
    %cst_185 = arith.constant 0.000000e+00 : f32
    %407 = vector.broadcast %cst_185 : f32 to vector<4x57xf32>
    %408 = vector.extract_strided_slice %370 {offsets = [0, 0], sizes = [4, 199], strides = [1, 1]} : vector<4x256xf32> to vector<4x199xf32>
    %409 = tpu.concatenate %407, %408 in 1 : vector<4x57xf32>, vector<4x199xf32> -> vector<4x256xf32>
    %410 = vector.broadcast %11 : vector<1x256xf32> to vector<4x256xf32>
    %411 = arith.mulf %409, %410 : vector<4x256xf32>
    %c80 = arith.constant 80 : index
    %c0_186 = arith.constant 0 : index
    %412 = vector.load %arg12[%c80, %c0_186] : memref<324x256xf32, #tpu.memory_space<vmem>>, vector<4x256xf32>
    tpu.vector_store %arg12[%c80, %c0_186], %411 {strides = array<i32>} : memref<324x256xf32, #tpu.memory_space<vmem>>, vector<4x256xf32>,
    %cst_187 = arith.constant 0.000000e+00 : f32
    %413 = vector.broadcast %cst_187 : f32 to vector<4x56xf32>
    %414 = vector.extract_strided_slice %370 {offsets = [0, 0], sizes = [4, 200], strides = [1, 1]} : vector<4x256xf32> to vector<4x200xf32>
    %415 = tpu.concatenate %413, %414 in 1 : vector<4x56xf32>, vector<4x200xf32> -> vector<4x256xf32>
    %416 = vector.broadcast %12 : vector<1x256xf32> to vector<4x256xf32>
    %417 = arith.mulf %415, %416 : vector<4x256xf32>
    %c92 = arith.constant 92 : index
    %c0_188 = arith.constant 0 : index
    %418 = vector.load %arg12[%c92, %c0_188] : memref<324x256xf32, #tpu.memory_space<vmem>>, vector<4x256xf32>
    tpu.vector_store %arg12[%c92, %c0_188], %417 {strides = array<i32>} : memref<324x256xf32, #tpu.memory_space<vmem>>, vector<4x256xf32>,
    %cst_189 = arith.constant 0.000000e+00 : f32
    %419 = vector.broadcast %cst_189 : f32 to vector<4x55xf32>
    %420 = vector.extract_strided_slice %370 {offsets = [0, 0], sizes = [4, 201], strides = [1, 1]} : vector<4x256xf32> to vector<4x201xf32>
    %421 = tpu.concatenate %419, %420 in 1 : vector<4x55xf32>, vector<4x201xf32> -> vector<4x256xf32>
    %422 = vector.broadcast %13 : vector<1x256xf32> to vector<4x256xf32>
    %423 = arith.mulf %421, %422 : vector<4x256xf32>
    %c104 = arith.constant 104 : index
    %c0_190 = arith.constant 0 : index
    %424 = vector.load %arg12[%c104, %c0_190] : memref<324x256xf32, #tpu.memory_space<vmem>>, vector<4x256xf32>
    tpu.vector_store %arg12[%c104, %c0_190], %423 {strides = array<i32>} : memref<324x256xf32, #tpu.memory_space<vmem>>, vector<4x256xf32>,
    %cst_191 = arith.constant 0.000000e+00 : f32
    %425 = vector.broadcast %cst_191 : f32 to vector<4x9xf32>
    %426 = vector.extract_strided_slice %370 {offsets = [0, 0], sizes = [4, 247], strides = [1, 1]} : vector<4x256xf32> to vector<4x247xf32>
    %427 = tpu.concatenate %425, %426 in 1 : vector<4x9xf32>, vector<4x247xf32> -> vector<4x256xf32>
    %428 = vector.broadcast %14 : vector<1x256xf32> to vector<4x256xf32>
    %429 = arith.mulf %427, %428 : vector<4x256xf32>
    %c116 = arith.constant 116 : index
    %c0_192 = arith.constant 0 : index
    %430 = vector.load %arg12[%c116, %c0_192] : memref<324x256xf32, #tpu.memory_space<vmem>>, vector<4x256xf32>
    tpu.vector_store %arg12[%c116, %c0_192], %429 {strides = array<i32>} : memref<324x256xf32, #tpu.memory_space<vmem>>, vector<4x256xf32>,
    %cst_193 = arith.constant 0.000000e+00 : f32
    %431 = vector.broadcast %cst_193 : f32 to vector<4x8xf32>
    %432 = vector.extract_strided_slice %370 {offsets = [0, 0], sizes = [4, 248], strides = [1, 1]} : vector<4x256xf32> to vector<4x248xf32>
    %433 = tpu.concatenate %431, %432 in 1 : vector<4x8xf32>, vector<4x248xf32> -> vector<4x256xf32>
    %434 = vector.broadcast %15 : vector<1x256xf32> to vector<4x256xf32>
    %435 = arith.mulf %433, %434 : vector<4x256xf32>
    %c128 = arith.constant 128 : index
    %c0_194 = arith.constant 0 : index
    %436 = vector.load %arg12[%c128, %c0_194] : memref<324x256xf32, #tpu.memory_space<vmem>>, vector<4x256xf32>
    tpu.vector_store %arg12[%c128, %c0_194], %435 {strides = array<i32>} : memref<324x256xf32, #tpu.memory_space<vmem>>, vector<4x256xf32>,
    %cst_195 = arith.constant 0.000000e+00 : f32
    %437 = vector.broadcast %cst_195 : f32 to vector<4x7xf32>
    %438 = vector.extract_strided_slice %370 {offsets = [0, 0], sizes = [4, 249], strides = [1, 1]} : vector<4x256xf32> to vector<4x249xf32>
    %439 = tpu.concatenate %437, %438 in 1 : vector<4x7xf32>, vector<4x249xf32> -> vector<4x256xf32>
    %440 = vector.broadcast %16 : vector<1x256xf32> to vector<4x256xf32>
    %441 = arith.mulf %439, %440 : vector<4x256xf32>
    %c140 = arith.constant 140 : index
    %c0_196 = arith.constant 0 : index
    %442 = vector.load %arg12[%c140, %c0_196] : memref<324x256xf32, #tpu.memory_space<vmem>>, vector<4x256xf32>
    tpu.vector_store %arg12[%c140, %c0_196], %441 {strides = array<i32>} : memref<324x256xf32, #tpu.memory_space<vmem>>, vector<4x256xf32>,
    %cst_197 = arith.constant 0.000000e+00 : f32
    %443 = vector.broadcast %cst_197 : f32 to vector<4x1xf32>
    %444 = vector.extract_strided_slice %370 {offsets = [0, 0], sizes = [4, 255], strides = [1, 1]} : vector<4x256xf32> to vector<4x255xf32>
    %445 = tpu.concatenate %443, %444 in 1 : vector<4x1xf32>, vector<4x255xf32> -> vector<4x256xf32>
    %446 = vector.broadcast %17 : vector<1x256xf32> to vector<4x256xf32>
    %447 = arith.mulf %445, %446 : vector<4x256xf32>
    %c152 = arith.constant 152 : index
    %c0_198 = arith.constant 0 : index
    %448 = vector.load %arg12[%c152, %c0_198] : memref<324x256xf32, #tpu.memory_space<vmem>>, vector<4x256xf32>
    tpu.vector_store %arg12[%c152, %c0_198], %447 {strides = array<i32>} : memref<324x256xf32, #tpu.memory_space<vmem>>, vector<4x256xf32>,
    %449 = vector.broadcast %18 : vector<1x256xf32> to vector<4x256xf32>
    %450 = arith.mulf %370, %449 : vector<4x256xf32>
    %c164 = arith.constant 164 : index
    %c0_199 = arith.constant 0 : index
    %451 = vector.load %arg12[%c164, %c0_199] : memref<324x256xf32, #tpu.memory_space<vmem>>, vector<4x256xf32>
    tpu.vector_store %arg12[%c164, %c0_199], %450 {strides = array<i32>} : memref<324x256xf32, #tpu.memory_space<vmem>>, vector<4x256xf32>,
    %cst_200 = arith.constant 0.000000e+00 : f32
    %452 = vector.broadcast %cst_200 : f32 to vector<4x1xf32>
    %453 = vector.extract_strided_slice %370 {offsets = [0, 1], sizes = [4, 255], strides = [1, 1]} : vector<4x256xf32> to vector<4x255xf32>
    %454 = tpu.concatenate %453, %452 in 1 : vector<4x255xf32>, vector<4x1xf32> -> vector<4x256xf32>
    %455 = vector.broadcast %19 : vector<1x256xf32> to vector<4x256xf32>
    %456 = arith.mulf %454, %455 : vector<4x256xf32>
    %c176 = arith.constant 176 : index
    %c0_201 = arith.constant 0 : index
    %457 = vector.load %arg12[%c176, %c0_201] : memref<324x256xf32, #tpu.memory_space<vmem>>, vector<4x256xf32>
    tpu.vector_store %arg12[%c176, %c0_201], %456 {strides = array<i32>} : memref<324x256xf32, #tpu.memory_space<vmem>>, vector<4x256xf32>,
    %cst_202 = arith.constant 0.000000e+00 : f32
    %458 = vector.broadcast %cst_202 : f32 to vector<4x7xf32>
    %459 = vector.extract_strided_slice %370 {offsets = [0, 7], sizes = [4, 249], strides = [1, 1]} : vector<4x256xf32> to vector<4x249xf32>
    %460 = tpu.concatenate %459, %458 in 1 : vector<4x249xf32>, vector<4x7xf32> -> vector<4x256xf32>
    %461 = vector.broadcast %20 : vector<1x256xf32> to vector<4x256xf32>
    %462 = arith.mulf %460, %461 : vector<4x256xf32>
    %c188 = arith.constant 188 : index
    %c0_203 = arith.constant 0 : index
    %463 = vector.load %arg12[%c188, %c0_203] : memref<324x256xf32, #tpu.memory_space<vmem>>, vector<4x256xf32>
    tpu.vector_store %arg12[%c188, %c0_203], %462 {strides = array<i32>} : memref<324x256xf32, #tpu.memory_space<vmem>>, vector<4x256xf32>,
    %cst_204 = arith.constant 0.000000e+00 : f32
    %464 = vector.broadcast %cst_204 : f32 to vector<4x8xf32>
    %465 = vector.extract_strided_slice %370 {offsets = [0, 8], sizes = [4, 248], strides = [1, 1]} : vector<4x256xf32> to vector<4x248xf32>
    %466 = tpu.concatenate %465, %464 in 1 : vector<4x248xf32>, vector<4x8xf32> -> vector<4x256xf32>
    %467 = vector.broadcast %21 : vector<1x256xf32> to vector<4x256xf32>
    %468 = arith.mulf %466, %467 : vector<4x256xf32>
    %c200 = arith.constant 200 : index
    %c0_205 = arith.constant 0 : index
    %469 = vector.load %arg12[%c200, %c0_205] : memref<324x256xf32, #tpu.memory_space<vmem>>, vector<4x256xf32>
    tpu.vector_store %arg12[%c200, %c0_205], %468 {strides = array<i32>} : memref<324x256xf32, #tpu.memory_space<vmem>>, vector<4x256xf32>,
    %cst_206 = arith.constant 0.000000e+00 : f32
    %470 = vector.broadcast %cst_206 : f32 to vector<4x9xf32>
    %471 = vector.extract_strided_slice %370 {offsets = [0, 9], sizes = [4, 247], strides = [1, 1]} : vector<4x256xf32> to vector<4x247xf32>
    %472 = tpu.concatenate %471, %470 in 1 : vector<4x247xf32>, vector<4x9xf32> -> vector<4x256xf32>
    %473 = vector.broadcast %22 : vector<1x256xf32> to vector<4x256xf32>
    %474 = arith.mulf %472, %473 : vector<4x256xf32>
    %c212 = arith.constant 212 : index
    %c0_207 = arith.constant 0 : index
    %475 = vector.load %arg12[%c212, %c0_207] : memref<324x256xf32, #tpu.memory_space<vmem>>, vector<4x256xf32>
    tpu.vector_store %arg12[%c212, %c0_207], %474 {strides = array<i32>} : memref<324x256xf32, #tpu.memory_space<vmem>>, vector<4x256xf32>,
    %cst_208 = arith.constant 0.000000e+00 : f32
    %476 = vector.broadcast %cst_208 : f32 to vector<4x55xf32>
    %477 = vector.extract_strided_slice %370 {offsets = [0, 55], sizes = [4, 201], strides = [1, 1]} : vector<4x256xf32> to vector<4x201xf32>
    %478 = tpu.concatenate %477, %476 in 1 : vector<4x201xf32>, vector<4x55xf32> -> vector<4x256xf32>
    %479 = vector.broadcast %23 : vector<1x256xf32> to vector<4x256xf32>
    %480 = arith.mulf %478, %479 : vector<4x256xf32>
    %c224 = arith.constant 224 : index
    %c0_209 = arith.constant 0 : index
    %481 = vector.load %arg12[%c224, %c0_209] : memref<324x256xf32, #tpu.memory_space<vmem>>, vector<4x256xf32>
    tpu.vector_store %arg12[%c224, %c0_209], %480 {strides = array<i32>} : memref<324x256xf32, #tpu.memory_space<vmem>>, vector<4x256xf32>,
    %cst_210 = arith.constant 0.000000e+00 : f32
    %482 = vector.broadcast %cst_210 : f32 to vector<4x56xf32>
    %483 = vector.extract_strided_slice %370 {offsets = [0, 56], sizes = [4, 200], strides = [1, 1]} : vector<4x256xf32> to vector<4x200xf32>
    %484 = tpu.concatenate %483, %482 in 1 : vector<4x200xf32>, vector<4x56xf32> -> vector<4x256xf32>
    %485 = vector.broadcast %24 : vector<1x256xf32> to vector<4x256xf32>
    %486 = arith.mulf %484, %485 : vector<4x256xf32>
    %c236 = arith.constant 236 : index
    %c0_211 = arith.constant 0 : index
    %487 = vector.load %arg12[%c236, %c0_211] : memref<324x256xf32, #tpu.memory_space<vmem>>, vector<4x256xf32>
    tpu.vector_store %arg12[%c236, %c0_211], %486 {strides = array<i32>} : memref<324x256xf32, #tpu.memory_space<vmem>>, vector<4x256xf32>,
    %cst_212 = arith.constant 0.000000e+00 : f32
    %488 = vector.broadcast %cst_212 : f32 to vector<4x57xf32>
    %489 = vector.extract_strided_slice %370 {offsets = [0, 57], sizes = [4, 199], strides = [1, 1]} : vector<4x256xf32> to vector<4x199xf32>
    %490 = tpu.concatenate %489, %488 in 1 : vector<4x199xf32>, vector<4x57xf32> -> vector<4x256xf32>
    %491 = vector.broadcast %25 : vector<1x256xf32> to vector<4x256xf32>
    %492 = arith.mulf %490, %491 : vector<4x256xf32>
    %c248 = arith.constant 248 : index
    %c0_213 = arith.constant 0 : index
    %493 = vector.load %arg12[%c248, %c0_213] : memref<324x256xf32, #tpu.memory_space<vmem>>, vector<4x256xf32>
    tpu.vector_store %arg12[%c248, %c0_213], %492 {strides = array<i32>} : memref<324x256xf32, #tpu.memory_space<vmem>>, vector<4x256xf32>,
    %cst_214 = arith.constant 0.000000e+00 : f32
    %494 = vector.broadcast %cst_214 : f32 to vector<4x63xf32>
    %495 = vector.extract_strided_slice %370 {offsets = [0, 63], sizes = [4, 193], strides = [1, 1]} : vector<4x256xf32> to vector<4x193xf32>
    %496 = tpu.concatenate %495, %494 in 1 : vector<4x193xf32>, vector<4x63xf32> -> vector<4x256xf32>
    %497 = vector.broadcast %26 : vector<1x256xf32> to vector<4x256xf32>
    %498 = arith.mulf %496, %497 : vector<4x256xf32>
    %c260 = arith.constant 260 : index
    %c0_215 = arith.constant 0 : index
    %499 = vector.load %arg12[%c260, %c0_215] : memref<324x256xf32, #tpu.memory_space<vmem>>, vector<4x256xf32>
    tpu.vector_store %arg12[%c260, %c0_215], %498 {strides = array<i32>} : memref<324x256xf32, #tpu.memory_space<vmem>>, vector<4x256xf32>,
    %cst_216 = arith.constant 0.000000e+00 : f32
    %500 = vector.broadcast %cst_216 : f32 to vector<4x64xf32>
    %501 = vector.extract_strided_slice %370 {offsets = [0, 64], sizes = [4, 192], strides = [1, 1]} : vector<4x256xf32> to vector<4x192xf32>
    %502 = tpu.concatenate %501, %500 in 1 : vector<4x192xf32>, vector<4x64xf32> -> vector<4x256xf32>
    %503 = vector.broadcast %27 : vector<1x256xf32> to vector<4x256xf32>
    %504 = arith.mulf %502, %503 : vector<4x256xf32>
    %c272 = arith.constant 272 : index
    %c0_217 = arith.constant 0 : index
    %505 = vector.load %arg12[%c272, %c0_217] : memref<324x256xf32, #tpu.memory_space<vmem>>, vector<4x256xf32>
    tpu.vector_store %arg12[%c272, %c0_217], %504 {strides = array<i32>} : memref<324x256xf32, #tpu.memory_space<vmem>>, vector<4x256xf32>,
    %cst_218 = arith.constant 0.000000e+00 : f32
    %506 = vector.broadcast %cst_218 : f32 to vector<4x65xf32>
    %507 = vector.extract_strided_slice %370 {offsets = [0, 65], sizes = [4, 191], strides = [1, 1]} : vector<4x256xf32> to vector<4x191xf32>
    %508 = tpu.concatenate %507, %506 in 1 : vector<4x191xf32>, vector<4x65xf32> -> vector<4x256xf32>
    %509 = vector.broadcast %28 : vector<1x256xf32> to vector<4x256xf32>
    %510 = arith.mulf %508, %509 : vector<4x256xf32>
    %c284 = arith.constant 284 : index
    %c0_219 = arith.constant 0 : index
    %511 = vector.load %arg12[%c284, %c0_219] : memref<324x256xf32, #tpu.memory_space<vmem>>, vector<4x256xf32>
    tpu.vector_store %arg12[%c284, %c0_219], %510 {strides = array<i32>} : memref<324x256xf32, #tpu.memory_space<vmem>>, vector<4x256xf32>,
    %cst_220 = arith.constant 0.000000e+00 : f32
    %512 = vector.broadcast %cst_220 : f32 to vector<4x71xf32>
    %513 = vector.extract_strided_slice %370 {offsets = [0, 71], sizes = [4, 185], strides = [1, 1]} : vector<4x256xf32> to vector<4x185xf32>
    %514 = tpu.concatenate %513, %512 in 1 : vector<4x185xf32>, vector<4x71xf32> -> vector<4x256xf32>
    %515 = vector.broadcast %29 : vector<1x256xf32> to vector<4x256xf32>
    %516 = arith.mulf %514, %515 : vector<4x256xf32>
    %c296 = arith.constant 296 : index
    %c0_221 = arith.constant 0 : index
    %517 = vector.load %arg12[%c296, %c0_221] : memref<324x256xf32, #tpu.memory_space<vmem>>, vector<4x256xf32>
    tpu.vector_store %arg12[%c296, %c0_221], %516 {strides = array<i32>} : memref<324x256xf32, #tpu.memory_space<vmem>>, vector<4x256xf32>,
    %cst_222 = arith.constant 0.000000e+00 : f32
    %518 = vector.broadcast %cst_222 : f32 to vector<4x72xf32>
    %519 = vector.extract_strided_slice %370 {offsets = [0, 72], sizes = [4, 184], strides = [1, 1]} : vector<4x256xf32> to vector<4x184xf32>
    %520 = tpu.concatenate %519, %518 in 1 : vector<4x184xf32>, vector<4x72xf32> -> vector<4x256xf32>
    %521 = vector.broadcast %30 : vector<1x256xf32> to vector<4x256xf32>
    %522 = arith.mulf %520, %521 : vector<4x256xf32>
    %c308 = arith.constant 308 : index
    %c0_223 = arith.constant 0 : index
    %523 = vector.load %arg12[%c308, %c0_223] : memref<324x256xf32, #tpu.memory_space<vmem>>, vector<4x256xf32>
    tpu.vector_store %arg12[%c308, %c0_223], %522 {strides = array<i32>} : memref<324x256xf32, #tpu.memory_space<vmem>>, vector<4x256xf32>,
    %cst_224 = arith.constant 0.000000e+00 : f32
    %524 = vector.broadcast %cst_224 : f32 to vector<4x73xf32>
    %525 = vector.extract_strided_slice %370 {offsets = [0, 73], sizes = [4, 183], strides = [1, 1]} : vector<4x256xf32> to vector<4x183xf32>
    %526 = tpu.concatenate %525, %524 in 1 : vector<4x183xf32>, vector<4x73xf32> -> vector<4x256xf32>
    %527 = vector.broadcast %31 : vector<1x256xf32> to vector<4x256xf32>
    %528 = arith.mulf %526, %527 : vector<4x256xf32>
    %c320 = arith.constant 320 : index
    %c0_225 = arith.constant 0 : index
    %529 = vector.load %arg12[%c320, %c0_225] : memref<324x256xf32, #tpu.memory_space<vmem>>, vector<4x256xf32>
    tpu.vector_store %arg12[%c320, %c0_225], %528 {strides = array<i32>} : memref<324x256xf32, #tpu.memory_space<vmem>>, vector<4x256xf32>,
    %c0_226 = arith.constant 0 : index
    %c0_227 = arith.constant 0 : index
    %530 = vector.load %arg7[%c0_226, %c0_227] : memref<4x324xf32, #tpu.memory_space<vmem>>, vector<4x324xf32>
    %c0_228 = arith.constant 0 : index
    %c0_229 = arith.constant 0 : index
    %531 = vector.load %arg12[%c0_228, %c0_229] : memref<324x256xf32, #tpu.memory_space<vmem>>, vector<324x256xf32>
    %cst_230 = arith.constant dense<0.000000e+00> : vector<4x256xf32>
    %532 = tpu.matmul %530, %531, %cst_230 {dimension_numbers = #tpu.dot_dimension_numbers<[1], [0], [0], [1], [0, 0, 1, 1], [], []>} : vector<4x324xf32>, vector<324x256xf32>, vector<4x256xf32> -> vector<4x256xf32>
    %c0_231 = arith.constant 0 : index
    %c0_232 = arith.constant 0 : index
    %533 = vector.load %arg8[%c0_231, %c0_232] : memref<4x1xf32, #tpu.memory_space<vmem>>, vector<4x1xf32>
    %534 = vector.broadcast %533 : vector<4x1xf32> to vector<4x256xf32>
    %535 = arith.addf %532, %534 : vector<4x256xf32>
    %cst_233 = arith.constant 0.000000e+00 : f32
    %536 = vector.broadcast %cst_233 : f32 to vector<4x256xf32>
    %537 = arith.maximumf %535, %536 : vector<4x256xf32>
    %c12_234 = arith.constant 12 : index
    %c0_235 = arith.constant 0 : index
    %538 = vector.load %arg11[%c12_234, %c0_235] : memref<16x256xf32, #tpu.memory_space<vmem>>, vector<4x256xf32>
    tpu.vector_store %arg11[%c12_234, %c0_235], %537 {strides = array<i32>} : memref<16x256xf32, #tpu.memory_space<vmem>>, vector<4x256xf32>,
    %c0_236 = arith.constant 0 : index
    %c0_237 = arith.constant 0 : index
    %539 = vector.load %arg9[%c0_236, %c0_237] : memref<4x16xf32, #tpu.memory_space<vmem>>, vector<4x16xf32>
    %c0_238 = arith.constant 0 : index
    %c0_239 = arith.constant 0 : index
    %540 = vector.load %arg11[%c0_238, %c0_239] : memref<16x256xf32, #tpu.memory_space<vmem>>, vector<16x256xf32>
    %cst_240 = arith.constant dense<0.000000e+00> : vector<4x256xf32>
    %541 = tpu.matmul %539, %540, %cst_240 {dimension_numbers = #tpu.dot_dimension_numbers<[1], [0], [0], [1], [0, 0, 1, 1], [], []>} : vector<4x16xf32>, vector<16x256xf32>, vector<4x256xf32> -> vector<4x256xf32>
    %c0_241 = arith.constant 0 : index
    %c0_242 = arith.constant 0 : index
    %c0_243 = arith.constant 0 : index
    %542 = vector.load %arg10[%c0_241, %c0_242, %c0_243] : memref<1x4x256xf32, #tpu.memory_space<vmem>>, vector<1x4x256xf32>
    %543 = vector.shape_cast %542 : vector<1x4x256xf32> to vector<4x256xf32>
    %544 = vector.shape_cast %541 : vector<4x256xf32> to vector<1x4x256xf32>
    tpu.vector_store %arg10[%c0_241, %c0_242, %c0_243], %544 {strides = array<i32>} : memref<1x4x256xf32, #tpu.memory_space<vmem>>, vector<1x4x256xf32>,
    return
  }
  func.func @transform_0(%arg0: i32) -> (i32, i32, i32) {
    %c0_i32 = arith.constant 0 : i32
    %c0_i32_0 = arith.constant 0 : i32
    %c0_i32_1 = arith.constant 0 : i32
    return %arg0, %c0_i32, %c0_i32_0 : i32, i32, i32
  }
  func.func @transform_1(%arg0: i32) -> (i32, i32) {
    %c0_i32 = arith.constant 0 : i32
    %c0_i32_0 = arith.constant 0 : i32
    %c0_i32_1 = arith.constant 0 : i32
    return %c0_i32, %c0_i32_0 : i32, i32
  }
  func.func @transform_2(%arg0: i32) -> (i32, i32) {
    %c0_i32 = arith.constant 0 : i32
    %c0_i32_0 = arith.constant 0 : i32
    %c0_i32_1 = arith.constant 0 : i32
    return %c0_i32, %c0_i32_0 : i32, i32
  }
  func.func @transform_3(%arg0: i32) -> (i32, i32) {
    %c0_i32 = arith.constant 0 : i32
    %c0_i32_0 = arith.constant 0 : i32
    %c0_i32_1 = arith.constant 0 : i32
    return %c0_i32, %c0_i32_0 : i32, i32
  }
  func.func @transform_4(%arg0: i32) -> (i32, i32) {
    %c0_i32 = arith.constant 0 : i32
    %c0_i32_0 = arith.constant 0 : i32
    %c0_i32_1 = arith.constant 0 : i32
    return %c0_i32, %c0_i32_0 : i32, i32
  }
  func.func @transform_5(%arg0: i32) -> (i32, i32) {
    %c0_i32 = arith.constant 0 : i32
    %c0_i32_0 = arith.constant 0 : i32
    %c0_i32_1 = arith.constant 0 : i32
    return %c0_i32, %c0_i32_0 : i32, i32
  }
  func.func @transform_6(%arg0: i32) -> (i32, i32) {
    %c0_i32 = arith.constant 0 : i32
    %c0_i32_0 = arith.constant 0 : i32
    %c0_i32_1 = arith.constant 0 : i32
    return %c0_i32, %c0_i32_0 : i32, i32
  }
  func.func @transform_7(%arg0: i32) -> (i32, i32) {
    %c0_i32 = arith.constant 0 : i32
    %c0_i32_0 = arith.constant 0 : i32
    %c0_i32_1 = arith.constant 0 : i32
    return %c0_i32, %c0_i32_0 : i32, i32
  }
  func.func @transform_8(%arg0: i32) -> (i32, i32) {
    %c0_i32 = arith.constant 0 : i32
    %c0_i32_0 = arith.constant 0 : i32
    %c0_i32_1 = arith.constant 0 : i32
    return %c0_i32, %c0_i32_0 : i32, i32
  }
  func.func @transform_9(%arg0: i32) -> (i32, i32, i32) {
    %c0_i32 = arith.constant 0 : i32
    %c0_i32_0 = arith.constant 0 : i32
    %c0_i32_1 = arith.constant 0 : i32
    return %arg0, %c0_i32, %c0_i32_0 : i32, i32, i32
  }
}

</mosaic_0001>

<llo_original>
// kernel: tpu_custom_call.1
$region0: #{tpu_custom_call.1}
  #allocation0 [shape = 'u32[]', space=smem, size = 0x4, offset = 0x4, fixed_abs, tag = 'smem constant byte address 0x4 - core index']
  #allocation1 [shape = 'u32[144,128]{1,0:T(1,128)}', space=vmem, size = 0x12000, scoped, tag = 'internal scratch']
  #allocation2 [shape = 'f32[16,256]{1,0:T(8,128)}', space=vmem, size = 0x4000, scoped, tag = 'scratch operand']
  #allocation3 [shape = 'f32[324,256]{1,0:T(8,128)}', space=vmem, size = 0x52000, scoped, tag = 'scratch operand']
  %s0 = inlined_call_operand.hbm [shape: f32[2,4,256], index: 0, kind: input, shape index: {}]
  %s1 = inlined_call_operand.hbm [shape: f32[27,256], index: 1, kind: input, shape index: {}]
  %s2 = inlined_call_operand.vmem [shape: f32[4,324], index: 2, kind: input, shape index: {}]
  %s3 = inlined_call_operand.vmem [shape: f32[4,1], index: 3, kind: input, shape index: {}]
  %s4 = inlined_call_operand.vmem [shape: f32[4,324], index: 4, kind: input, shape index: {}]
  %s5 = inlined_call_operand.vmem [shape: f32[4,1], index: 5, kind: input, shape index: {}]
  %s6 = inlined_call_operand.vmem [shape: f32[4,324], index: 6, kind: input, shape index: {}]
  %s7 = inlined_call_operand.vmem [shape: f32[4,1], index: 7, kind: input, shape index: {}]
  %s8 = inlined_call_operand.vmem [shape: f32[4,16], index: 8, kind: input, shape index: {}]
  %s9 = inlined_call_operand.hbm [shape: f32[2,4,256], index: 9, kind: output, shape index: {}]
  %s10 = sld [smem:[#allocation0]]
  $region77: #{tpu_custom_call.1} parent=0
    _
  %s12 = ssub.s32 1, %s10
  %s13 = scalar_select 0, %s12, %s10
  $region1: #{tpu_custom_call.1} parent=0
    #allocation4 [shape = 'u8[8192]{0}', space=vmem, size = 0x2000, scoped, tag = 'input window, operand 0']
    #allocation5 [shape = 's32[2]{0}', space=sflag, size = 0x8, scoped, tag = 'scoped memory for tpu_custom_call.1']
    #allocation6 [shape = 's32[2]{0}', space=sflag, size = 0x8, scoped, tag = 'scoped memory for tpu_custom_call.1']
    #allocation7 [shape = 'u8[32768]{0}', space=vmem, size = 0x8000, scoped, tag = 'input window, operand 1, single buffered']
    #allocation8 [shape = 's32[1]{0}', space=sflag, size = 0x4, scoped, tag = 'scoped memory for tpu_custom_call.1']
    #allocation9 [shape = 'u8[8192]{0}', space=vmem, size = 0x2000, scoped, tag = 'output window, operand 0']
    %14 = vsyncpa [#allocation5], 0
    %s15 = scalar_lea.sflag [#allocation5], 1
    %16 = vsyncpa %s15, 0
    %17 = vsyncpa [#allocation8], 0
    %18 = vsyncpa [#allocation6], 0
    %s19 = scalar_lea.sflag [#allocation6], 1
    %20 = vsyncpa %s19, 0
    loop: start=0, step=1, limit=4
    $region2: #{tpu_custom_call.1} parent=1 // loop_pre_header
      _
    $region3: #{tpu_custom_call.1} parent=1 // loop_header
      %s22 = sphi 0, %s26
      %p23 = scmp.ge.s32.totalorder %s22, 4
      %s32 = sphi 0, %s34
      %s35 = sphi 0, %s32
      %s36 = sphi 0, %s35
      %s52 = sphi 0, %s36
      %s56 = sphi 0, %s56
      %s58 = sphi 0, %s56
      %s59 = sphi 0, %s58
      %s73 = sphi 0, %s59
      %s77 = sphi 0, %s77
      %s79 = sphi 0, %s77
      %s80 = sphi 0, %s79
      %s94 = sphi 0, %s80
      %s98 = sphi 0, %s98
      %s100 = sphi 0, %s98
      %s101 = sphi 0, %s100
      %s115 = sphi 0, %s101
      %s119 = sphi 0, %s119
      %s121 = sphi 0, %s119
      %s122 = sphi 0, %s121
      %s136 = sphi 0, %s122
      %s140 = sphi 0, %s140
      %s142 = sphi 0, %s140
      %s143 = sphi 0, %s142
      %s157 = sphi 0, %s143
      %s161 = sphi 0, %s161
      %s163 = sphi 0, %s161
      %s164 = sphi 0, %s163
      %s178 = sphi 0, %s164
      %s182 = sphi 0, %s182
      %s184 = sphi 0, %s182
      %s185 = sphi 0, %s184
      %s199 = sphi 0, %s185
      %s203 = sphi 0, %s203
      %s205 = sphi 0, %s203
      %s206 = sphi 0, %s205
      %s220 = sphi 0, %s206
      %s226 = sphi 0, %s228
      %s229 = sphi 0, %s226
      %s230 = sphi 0, %s229
      %s246 = sphi 0, %s230
    $region4: #{tpu_custom_call.1} parent=1 // loop_header_branch
      %25 = sbr.rel (%p23) target = $region8
    $region5: #{tpu_custom_call.1} parent=1 // loop_body
      %s27 = ssub.s32 %s22, 1
      %s28 = ssub.s32 %s22, 2
      %s29 = sadd.s32 %s22, 1
      %s30 = ssub.s32 %s22, %s29
      %p31 = scmp.eq.s32.totalorder %s30, 0
      %s33 = sadd.s32 %s32, 1
      %s34 = scalar_select %p31, %s32, %s33
      %p37 = pneg %p31
      %p38 = scmp.eq.s32.totalorder %s22, 1
      %p39 = por %p37, %p38
      %p40 = scmp.ne.s32.totalorder %s32, %s35
      %p41 = scmp.eq.s32.totalorder %s22, 0
      %p42 = por %p40, %p41
      %p43 = scmp.ne.s32.totalorder %s32, %s35
      %p44 = scmp.eq.s32.totalorder %s27, 1
      %p45 = por %p43, %p44
      %p46 = scmp.ne.s32.totalorder %s35, %s36
      %p47 = scmp.eq.s32.totalorder %s27, 0
      %p48 = por %p46, %p47
      %p49 = scmp.ne.s32.totalorder %s35, %s36
      %p50 = scmp.eq.s32.totalorder %s28, 1
      %p51 = por %p49, %p50
      %p53 = scmp.ne.s32.totalorder %s36, %s52
      %p54 = scmp.eq.s32.totalorder %s28, 0
      %p55 = por %p53, %p54
      %s57 = sadd.s32 %s56, 1
      %p60 = scmp.eq.s32.totalorder %s22, 1
      %p61 = scmp.ne.s32.totalorder %s56, %s58
      %p62 = scmp.eq.s32.totalorder %s22, 0
      %p63 = por %p61, %p62
      %p64 = scmp.ne.s32.totalorder %s56, %s58
      %p65 = scmp.eq.s32.totalorder %s27, 1
      %p66 = por %p64, %p65
      %p67 = scmp.ne.s32.totalorder %s58, %s59
      %p68 = scmp.eq.s32.totalorder %s27, 0
      %p69 = por %p67, %p68
      %p70 = scmp.ne.s32.totalorder %s58, %s59
      %p71 = scmp.eq.s32.totalorder %s28, 1
      %p72 = por %p70, %p71
      %p74 = scmp.ne.s32.totalorder %s59, %s73
      %p75 = scmp.eq.s32.totalorder %s28, 0
      %p76 = por %p74, %p75
      %s78 = sadd.s32 %s77, 1
      %p81 = scmp.eq.s32.totalorder %s22, 1
      %p82 = scmp.ne.s32.totalorder %s77, %s79
      %p83 = scmp.eq.s32.totalorder %s22, 0
      %p84 = por %p82, %p83
      %p85 = scmp.ne.s32.totalorder %s77, %s79
      %p86 = scmp.eq.s32.totalorder %s27, 1
      %p87 = por %p85, %p86
      %p88 = scmp.ne.s32.totalorder %s79, %s80
      %p89 = scmp.eq.s32.totalorder %s27, 0
      %p90 = por %p88, %p89
      %p91 = scmp.ne.s32.totalorder %s79, %s80
      %p92 = scmp.eq.s32.totalorder %s28, 1
      %p93 = por %p91, %p92
      %p95 = scmp.ne.s32.totalorder %s80, %s94
      %p96 = scmp.eq.s32.totalorder %s28, 0
      %p97 = por %p95, %p96
      %s99 = sadd.s32 %s98, 1
      %p102 = scmp.eq.s32.totalorder %s22, 1
      %p103 = scmp.ne.s32.totalorder %s98, %s100
      %p104 = scmp.eq.s32.totalorder %s22, 0
      %p105 = por %p103, %p104
      %p106 = scmp.ne.s32.totalorder %s98, %s100
      %p107 = scmp.eq.s32.totalorder %s27, 1
      %p108 = por %p106, %p107
      %p109 = scmp.ne.s32.totalorder %s100, %s101
      %p110 = scmp.eq.s32.totalorder %s27, 0
      %p111 = por %p109, %p110
      %p112 = scmp.ne.s32.totalorder %s100, %s101
      %p113 = scmp.eq.s32.totalorder %s28, 1
      %p114 = por %p112, %p113
      %p116 = scmp.ne.s32.totalorder %s101, %s115
      %p117 = scmp.eq.s32.totalorder %s28, 0
      %p118 = por %p116, %p117
      %s120 = sadd.s32 %s119, 1
      %p123 = scmp.eq.s32.totalorder %s22, 1
      %p124 = scmp.ne.s32.totalorder %s119, %s121
      %p125 = scmp.eq.s32.totalorder %s22, 0
      %p126 = por %p124, %p125
      %p127 = scmp.ne.s32.totalorder %s119, %s121
      %p128 = scmp.eq.s32.totalorder %s27, 1
      %p129 = por %p127, %p128
      %p130 = scmp.ne.s32.totalorder %s121, %s122
      %p131 = scmp.eq.s32.totalorder %s27, 0
      %p132 = por %p130, %p131
      %p133 = scmp.ne.s32.totalorder %s121, %s122
      %p134 = scmp.eq.s32.totalorder %s28, 1
      %p135 = por %p133, %p134
      %p137 = scmp.ne.s32.totalorder %s122, %s136
      %p138 = scmp.eq.s32.totalorder %s28, 0
      %p139 = por %p137, %p138
      %s141 = sadd.s32 %s140, 1
      %p144 = scmp.eq.s32.totalorder %s22, 1
      %p145 = scmp.ne.s32.totalorder %s140, %s142
      %p146 = scmp.eq.s32.totalorder %s22, 0
      %p147 = por %p145, %p146
      %p148 = scmp.ne.s32.totalorder %s140, %s142
      %p149 = scmp.eq.s32.totalorder %s27, 1
      %p150 = por %p148, %p149
      %p151 = scmp.ne.s32.totalorder %s142, %s143
      %p152 = scmp.eq.s32.totalorder %s27, 0
      %p153 = por %p151, %p152
      %p154 = scmp.ne.s32.totalorder %s142, %s143
      %p155 = scmp.eq.s32.totalorder %s28, 1
      %p156 = por %p154, %p155
      %p158 = scmp.ne.s32.totalorder %s143, %s157
      %p159 = scmp.eq.s32.totalorder %s28, 0
      %p160 = por %p158, %p159
      %s162 = sadd.s32 %s161, 1
      %p165 = scmp.eq.s32.totalorder %s22, 1
      %p166 = scmp.ne.s32.totalorder %s161, %s163
      %p167 = scmp.eq.s32.totalorder %s22, 0
      %p168 = por %p166, %p167
      %p169 = scmp.ne.s32.totalorder %s161, %s163
      %p170 = scmp.eq.s32.totalorder %s27, 1
      %p171 = por %p169, %p170
      %p172 = scmp.ne.s32.totalorder %s163, %s164
      %p173 = scmp.eq.s32.totalorder %s27, 0
      %p174 = por %p172, %p173
      %p175 = scmp.ne.s32.totalorder %s163, %s164
      %p176 = scmp.eq.s32.totalorder %s28, 1
      %p177 = por %p175, %p176
      %p179 = scmp.ne.s32.totalorder %s164, %s178
      %p180 = scmp.eq.s32.totalorder %s28, 0
      %p181 = por %p179, %p180
      %s183 = sadd.s32 %s182, 1
      %p186 = scmp.eq.s32.totalorder %s22, 1
      %p187 = scmp.ne.s32.totalorder %s182, %s184
      %p188 = scmp.eq.s32.totalorder %s22, 0
      %p189 = por %p187, %p188
      %p190 = scmp.ne.s32.totalorder %s182, %s184
      %p191 = scmp.eq.s32.totalorder %s27, 1
      %p192 = por %p190, %p191
      %p193 = scmp.ne.s32.totalorder %s184, %s185
      %p194 = scmp.eq.s32.totalorder %s27, 0
      %p195 = por %p193, %p194
      %p196 = scmp.ne.s32.totalorder %s184, %s185
      %p197 = scmp.eq.s32.totalorder %s28, 1
      %p198 = por %p196, %p197
      %p200 = scmp.ne.s32.totalorder %s185, %s199
      %p201 = scmp.eq.s32.totalorder %s28, 0
      %p202 = por %p200, %p201
      %s204 = sadd.s32 %s203, 1
      %p207 = scmp.eq.s32.totalorder %s22, 1
      %p208 = scmp.ne.s32.totalorder %s203, %s205
      %p209 = scmp.eq.s32.totalorder %s22, 0
      %p210 = por %p208, %p209
      %p211 = scmp.ne.s32.totalorder %s203, %s205
      %p212 = scmp.eq.s32.totalorder %s27, 1
      %p213 = por %p211, %p212
      %p214 = scmp.ne.s32.totalorder %s205, %s206
      %p215 = scmp.eq.s32.totalorder %s27, 0
      %p216 = por %p214, %p215
      %p217 = scmp.ne.s32.totalorder %s205, %s206
      %p218 = scmp.eq.s32.totalorder %s28, 1
      %p219 = por %p217, %p218
      %p221 = scmp.ne.s32.totalorder %s206, %s220
      %p222 = scmp.eq.s32.totalorder %s28, 0
      %p223 = por %p221, %p222
      %s224 = ssub.s32 %s22, %s29
      %p225 = scmp.eq.s32.totalorder %s224, 0
      %s227 = sadd.s32 %s226, 1
      %s228 = scalar_select %p225, %s226, %s227
      %p231 = pneg %p225
      %p232 = scmp.eq.s32.totalorder %s22, 1
      %p233 = por %p231, %p232
      %p234 = scmp.ne.s32.totalorder %s226, %s229
      %p235 = scmp.eq.s32.totalorder %s22, 0
      %p236 = por %p234, %p235
      %p237 = scmp.ne.s32.totalorder %s226, %s229
      %p238 = scmp.eq.s32.totalorder %s27, 1
      %p239 = por %p237, %p238
      %p240 = scmp.ne.s32.totalorder %s229, %s230
      %p241 = scmp.eq.s32.totalorder %s27, 0
      %p242 = por %p240, %p241
      %p243 = scmp.ne.s32.totalorder %s229, %s230
      %p244 = scmp.eq.s32.totalorder %s28, 1
      %p245 = por %p243, %p244
      %p247 = scmp.ne.s32.totalorder %s230, %s246
      %p248 = scmp.eq.s32.totalorder %s28, 0
      %p249 = por %p247, %p248
      %p250 = scmp.le.s32.totalorder 1, %s22
      %p251 = scmp.lt.s32.totalorder %s22, 3
      %p252 = pnand %p250, %p251
      %p253 = pneg %p252
      // Predicated region
      $region9: #{tpu_custom_call.1} parent=5 // pred_check
        _
      $region10: #{tpu_custom_call.1} parent=5 // pred_check_branch
        %255 = sbr.rel (%p252) target = $region12
      $region11: #{tpu_custom_call.1} parent=5 // pred_region
        %s256 = ssub.s32 %s22, 1
        // Predicated region
        $region13: #{tpu_custom_call.1} parent=11 // pred_check
          %p257 = pneg %p69
        $region14: #{tpu_custom_call.1} parent=11 // pred_check_branch
          %259 = sbr.rel (%p257) target = $region16
        $region15: #{tpu_custom_call.1} parent=11 // pred_region
          %s261 = ssub.s32 1024, 1024
          %262 = vsyncadd [#allocation8], %s261
          %s263 = sshll.u32 [#allocation7], 4
          %s264 = int_to_ptr.vmem [resolvable:$true] %s263
          %269 = dma.hbm_to_vmem [thread:$0]  %s1, 1024, %s264, [#allocation8], 256, 256, 16
        $region16: #{tpu_custom_call.1} parent=11 // pred_fallthru
          _
        // Predicated region
        $region17: #{tpu_custom_call.1} parent=11 // pred_check
          %p270 = pneg %p90
        $region18: #{tpu_custom_call.1} parent=11 // pred_check_branch
          %272 = sbr.rel (%p270) target = $region20
        $region19: #{tpu_custom_call.1} parent=11 // pred_region
          _
        $region20: #{tpu_custom_call.1} parent=11 // pred_fallthru
          _
        // Predicated region
        $region21: #{tpu_custom_call.1} parent=11 // pred_check
          %p273 = pneg %p111
        $region22: #{tpu_custom_call.1} parent=11 // pred_check_branch
          %275 = sbr.rel (%p273) target = $region24
        $region23: #{tpu_custom_call.1} parent=11 // pred_region
          _
        $region24: #{tpu_custom_call.1} parent=11 // pred_fallthru
          _
        // Predicated region
        $region25: #{tpu_custom_call.1} parent=11 // pred_check
          %p276 = pneg %p132
        $region26: #{tpu_custom_call.1} parent=11 // pred_check_branch
          %278 = sbr.rel (%p276) target = $region28
        $region27: #{tpu_custom_call.1} parent=11 // pred_region
          _
        $region28: #{tpu_custom_call.1} parent=11 // pred_fallthru
          _
        // Predicated region
        $region29: #{tpu_custom_call.1} parent=11 // pred_check
          %p279 = pneg %p153
        $region30: #{tpu_custom_call.1} parent=11 // pred_check_branch
          %281 = sbr.rel (%p279) target = $region32
        $region31: #{tpu_custom_call.1} parent=11 // pred_region
          _
        $region32: #{tpu_custom_call.1} parent=11 // pred_fallthru
          _
        // Predicated region
        $region33: #{tpu_custom_call.1} parent=11 // pred_check
          %p282 = pneg %p174
        $region34: #{tpu_custom_call.1} parent=11 // pred_check_branch
          %284 = sbr.rel (%p282) target = $region36
        $region35: #{tpu_custom_call.1} parent=11 // pred_region
          _
        $region36: #{tpu_custom_call.1} parent=11 // pred_fallthru
          _
        // Predicated region
        $region37: #{tpu_custom_call.1} parent=11 // pred_check
          %p285 = pneg %p195
        $region38: #{tpu_custom_call.1} parent=11 // pred_check_branch
          %287 = sbr.rel (%p285) target = $region40
        $region39: #{tpu_custom_call.1} parent=11 // pred_region
          _
        $region40: #{tpu_custom_call.1} parent=11 // pred_fallthru
          _
        // Predicated region
        $region41: #{tpu_custom_call.1} parent=11 // pred_check
          %p288 = pneg %p216
        $region42: #{tpu_custom_call.1} parent=11 // pred_check_branch
          %290 = sbr.rel (%p288) target = $region44
        $region43: #{tpu_custom_call.1} parent=11 // pred_region
          _
        $region44: #{tpu_custom_call.1} parent=11 // pred_fallthru
          _
      $region12: #{tpu_custom_call.1} parent=5 // pred_fallthru
        _
      %p291 = scmp.lt.s32.totalorder %s22, 2
      // Predicated region
      $region45: #{tpu_custom_call.1} parent=5 // pred_check
        %p292 = pneg %p291
      $region46: #{tpu_custom_call.1} parent=5 // pred_check_branch
        %294 = sbr.rel (%p292) target = $region48
      $region47: #{tpu_custom_call.1} parent=5 // pred_region
        // Predicated region
        $region49: #{tpu_custom_call.1} parent=47 // pred_check
          %p295 = pneg %p42
        $region50: #{tpu_custom_call.1} parent=47 // pred_check_branch
          %297 = sbr.rel (%p295) target = $region52
        $region51: #{tpu_custom_call.1} parent=47 // pred_region
          %s298 = sand.u32 %s32, 1
          %s299 = scalar_lea.sflag [#allocation5], %s298
          %s300 = sand.u32 %s32, 1
          %s301 = smul.addr %s300, 8
          %s302 = scalar_lea.vmem [#allocation4], %s301
          %s304 = ssub.s32 128, 128
          %305 = vsyncadd %s299, %s304
          %s306 = smul.addr %s22, 2
          %s307 = smul.addr %s306, 64
          %s308 = scalar_lea.hbm %s0, %s307
          %s310 = sshll.u32 %s302, 4
          %s311 = int_to_ptr.vmem [resolvable:$true] %s310
          %313 = dma.hbm_to_vmem [thread:$0]  %s308, 128, %s311, %s299
        $region52: #{tpu_custom_call.1} parent=47 // pred_fallthru
          _
      $region48: #{tpu_custom_call.1} parent=5 // pred_fallthru
        _
      %p314 = scmp.le.s32.totalorder 1, %s22
      %p315 = scmp.lt.s32.totalorder %s22, 3
      %p316 = pnand %p314, %p315
      %p317 = pneg %p316
      // Predicated region
      $region53: #{tpu_custom_call.1} parent=5 // pred_check
        _
      $region54: #{tpu_custom_call.1} parent=5 // pred_check_branch
        %319 = sbr.rel (%p316) target = $region56
      $region55: #{tpu_custom_call.1} parent=5 // pred_region
        %s320 = ssub.s32 %s22, 1
        %s321 = sand.u32 %s35, 1
        %s322 = scalar_lea.sflag [#allocation5], %s321
        %s323 = sand.u32 %s35, 1
        %s324 = smul.addr %s323, 8
        %s325 = scalar_lea.vmem [#allocation4], %s324
        // Predicated region
        $region57: #{tpu_custom_call.1} parent=55 // pred_check
          %p326 = pneg %p48
        $region58: #{tpu_custom_call.1} parent=55 // pred_check_branch
          %328 = sbr.rel (%p326) target = $region60
        $region59: #{tpu_custom_call.1} parent=55 // pred_region
          %329 = dma.done %s322, 128
        $region60: #{tpu_custom_call.1} parent=55 // pred_fallthru
          _
        // Predicated region
        $region61: #{tpu_custom_call.1} parent=55 // pred_check
          %p330 = pneg %p69
        $region62: #{tpu_custom_call.1} parent=55 // pred_check_branch
          %332 = sbr.rel (%p330) target = $region64
        $region63: #{tpu_custom_call.1} parent=55 // pred_region
          %333 = dma.done [#allocation8], 1024
        $region64: #{tpu_custom_call.1} parent=55 // pred_fallthru
          _
        %s334 = sand.u32 %s35, 1
        %s335 = scalar_lea.sflag [#allocation5], %s334
        %s336 = sand.u32 %s35, 1
        %s337 = smul.addr %s336, 8
        %s338 = scalar_lea.vmem [#allocation4], %s337
        %p339 = pneg %p48
        %p340 = pneg %p45
        %p341 = pneg %p69
        %p342 = pneg %p66
        %p343 = pneg %p90
        %p344 = pneg %p87
        %p345 = pneg %p111
        %p346 = pneg %p108
        %p347 = pneg %p132
        %p348 = pneg %p129
        %p349 = pneg %p153
        %p350 = pneg %p150
        %p351 = pneg %p174
        %p352 = pneg %p171
        %p353 = pneg %p195
        %p354 = pneg %p192
        %p355 = pneg %p216
        %p356 = pneg %p213
        %p357 = pneg %p242
        %p358 = pneg %p239
        %s359 = sand.u32 %s229, 1
        %s360 = scalar_lea.sflag [#allocation6], %s359
        %s361 = sand.u32 %s229, 1
        %s362 = smul.addr %s361, 8
        %s363 = scalar_lea.vmem [#allocation9], %s362
        %364 = vst [vmem:[#allocation3] sm:$0xff] 0.0
        %365 = vst [vmem:[#allocation3 + $0x8] sm:$0xff] 0.0
        %366 = vst [vmem:[#allocation3 + $0x10] sm:$0xff] 0.0
        %367 = vst [vmem:[#allocation3 + $0x18] sm:$0xff] 0.0
        %368 = vst [vmem:[#allocation3 + $0x20] sm:$0xff] 0.0
        %369 = vst [vmem:[#allocation3 + $0x28] sm:$0xff] 0.0
        %370 = vst [vmem:[#allocation3 + $0x30] sm:$0xff] 0.0
        %371 = vst [vmem:[#allocation3 + $0x38] sm:$0xff] 0.0
        %372 = vst [vmem:[#allocation3 + $0x40] sm:$0xff] 0.0
        %373 = vst [vmem:[#allocation3 + $0x48] sm:$0xff] 0.0
        %374 = vst [vmem:[#allocation3 + $0x50] sm:$0xff] 0.0
        %375 = vst [vmem:[#allocation3 + $0x58] sm:$0xff] 0.0
        %376 = vst [vmem:[#allocation3 + $0x60] sm:$0xff] 0.0
        %377 = vst [vmem:[#allocation3 + $0x68] sm:$0xff] 0.0
        %378 = vst [vmem:[#allocation3 + $0x70] sm:$0xff] 0.0
        %379 = vst [vmem:[#allocation3 + $0x78] sm:$0xff] 0.0
        %380 = vst [vmem:[#allocation3 + $0x80] sm:$0xff] 0.0
        %381 = vst [vmem:[#allocation3 + $0x88] sm:$0xff] 0.0
        %382 = vst [vmem:[#allocation3 + $0x90] sm:$0xff] 0.0
        %383 = vst [vmem:[#allocation3 + $0x98] sm:$0xff] 0.0
        %384 = vst [vmem:[#allocation3 + $0xa0] sm:$0xff] 0.0
        %385 = vst [vmem:[#allocation3 + $0xa8] sm:$0xff] 0.0
        %386 = vst [vmem:[#allocation3 + $0xb0] sm:$0xff] 0.0
        %387 = vst [vmem:[#allocation3 + $0xb8] sm:$0xff] 0.0
        %388 = vst [vmem:[#allocation3 + $0xc0] sm:$0xff] 0.0
        %389 = vst [vmem:[#allocation3 + $0xc8] sm:$0xff] 0.0
        %390 = vst [vmem:[#allocation3 + $0xd0] sm:$0xff] 0.0
        %391 = vst [vmem:[#allocation3 + $0xd8] sm:$0xff] 0.0
        %392 = vst [vmem:[#allocation3 + $0xe0] sm:$0xff] 0.0
        %393 = vst [vmem:[#allocation3 + $0xe8] sm:$0xff] 0.0
        %394 = vst [vmem:[#allocation3 + $0xf0] sm:$0xff] 0.0
        %395 = vst [vmem:[#allocation3 + $0xf8] sm:$0xff] 0.0
        %396 = vst [vmem:[#allocation3 + $0x100] sm:$0xff] 0.0
        %397 = vst [vmem:[#allocation3 + $0x108] sm:$0xff] 0.0
        %398 = vst [vmem:[#allocation3 + $0x110] sm:$0xff] 0.0
        %399 = vst [vmem:[#allocation3 + $0x118] sm:$0xff] 0.0
        %400 = vst [vmem:[#allocation3 + $0x120] sm:$0xff] 0.0
        %401 = vst [vmem:[#allocation3 + $0x128] sm:$0xff] 0.0
        %402 = vst [vmem:[#allocation3 + $0x130] sm:$0xff] 0.0
        %403 = vst [vmem:[#allocation3 + $0x138] sm:$0xff] 0.0
        %404 = vst [vmem:[#allocation3 + $0x140] sm:$0xff] 0.0
        %405 = vst [vmem:[#allocation3 + $0x148] sm:$0xff] 0.0
        %406 = vst [vmem:[#allocation3 + $0x150] sm:$0xff] 0.0
        %407 = vst [vmem:[#allocation3 + $0x158] sm:$0xff] 0.0
        %408 = vst [vmem:[#allocation3 + $0x160] sm:$0xff] 0.0
        %409 = vst [vmem:[#allocation3 + $0x168] sm:$0xff] 0.0
        %410 = vst [vmem:[#allocation3 + $0x170] sm:$0xff] 0.0
        %411 = vst [vmem:[#allocation3 + $0x178] sm:$0xff] 0.0
        %412 = vst [vmem:[#allocation3 + $0x180] sm:$0xff] 0.0
        %413 = vst [vmem:[#allocation3 + $0x188] sm:$0xff] 0.0
        %414 = vst [vmem:[#allocation3 + $0x190] sm:$0xff] 0.0
        %415 = vst [vmem:[#allocation3 + $0x198] sm:$0xff] 0.0
        %416 = vst [vmem:[#allocation3 + $0x1a0] sm:$0xff] 0.0
        %417 = vst [vmem:[#allocation3 + $0x1a8] sm:$0xff] 0.0
        %418 = vst [vmem:[#allocation3 + $0x1b0] sm:$0xff] 0.0
        %419 = vst [vmem:[#allocation3 + $0x1b8] sm:$0xff] 0.0
        %420 = vst [vmem:[#allocation3 + $0x1c0] sm:$0xff] 0.0
        %421 = vst [vmem:[#allocation3 + $0x1c8] sm:$0xff] 0.0
        %422 = vst [vmem:[#allocation3 + $0x1d0] sm:$0xff] 0.0
        %423 = vst [vmem:[#allocation3 + $0x1d8] sm:$0xff] 0.0
        %424 = vst [vmem:[#allocation3 + $0x1e0] sm:$0xff] 0.0
        %425 = vst [vmem:[#allocation3 + $0x1e8] sm:$0xff] 0.0
        %426 = vst [vmem:[#allocation3 + $0x1f0] sm:$0xff] 0.0
        %427 = vst [vmem:[#allocation3 + $0x1f8] sm:$0xff] 0.0
        %428 = vst [vmem:[#allocation3 + $0x200] sm:$0xff] 0.0
        %429 = vst [vmem:[#allocation3 + $0x208] sm:$0xff] 0.0
        %430 = vst [vmem:[#allocation3 + $0x210] sm:$0xff] 0.0
        %431 = vst [vmem:[#allocation3 + $0x218] sm:$0xff] 0.0
        %432 = vst [vmem:[#allocation3 + $0x220] sm:$0xff] 0.0
        %433 = vst [vmem:[#allocation3 + $0x228] sm:$0xff] 0.0
        %434 = vst [vmem:[#allocation3 + $0x230] sm:$0xff] 0.0
        %435 = vst [vmem:[#allocation3 + $0x238] sm:$0xff] 0.0
        %436 = vst [vmem:[#allocation3 + $0x240] sm:$0xff] 0.0
        %437 = vst [vmem:[#allocation3 + $0x248] sm:$0xff] 0.0
        %438 = vst [vmem:[#allocation3 + $0x250] sm:$0xff] 0.0
        %439 = vst [vmem:[#allocation3 + $0x258] sm:$0xff] 0.0
        %440 = vst [vmem:[#allocation3 + $0x260] sm:$0xff] 0.0
        %441 = vst [vmem:[#allocation3 + $0x268] sm:$0xff] 0.0
        %442 = vst [vmem:[#allocation3 + $0x270] sm:$0xff] 0.0
        %443 = vst [vmem:[#allocation3 + $0x278] sm:$0xff] 0.0
        %444 = vst [vmem:[#allocation3 + $0x280] sm:$0xf] 0.0
        %445 = vst [vmem:[#allocation3 + $0x288] sm:$0xf] 0.0
        %v446 = vld [vmem:[%s325] sm:$0xff]
        %v448 = vcombine.high %v446, %v446
        %450 = vst [vmem:[#allocation2] sm:$0xf] %v446
        %451 = vst [vmem:[#allocation2 + $0x8] sm:$0xf] %v448
        %v452 = vld [vmem:[#allocation7] ss:$8 sm:$0x3]
        %s453 = scalar_lea.vmem [#allocation7], 1
        %v454 = vld [vmem:[%s453] ss:$8 sm:$0x3]
        %s455 = scalar_lea.vmem [#allocation7], 2
        %v456 = vld [vmem:[%s455] ss:$8 sm:$0x3]
        %s457 = scalar_lea.vmem [#allocation7], 3
        %v458 = vld [vmem:[%s457] ss:$8 sm:$0x3]
        %s459 = scalar_lea.vmem [#allocation7], 4
        %v460 = vld [vmem:[%s459] ss:$8 sm:$0x3]
        %s461 = scalar_lea.vmem [#allocation7], 5
        %v462 = vld [vmem:[%s461] ss:$8 sm:$0x3]
        %s463 = scalar_lea.vmem [#allocation7], 6
        %v464 = vld [vmem:[%s463] ss:$8 sm:$0x3]
        %s465 = scalar_lea.vmem [#allocation7], 7
        %v466 = vld [vmem:[%s465] ss:$8 sm:$0x3]
        %s467 = scalar_lea.vmem [#allocation7], 16
        %v468 = vld [vmem:[%s467] ss:$8 sm:$0x3]
        %s469 = scalar_lea.vmem [#allocation7], 17
        %v470 = vld [vmem:[%s469] ss:$8 sm:$0x3]
        %s471 = scalar_lea.vmem [#allocation7], 18
        %v472 = vld [vmem:[%s471] ss:$8 sm:$0x3]
        %s473 = scalar_lea.vmem [#allocation7], 19
        %v474 = vld [vmem:[%s473] ss:$8 sm:$0x3]
        %s475 = scalar_lea.vmem [#allocation7], 20
        %v476 = vld [vmem:[%s475] ss:$8 sm:$0x3]
        %s477 = scalar_lea.vmem [#allocation7], 21
        %v478 = vld [vmem:[%s477] ss:$8 sm:$0x3]
        %s479 = scalar_lea.vmem [#allocation7], 22
        %v480 = vld [vmem:[%s479] ss:$8 sm:$0x3]
        %s481 = scalar_lea.vmem [#allocation7], 23
        %v482 = vld [vmem:[%s481] ss:$8 sm:$0x3]
        %s483 = scalar_lea.vmem [#allocation7], 32
        %v484 = vld [vmem:[%s483] ss:$8 sm:$0x3]
        %s485 = scalar_lea.vmem [#allocation7], 33
        %v486 = vld [vmem:[%s485] ss:$8 sm:$0x3]
        %s487 = scalar_lea.vmem [#allocation7], 34
        %v488 = vld [vmem:[%s487] ss:$8 sm:$0x3]
        %s489 = scalar_lea.vmem [#allocation7], 35
        %v490 = vld [vmem:[%s489] ss:$8 sm:$0x3]
        %s491 = scalar_lea.vmem [#allocation7], 36
        %v492 = vld [vmem:[%s491] ss:$8 sm:$0x3]
        %s493 = scalar_lea.vmem [#allocation7], 37
        %v494 = vld [vmem:[%s493] ss:$8 sm:$0x3]
        %s495 = scalar_lea.vmem [#allocation7], 38
        %v496 = vld [vmem:[%s495] ss:$8 sm:$0x3]
        %s497 = scalar_lea.vmem [#allocation7], 39
        %v498 = vld [vmem:[%s497] ss:$8 sm:$0x3]
        %s499 = scalar_lea.vmem [#allocation7], 48
        %v500 = vld [vmem:[%s499] ss:$8 sm:$0x3]
        %s501 = scalar_lea.vmem [#allocation7], 49
        %v502 = vld [vmem:[%s501] ss:$8 sm:$0x3]
        %s503 = scalar_lea.vmem [#allocation7], 50
        %v504 = vld [vmem:[%s503] ss:$8 sm:$0x3]
        %v505 = vld [vmem:[#allocation2] sm:$0xf]
        %v506 = vld [vmem:[#allocation2 + $0x8] sm:$0xf]
        %509 = vrot.lane.b32.xlu0 %v505, 73
        %v510 = vpop.permute.xlu0 %509
        %511 = vrot.lane.b32.xlu0 %v506, 73
        %v512 = vpop.permute.xlu0 %511
        %vm513 = vcmask 596992
        %v514 = vsel %vm513, %v510, %v512
        %v517 = vsel %vm513, 0.0, %v510
        %v519 = vlaneseq
        %v520 = vshrl.u32 %v519, 7
        %v521 = vsub.s32 0, %v520
        %v522 = vrot.slane %v452, %v521
        %v523 = vlaneseq
        %v524 = vshrl.u32 %v523, 7
        %v525 = vsub.s32 1, %v524
        %v526 = vrot.slane %v452, %v525
        %v529 = vmul.f32 %v517, %v522
        %v530 = vmul.f32 %v514, %v526
        %531 = vst [vmem:[#allocation3] sm:$0xf] %v529
        %532 = vst [vmem:[#allocation3 + $0x8] sm:$0xf] %v530
        %533 = vrot.lane.b32.xlu0 %v505, 72
        %v534 = vpop.permute.xlu0 %533
        %535 = vrot.lane.b32.xlu0 %v506, 72
        %v536 = vpop.permute.xlu0 %535
        %vm537 = vcmask 588800
        %v538 = vsel %vm537, %v534, %v536
        %v541 = vsel %vm537, 0.0, %v534
        %v543 = vlaneseq
        %v544 = vshrl.u32 %v543, 7
        %v545 = vsub.s32 0, %v544
        %v546 = vrot.slane %v454, %v545
        %v547 = vlaneseq
        %v548 = vshrl.u32 %v547, 7
        %v549 = vsub.s32 1, %v548
        %v550 = vrot.slane %v454, %v549
        %v553 = vmul.f32 %v541, %v546
        %v554 = vmul.f32 %v538, %v550
        %v557 = vrot.slane %v553, 4
        %v558 = vrot.slane %v554, 4
        %561 = vst [vmem:[#allocation3 + $0x10] sm:$0xf0] %v557
        %562 = vst [vmem:[#allocation3 + $0x18] sm:$0xf0] %v558
        %563 = vrot.lane.b32.xlu0 %v505, 71
        %v564 = vpop.permute.xlu0 %563
        %565 = vrot.lane.b32.xlu0 %v506, 71
        %v566 = vpop.permute.xlu0 %565
        %vm567 = vcmask 580608
        %v568 = vsel %vm567, %v564, %v566
        %v571 = vsel %vm567, 0.0, %v564
        %v573 = vlaneseq
        %v574 = vshrl.u32 %v573, 7
        %v575 = vsub.s32 0, %v574
        %v576 = vrot.slane %v456, %v575
        %v577 = vlaneseq
        %v578 = vshrl.u32 %v577, 7
        %v579 = vsub.s32 1, %v578
        %v580 = vrot.slane %v456, %v579
        %v583 = vmul.f32 %v571, %v576
        %v584 = vmul.f32 %v568, %v580
        %585 = vst [vmem:[#allocation3 + $0x30] sm:$0xf] %v583
        %586 = vst [vmem:[#allocation3 + $0x38] sm:$0xf] %v584
        %587 = vrot.lane.b32.xlu0 %v505, 65
        %v588 = vpop.permute.xlu0 %587
        %589 = vrot.lane.b32.xlu0 %v506, 65
        %v590 = vpop.permute.xlu0 %589
        %vm591 = vcmask 531456
        %v592 = vsel %vm591, %v588, %v590
        %v595 = vsel %vm591, 0.0, %v588
        %v597 = vlaneseq
        %v598 = vshrl.u32 %v597, 7
        %v599 = vsub.s32 0, %v598
        %v600 = vrot.slane %v458, %v599
        %v601 = vlaneseq
        %v602 = vshrl.u32 %v601, 7
        %v603 = vsub.s32 1, %v602
        %v604 = vrot.slane %v458, %v603
        %v607 = vmul.f32 %v595, %v600
        %v608 = vmul.f32 %v592, %v604
        %v611 = vrot.slane %v607, 4
        %v612 = vrot.slane %v608, 4
        %615 = vst [vmem:[#allocation3 + $0x40] sm:$0xf0] %v611
        %616 = vst [vmem:[#allocation3 + $0x48] sm:$0xf0] %v612
        %617 = vrot.lane.b32.xlu0 %v505, 64
        %v618 = vpop.permute.xlu0 %617
        %619 = vrot.lane.b32.xlu0 %v506, 64
        %v620 = vpop.permute.xlu0 %619
        %vm621 = vcmask 523264
        %v622 = vsel %vm621, %v618, %v620
        %v625 = vsel %vm621, 0.0, %v618
        %v627 = vlaneseq
        %v628 = vshrl.u32 %v627, 7
        %v629 = vsub.s32 0, %v628
        %v630 = vrot.slane %v460, %v629
        %v631 = vlaneseq
        %v632 = vshrl.u32 %v631, 7
        %v633 = vsub.s32 1, %v632
        %v634 = vrot.slane %v460, %v633
        %v637 = vmul.f32 %v625, %v630
        %v638 = vmul.f32 %v622, %v634
        %639 = vst [vmem:[#allocation3 + $0x60] sm:$0xf] %v637
        %640 = vst [vmem:[#allocation3 + $0x68] sm:$0xf] %v638
        %641 = vrot.lane.b32.xlu0 %v505, 63
        %v642 = vpop.permute.xlu0 %641
        %643 = vrot.lane.b32.xlu0 %v506, 63
        %v644 = vpop.permute.xlu0 %643
        %vm645 = vcmask 515072
        %v646 = vsel %vm645, %v642, %v644
        %v649 = vsel %vm645, 0.0, %v642
        %v651 = vlaneseq
        %v652 = vshrl.u32 %v651, 7
        %v653 = vsub.s32 0, %v652
        %v654 = vrot.slane %v462, %v653
        %v655 = vlaneseq
        %v656 = vshrl.u32 %v655, 7
        %v657 = vsub.s32 1, %v656
        %v658 = vrot.slane %v462, %v657
        %v661 = vmul.f32 %v649, %v654
        %v662 = vmul.f32 %v646, %v658
        %v665 = vrot.slane %v661, 4
        %v666 = vrot.slane %v662, 4
        %669 = vst [vmem:[#allocation3 + $0x70] sm:$0xf0] %v665
        %670 = vst [vmem:[#allocation3 + $0x78] sm:$0xf0] %v666
        %671 = vrot.lane.b32.xlu0 %v505, 57
        %v672 = vpop.permute.xlu0 %671
        %673 = vrot.lane.b32.xlu0 %v506, 57
        %v674 = vpop.permute.xlu0 %673
        %vm675 = vcmask 465920
        %v676 = vsel %vm675, %v672, %v674
        %v679 = vsel %vm675, 0.0, %v672
        %v681 = vlaneseq
        %v682 = vshrl.u32 %v681, 7
        %v683 = vsub.s32 0, %v682
        %v684 = vrot.slane %v464, %v683
        %v685 = vlaneseq
        %v686 = vshrl.u32 %v685, 7
        %v687 = vsub.s32 1, %v686
        %v688 = vrot.slane %v464, %v687
        %v691 = vmul.f32 %v679, %v684
        %v692 = vmul.f32 %v676, %v688
        %693 = vst [vmem:[#allocation3 + $0x90] sm:$0xf] %v691
        %694 = vst [vmem:[#allocation3 + $0x98] sm:$0xf] %v692
        %695 = vrot.lane.b32.xlu0 %v505, 56
        %v696 = vpop.permute.xlu0 %695
        %697 = vrot.lane.b32.xlu0 %v506, 56
        %v698 = vpop.permute.xlu0 %697
        %vm699 = vcmask 457728
        %v700 = vsel %vm699, %v696, %v698
        %v703 = vsel %vm699, 0.0, %v696
        %v705 = vlaneseq
        %v706 = vshrl.u32 %v705, 7
        %v707 = vsub.s32 0, %v706
        %v708 = vrot.slane %v466, %v707
        %v709 = vlaneseq
        %v710 = vshrl.u32 %v709, 7
        %v711 = vsub.s32 1, %v710
        %v712 = vrot.slane %v466, %v711
        %v715 = vmul.f32 %v703, %v708
        %v716 = vmul.f32 %v700, %v712
        %v719 = vrot.slane %v715, 4
        %v720 = vrot.slane %v716, 4
        %723 = vst [vmem:[#allocation3 + $0xa0] sm:$0xf0] %v719
        %724 = vst [vmem:[#allocation3 + $0xa8] sm:$0xf0] %v720
        %725 = vrot.lane.b32.xlu0 %v505, 55
        %v726 = vpop.permute.xlu0 %725
        %727 = vrot.lane.b32.xlu0 %v506, 55
        %v728 = vpop.permute.xlu0 %727
        %vm729 = vcmask 449536
        %v730 = vsel %vm729, %v726, %v728
        %v733 = vsel %vm729, 0.0, %v726
        %v735 = vlaneseq
        %v736 = vshrl.u32 %v735, 7
        %v737 = vsub.s32 0, %v736
        %v738 = vrot.slane %v468, %v737
        %v739 = vlaneseq
        %v740 = vshrl.u32 %v739, 7
        %v741 = vsub.s32 1, %v740
        %v742 = vrot.slane %v468, %v741
        %v745 = vmul.f32 %v733, %v738
        %v746 = vmul.f32 %v730, %v742
        %747 = vst [vmem:[#allocation3 + $0xc0] sm:$0xf] %v745
        %748 = vst [vmem:[#allocation3 + $0xc8] sm:$0xf] %v746
        %749 = vrot.lane.b32.xlu0 %v505, 9
        %v750 = vpop.permute.xlu0 %749
        %751 = vrot.lane.b32.xlu0 %v506, 9
        %v752 = vpop.permute.xlu0 %751
        %vm753 = vcmask 72704
        %v754 = vsel %vm753, %v750, %v752
        %v757 = vsel %vm753, 0.0, %v750
        %v759 = vlaneseq
        %v760 = vshrl.u32 %v759, 7
        %v761 = vsub.s32 0, %v760
        %v762 = vrot.slane %v470, %v761
        %v763 = vlaneseq
        %v764 = vshrl.u32 %v763, 7
        %v765 = vsub.s32 1, %v764
        %v766 = vrot.slane %v470, %v765
        %v769 = vmul.f32 %v757, %v762
        %v770 = vmul.f32 %v754, %v766
        %v773 = vrot.slane %v769, 4
        %v774 = vrot.slane %v770, 4
        %777 = vst [vmem:[#allocation3 + $0xd0] sm:$0xf0] %v773
        %778 = vst [vmem:[#allocation3 + $0xd8] sm:$0xf0] %v774
        %779 = vrot.lane.b32.xlu0 %v505, 8
        %v780 = vpop.permute.xlu0 %779
        %781 = vrot.lane.b32.xlu0 %v506, 8
        %v782 = vpop.permute.xlu0 %781
        %vm783 = vcmask 64512
        %v784 = vsel %vm783, %v780, %v782
        %v787 = vsel %vm783, 0.0, %v780
        %v789 = vlaneseq
        %v790 = vshrl.u32 %v789, 7
        %v791 = vsub.s32 0, %v790
        %v792 = vrot.slane %v472, %v791
        %v793 = vlaneseq
        %v794 = vshrl.u32 %v793, 7
        %v795 = vsub.s32 1, %v794
        %v796 = vrot.slane %v472, %v795
        %v799 = vmul.f32 %v787, %v792
        %v800 = vmul.f32 %v784, %v796
        %801 = vst [vmem:[#allocation3 + $0xf0] sm:$0xf] %v799
        %802 = vst [vmem:[#allocation3 + $0xf8] sm:$0xf] %v800
        %803 = vrot.lane.b32.xlu0 %v505, 7
        %v804 = vpop.permute.xlu0 %803
        %805 = vrot.lane.b32.xlu0 %v506, 7
        %v806 = vpop.permute.xlu0 %805
        %vm807 = vcmask 56320
        %v808 = vsel %vm807, %v804, %v806
        %v811 = vsel %vm807, 0.0, %v804
        %v813 = vlaneseq
        %v814 = vshrl.u32 %v813, 7
        %v815 = vsub.s32 0, %v814
        %v816 = vrot.slane %v474, %v815
        %v817 = vlaneseq
        %v818 = vshrl.u32 %v817, 7
        %v819 = vsub.s32 1, %v818
        %v820 = vrot.slane %v474, %v819
        %v823 = vmul.f32 %v811, %v816
        %v824 = vmul.f32 %v808, %v820
        %v827 = vrot.slane %v823, 4
        %v828 = vrot.slane %v824, 4
        %831 = vst [vmem:[#allocation3 + $0x100] sm:$0xf0] %v827
        %832 = vst [vmem:[#allocation3 + $0x108] sm:$0xf0] %v828
        %833 = vrot.lane.b32.xlu0 %v505, 1
        %v834 = vpop.permute.xlu0 %833
        %835 = vrot.lane.b32.xlu0 %v506, 1
        %v836 = vpop.permute.xlu0 %835
        %vm837 = vcmask 7168
        %v838 = vsel %vm837, %v834, %v836
        %v841 = vsel %vm837, 0.0, %v834
        %v843 = vlaneseq
        %v844 = vshrl.u32 %v843, 7
        %v845 = vsub.s32 0, %v844
        %v846 = vrot.slane %v476, %v845
        %v847 = vlaneseq
        %v848 = vshrl.u32 %v847, 7
        %v849 = vsub.s32 1, %v848
        %v850 = vrot.slane %v476, %v849
        %v853 = vmul.f32 %v841, %v846
        %v854 = vmul.f32 %v838, %v850
        %855 = vst [vmem:[#allocation3 + $0x120] sm:$0xf] %v853
        %856 = vst [vmem:[#allocation3 + $0x128] sm:$0xf] %v854
        %v858 = vlaneseq
        %v859 = vshrl.u32 %v858, 7
        %v860 = vsub.s32 0, %v859
        %v861 = vrot.slane %v478, %v860
        %v862 = vlaneseq
        %v863 = vshrl.u32 %v862, 7
        %v864 = vsub.s32 1, %v863
        %v865 = vrot.slane %v478, %v864
        %v868 = vmul.f32 %v505, %v861
        %v869 = vmul.f32 %v506, %v865
        %v872 = vrot.slane %v868, 4
        %v873 = vrot.slane %v869, 4
        %876 = vst [vmem:[#allocation3 + $0x130] sm:$0xf0] %v872
        %877 = vst [vmem:[#allocation3 + $0x138] sm:$0xf0] %v873
        %878 = vrot.lane.b32.xlu0 %v505, 127
        %v879 = vpop.permute.xlu0 %878
        %880 = vrot.lane.b32.xlu0 %v506, 127
        %v881 = vpop.permute.xlu0 %880
        %vm882 = vcmask 1039360
        %v883 = vsel %vm882, %v879, %v881
        %v886 = vsel %vm882, %v881, 0.0
        %v888 = vlaneseq
        %v889 = vshrl.u32 %v888, 7
        %v890 = vsub.s32 0, %v889
        %v891 = vrot.slane %v480, %v890
        %v892 = vlaneseq
        %v893 = vshrl.u32 %v892, 7
        %v894 = vsub.s32 1, %v893
        %v895 = vrot.slane %v480, %v894
        %v898 = vmul.f32 %v883, %v891
        %v899 = vmul.f32 %v886, %v895
        %900 = vst [vmem:[#allocation3 + $0x150] sm:$0xf] %v898
        %901 = vst [vmem:[#allocation3 + $0x158] sm:$0xf] %v899
        %902 = vrot.lane.b32.xlu0 %v505, 121
        %v903 = vpop.permute.xlu0 %902
        %904 = vrot.lane.b32.xlu0 %v506, 121
        %v905 = vpop.permute.xlu0 %904
        %vm906 = vcmask 990208
        %v907 = vsel %vm906, %v903, %v905
        %v910 = vsel %vm906, %v905, 0.0
        %v912 = vlaneseq
        %v913 = vshrl.u32 %v912, 7
        %v914 = vsub.s32 0, %v913
        %v915 = vrot.slane %v482, %v914
        %v916 = vlaneseq
        %v917 = vshrl.u32 %v916, 7
        %v918 = vsub.s32 1, %v917
        %v919 = vrot.slane %v482, %v918
        %v922 = vmul.f32 %v907, %v915
        %v923 = vmul.f32 %v910, %v919
        %v926 = vrot.slane %v922, 4
        %v927 = vrot.slane %v923, 4
        %930 = vst [vmem:[#allocation3 + $0x160] sm:$0xf0] %v926
        %931 = vst [vmem:[#allocation3 + $0x168] sm:$0xf0] %v927
        %932 = vrot.lane.b32.xlu0 %v505, 120
        %v933 = vpop.permute.xlu0 %932
        %934 = vrot.lane.b32.xlu0 %v506, 120
        %v935 = vpop.permute.xlu0 %934
        %vm936 = vcmask 982016
        %v937 = vsel %vm936, %v933, %v935
        %v940 = vsel %vm936, %v935, 0.0
        %v942 = vlaneseq
        %v943 = vshrl.u32 %v942, 7
        %v944 = vsub.s32 0, %v943
        %v945 = vrot.slane %v484, %v944
        %v946 = vlaneseq
        %v947 = vshrl.u32 %v946, 7
        %v948 = vsub.s32 1, %v947
        %v949 = vrot.slane %v484, %v948
        %v952 = vmul.f32 %v937, %v945
        %v953 = vmul.f32 %v940, %v949
        %954 = vst [vmem:[#allocation3 + $0x180] sm:$0xf] %v952
        %955 = vst [vmem:[#allocation3 + $0x188] sm:$0xf] %v953
        %956 = vrot.lane.b32.xlu0 %v505, 119
        %v957 = vpop.permute.xlu0 %956
        %958 = vrot.lane.b32.xlu0 %v506, 119
        %v959 = vpop.permute.xlu0 %958
        %vm960 = vcmask 973824
        %v961 = vsel %vm960, %v957, %v959
        %v964 = vsel %vm960, %v959, 0.0
        %v966 = vlaneseq
        %v967 = vshrl.u32 %v966, 7
        %v968 = vsub.s32 0, %v967
        %v969 = vrot.slane %v486, %v968
        %v970 = vlaneseq
        %v971 = vshrl.u32 %v970, 7
        %v972 = vsub.s32 1, %v971
        %v973 = vrot.slane %v486, %v972
        %v976 = vmul.f32 %v961, %v969
        %v977 = vmul.f32 %v964, %v973
        %v980 = vrot.slane %v976, 4
        %v981 = vrot.slane %v977, 4
        %984 = vst [vmem:[#allocation3 + $0x190] sm:$0xf0] %v980
        %985 = vst [vmem:[#allocation3 + $0x198] sm:$0xf0] %v981
        %v987 = vsel %vm513, %v512, 0.0
        %v989 = vlaneseq
        %v990 = vshrl.u32 %v989, 7
        %v991 = vsub.s32 0, %v990
        %v992 = vrot.slane %v488, %v991
        %v993 = vlaneseq
        %v994 = vshrl.u32 %v993, 7
        %v995 = vsub.s32 1, %v994
        %v996 = vrot.slane %v488, %v995
        %v999 = vmul.f32 %v514, %v992
        %v1000 = vmul.f32 %v987, %v996
        %1001 = vst [vmem:[#allocation3 + $0x1b0] sm:$0xf] %v999
        %1002 = vst [vmem:[#allocation3 + $0x1b8] sm:$0xf] %v1000
        %v1004 = vsel %vm537, %v536, 0.0
        %v1006 = vlaneseq
        %v1007 = vshrl.u32 %v1006, 7
        %v1008 = vsub.s32 0, %v1007
        %v1009 = vrot.slane %v490, %v1008
        %v1010 = vlaneseq
        %v1011 = vshrl.u32 %v1010, 7
        %v1012 = vsub.s32 1, %v1011
        %v1013 = vrot.slane %v490, %v1012
        %v1016 = vmul.f32 %v538, %v1009
        %v1017 = vmul.f32 %v1004, %v1013
        %v1020 = vrot.slane %v1016, 4
        %v1021 = vrot.slane %v1017, 4
        %1024 = vst [vmem:[#allocation3 + $0x1c0] sm:$0xf0] %v1020
        %1025 = vst [vmem:[#allocation3 + $0x1c8] sm:$0xf0] %v1021
        %v1027 = vsel %vm567, %v566, 0.0
        %v1029 = vlaneseq
        %v1030 = vshrl.u32 %v1029, 7
        %v1031 = vsub.s32 0, %v1030
        %v1032 = vrot.slane %v492, %v1031
        %v1033 = vlaneseq
        %v1034 = vshrl.u32 %v1033, 7
        %v1035 = vsub.s32 1, %v1034
        %v1036 = vrot.slane %v492, %v1035
        %v1039 = vmul.f32 %v568, %v1032
        %v1040 = vmul.f32 %v1027, %v1036
        %1041 = vst [vmem:[#allocation3 + $0x1e0] sm:$0xf] %v1039
        %1042 = vst [vmem:[#allocation3 + $0x1e8] sm:$0xf] %v1040
        %v1044 = vsel %vm591, %v590, 0.0
        %v1046 = vlaneseq
        %v1047 = vshrl.u32 %v1046, 7
        %v1048 = vsub.s32 0, %v1047
        %v1049 = vrot.slane %v494, %v1048
        %v1050 = vlaneseq
        %v1051 = vshrl.u32 %v1050, 7
        %v1052 = vsub.s32 1, %v1051
        %v1053 = vrot.slane %v494, %v1052
        %v1056 = vmul.f32 %v592, %v1049
        %v1057 = vmul.f32 %v1044, %v1053
        %v1060 = vrot.slane %v1056, 4
        %v1061 = vrot.slane %v1057, 4
        %1064 = vst [vmem:[#allocation3 + $0x1f0] sm:$0xf0] %v1060
        %1065 = vst [vmem:[#allocation3 + $0x1f8] sm:$0xf0] %v1061
        %v1067 = vsel %vm621, %v620, 0.0
        %v1069 = vlaneseq
        %v1070 = vshrl.u32 %v1069, 7
        %v1071 = vsub.s32 0, %v1070
        %v1072 = vrot.slane %v496, %v1071
        %v1073 = vlaneseq
        %v1074 = vshrl.u32 %v1073, 7
        %v1075 = vsub.s32 1, %v1074
        %v1076 = vrot.slane %v496, %v1075
        %v1079 = vmul.f32 %v622, %v1072
        %v1080 = vmul.f32 %v1067, %v1076
        %1081 = vst [vmem:[#allocation3 + $0x210] sm:$0xf] %v1079
        %1082 = vst [vmem:[#allocation3 + $0x218] sm:$0xf] %v1080
        %v1084 = vsel %vm645, %v644, 0.0
        %v1086 = vlaneseq
        %v1087 = vshrl.u32 %v1086, 7
        %v1088 = vsub.s32 0, %v1087
        %v1089 = vrot.slane %v498, %v1088
        %v1090 = vlaneseq
        %v1091 = vshrl.u32 %v1090, 7
        %v1092 = vsub.s32 1, %v1091
        %v1093 = vrot.slane %v498, %v1092
        %v1096 = vmul.f32 %v646, %v1089
        %v1097 = vmul.f32 %v1084, %v1093
        %v1100 = vrot.slane %v1096, 4
        %v1101 = vrot.slane %v1097, 4
        %1104 = vst [vmem:[#allocation3 + $0x220] sm:$0xf0] %v1100
        %1105 = vst [vmem:[#allocation3 + $0x228] sm:$0xf0] %v1101
        %v1107 = vsel %vm675, %v674, 0.0
        %v1109 = vlaneseq
        %v1110 = vshrl.u32 %v1109, 7
        %v1111 = vsub.s32 0, %v1110
        %v1112 = vrot.slane %v500, %v1111
        %v1113 = vlaneseq
        %v1114 = vshrl.u32 %v1113, 7
        %v1115 = vsub.s32 1, %v1114
        %v1116 = vrot.slane %v500, %v1115
        %v1119 = vmul.f32 %v676, %v1112
        %v1120 = vmul.f32 %v1107, %v1116
        %1121 = vst [vmem:[#allocation3 + $0x240] sm:$0xf] %v1119
        %1122 = vst [vmem:[#allocation3 + $0x248] sm:$0xf] %v1120
        %v1124 = vsel %vm699, %v698, 0.0
        %v1126 = vlaneseq
        %v1127 = vshrl.u32 %v1126, 7
        %v1128 = vsub.s32 0, %v1127
        %v1129 = vrot.slane %v502, %v1128
        %v1130 = vlaneseq
        %v1131 = vshrl.u32 %v1130, 7
        %v1132 = vsub.s32 1, %v1131
        %v1133 = vrot.slane %v502, %v1132
        %v1136 = vmul.f32 %v700, %v1129
        %v1137 = vmul.f32 %v1124, %v1133
        %v1140 = vrot.slane %v1136, 4
        %v1141 = vrot.slane %v1137, 4
        %1144 = vst [vmem:[#allocation3 + $0x250] sm:$0xf0] %v1140
        %1145 = vst [vmem:[#allocation3 + $0x258] sm:$0xf0] %v1141
        %v1147 = vsel %vm729, %v728, 0.0
        %v1149 = vlaneseq
        %v1150 = vshrl.u32 %v1149, 7
        %v1151 = vsub.s32 0, %v1150
        %v1152 = vrot.slane %v504, %v1151
        %v1153 = vlaneseq
        %v1154 = vshrl.u32 %v1153, 7
        %v1155 = vsub.s32 1, %v1154
        %v1156 = vrot.slane %v504, %v1155
        %v1159 = vmul.f32 %v730, %v1152
        %v1160 = vmul.f32 %v1147, %v1156
        %1161 = vst [vmem:[#allocation3 + $0x270] sm:$0xf] %v1159
        %1162 = vst [vmem:[#allocation3 + $0x278] sm:$0xf] %v1160
        %v1163 = vld [vmem:[%s2] sm:$0xff]
        %v1164 = vld [vmem:[%s2 + $0x8] sm:$0xf]
        %v1165 = vld [vmem:[#allocation3] sm:$0xff]
        %v1166 = vld [vmem:[#allocation3 + $0x8] sm:$0xff]
        %v1167 = vld [vmem:[#allocation3 + $0x10] sm:$0xff]
        %v1168 = vld [vmem:[#allocation3 + $0x18] sm:$0xff]
        %v1169 = vld [vmem:[#allocation3 + $0x20] sm:$0xff]
        %v1170 = vld [vmem:[#allocation3 + $0x28] sm:$0xff]
        %v1171 = vld [vmem:[#allocation3 + $0x30] sm:$0xff]
        %v1172 = vld [vmem:[#allocation3 + $0x38] sm:$0xff]
        %v1173 = vld [vmem:[#allocation3 + $0x40] sm:$0xff]
        %v1174 = vld [vmem:[#allocation3 + $0x48] sm:$0xff]
        %v1175 = vld [vmem:[#allocation3 + $0x50] sm:$0xff]
        %v1176 = vld [vmem:[#allocation3 + $0x58] sm:$0xff]
        %v1177 = vld [vmem:[#allocation3 + $0x60] sm:$0xff]
        %v1178 = vld [vmem:[#allocation3 + $0x68] sm:$0xff]
        %v1179 = vld [vmem:[#allocation3 + $0x70] sm:$0xff]
        %v1180 = vld [vmem:[#allocation3 + $0x78] sm:$0xff]
        %v1181 = vld [vmem:[#allocation3 + $0x80] sm:$0xff]
        %v1182 = vld [vmem:[#allocation3 + $0x88] sm:$0xff]
        %v1183 = vld [vmem:[#allocation3 + $0x90] sm:$0xff]
        %v1184 = vld [vmem:[#allocation3 + $0x98] sm:$0xff]
        %v1185 = vld [vmem:[#allocation3 + $0xa0] sm:$0xff]
        %v1186 = vld [vmem:[#allocation3 + $0xa8] sm:$0xff]
        %v1187 = vld [vmem:[#allocation3 + $0xb0] sm:$0xff]
        %v1188 = vld [vmem:[#allocation3 + $0xb8] sm:$0xff]
        %v1189 = vld [vmem:[#allocation3 + $0xc0] sm:$0xff]
        %v1190 = vld [vmem:[#allocation3 + $0xc8] sm:$0xff]
        %v1191 = vld [vmem:[#allocation3 + $0xd0] sm:$0xff]
        %v1192 = vld [vmem:[#allocation3 + $0xd8] sm:$0xff]
        %v1193 = vld [vmem:[#allocation3 + $0xe0] sm:$0xff]
        %v1194 = vld [vmem:[#allocation3 + $0xe8] sm:$0xff]
        %v1195 = vld [vmem:[#allocation3 + $0xf0] sm:$0xff]
        %v1196 = vld [vmem:[#allocation3 + $0xf8] sm:$0xff]
        %v1197 = vld [vmem:[#allocation3 + $0x100] sm:$0xff]
        %v1198 = vld [vmem:[#allocation3 + $0x108] sm:$0xff]
        %v1199 = vld [vmem:[#allocation3 + $0x110] sm:$0xff]
        %v1200 = vld [vmem:[#allocation3 + $0x118] sm:$0xff]
        %v1201 = vld [vmem:[#allocation3 + $0x120] sm:$0xff]
        %v1202 = vld [vmem:[#allocation3 + $0x128] sm:$0xff]
        %v1203 = vld [vmem:[#allocation3 + $0x130] sm:$0xff]
        %v1204 = vld [vmem:[#allocation3 + $0x138] sm:$0xff]
        %v1205 = vld [vmem:[#allocation3 + $0x140] sm:$0xff]
        %v1206 = vld [vmem:[#allocation3 + $0x148] sm:$0xff]
        %v1207 = vld [vmem:[#allocation3 + $0x150] sm:$0xff]
        %v1208 = vld [vmem:[#allocation3 + $0x158] sm:$0xff]
        %v1209 = vld [vmem:[#allocation3 + $0x160] sm:$0xff]
        %v1210 = vld [vmem:[#allocation3 + $0x168] sm:$0xff]
        %v1211 = vld [vmem:[#allocation3 + $0x170] sm:$0xff]
        %v1212 = vld [vmem:[#allocation3 + $0x178] sm:$0xff]
        %v1213 = vld [vmem:[#allocation3 + $0x180] sm:$0xff]
        %v1214 = vld [vmem:[#allocation3 + $0x188] sm:$0xff]
        %v1215 = vld [vmem:[#allocation3 + $0x190] sm:$0xff]
        %v1216 = vld [vmem:[#allocation3 + $0x198] sm:$0xff]
        %v1217 = vld [vmem:[#allocation3 + $0x1a0] sm:$0xff]
        %v1218 = vld [vmem:[#allocation3 + $0x1a8] sm:$0xff]
        %v1219 = vld [vmem:[#allocation3 + $0x1b0] sm:$0xff]
        %v1220 = vld [vmem:[#allocation3 + $0x1b8] sm:$0xff]
        %v1221 = vld [vmem:[#allocation3 + $0x1c0] sm:$0xff]
        %v1222 = vld [vmem:[#allocation3 + $0x1c8] sm:$0xff]
        %v1223 = vld [vmem:[#allocation3 + $0x1d0] sm:$0xff]
        %v1224 = vld [vmem:[#allocation3 + $0x1d8] sm:$0xff]
        %v1225 = vld [vmem:[#allocation3 + $0x1e0] sm:$0xff]
        %v1226 = vld [vmem:[#allocation3 + $0x1e8] sm:$0xff]
        %v1227 = vld [vmem:[#allocation3 + $0x1f0] sm:$0xff]
        %v1228 = vld [vmem:[#allocation3 + $0x1f8] sm:$0xff]
        %v1229 = vld [vmem:[#allocation3 + $0x200] sm:$0xff]
        %v1230 = vld [vmem:[#allocation3 + $0x208] sm:$0xff]
        %v1231 = vld [vmem:[#allocation3 + $0x210] sm:$0xff]
        %v1232 = vld [vmem:[#allocation3 + $0x218] sm:$0xff]
        %v1233 = vld [vmem:[#allocation3 + $0x220] sm:$0xff]
        %v1234 = vld [vmem:[#allocation3 + $0x228] sm:$0xff]
        %v1235 = vld [vmem:[#allocation3 + $0x230] sm:$0xff]
        %v1236 = vld [vmem:[#allocation3 + $0x238] sm:$0xff]
        %v1237 = vld [vmem:[#allocation3 + $0x240] sm:$0xff]
        %v1238 = vld [vmem:[#allocation3 + $0x248] sm:$0xff]
        %v1239 = vld [vmem:[#allocation3 + $0x250] sm:$0xff]
        %v1240 = vld [vmem:[#allocation3 + $0x258] sm:$0xff]
        %v1241 = vld [vmem:[#allocation3 + $0x260] sm:$0xff]
        %v1242 = vld [vmem:[#allocation3 + $0x268] sm:$0xff]
        %v1243 = vld [vmem:[#allocation3 + $0x270] sm:$0xff]
        %v1244 = vld [vmem:[#allocation3 + $0x278] sm:$0xff]
        %v1245 = vld [vmem:[#allocation3 + $0x280] sm:$0xf]
        %v1246 = vld [vmem:[#allocation3 + $0x288] sm:$0xf]
        %v1247 = vld [vmem:[%s3] sm:$0xf]
        %1249 = vset.pattern.permute.xlu0 0
        %1250 = vperm.xlu0 %1249, %v1247
        %v1251 = vpop.permute.xlu0 %1250
        %v1255 = vcombine.high %v1163, %v1163
        %vm1257 = vcmask 556032
        %v1258 = vsel %vm1257, %v1164, 0
        %vm1260 = vcmask 1043456
        %v1262 = vsel %vm1260, %v1245, 0
        %v1265 = vsel %vm1260, %v1246, 0
        %1267 = vmatprep.subr.mxu0 %v1166
        %1268 = vmatpush1.msra.mxu0 %v1165
        %1269 = vmatprep.subr.mxu0 %v1168
        %1270 = vmatpush1.msra.mxu0 %v1167
        %1271 = vmatprep.subr.mxu0 %v1170
        %1272 = vmatpush1.msra.mxu0 %v1169
        %1273 = vmatprep.subr.mxu0 %v1172
        %1274 = vmatpush1.msra.mxu0 %v1171
        %1275 = vmatprep.subr.mxu0 %v1174
        %1276 = vmatpush1.msra.mxu0 %v1173
        %1277 = vmatprep.subr.mxu0 %v1176
        %1278 = vmatpush1.msra.mxu0 %v1175
        %1279 = vmatprep.subr.mxu0 %v1178
        %1280 = vmatpush1.msra.mxu0 %v1177
        %1281 = vmatprep.subr.mxu0 %v1180
        %1282 = vmatpush1.msra.mxu0 %v1179
        %1283 = vmatprep.subr.mxu0 %v1182
        %1284 = vmatpush1.msra.mxu0 %v1181
        %1285 = vmatprep.subr.mxu0 %v1184
        %1286 = vmatpush1.msra.mxu0 %v1183
        %1287 = vmatprep.subr.mxu0 %v1186
        %1288 = vmatpush1.msra.mxu0 %v1185
        %1289 = vmatprep.subr.mxu0 %v1188
        %1290 = vmatpush1.msra.mxu0 %v1187
        %1291 = vmatprep.subr.mxu0 %v1190
        %1292 = vmatpush1.msra.mxu0 %v1189
        %1293 = vmatprep.subr.mxu0 %v1192
        %1294 = vmatpush1.msra.mxu0 %v1191
        %1295 = vmatprep.subr.mxu0 %v1194
        %1296 = vmatpush1.msra.mxu0 %v1193
        %1297 = vmatprep.subr.mxu0 %v1196
        %1298 = vmatpush1.msra.mxu0 %v1195
        %1299 = vmatprep.subr.mxu0 %v1198
        %1300 = vmatpush1.msra.mxu0 %v1197
        %1301 = vmatprep.subr.mxu0 %v1200
        %1302 = vmatpush1.msra.mxu0 %v1199
        %1303 = vmatprep.subr.mxu0 %v1202
        %1304 = vmatpush1.msra.mxu0 %v1201
        %1305 = vmatprep.subr.mxu0 %v1204
        %1306 = vmatpush1.msra.mxu0 %v1203
        %1307 = vmatprep.subr.mxu0 %v1206
        %1308 = vmatpush1.msra.mxu0 %v1205
        %1309 = vmatprep.subr.mxu0 %v1208
        %1310 = vmatpush1.msra.mxu0 %v1207
        %1311 = vmatprep.subr.mxu0 %v1210
        %1312 = vmatpush1.msra.mxu0 %v1209
        %1313 = vmatprep.subr.mxu0 %v1212
        %1314 = vmatpush1.msra.mxu0 %v1211
        %1315 = vmatprep.subr.mxu0 %v1214
        %1316 = vmatpush1.msra.mxu0 %v1213
        %1317 = vmatprep.subr.mxu0 %v1216
        %1318 = vmatpush1.msra.mxu0 %v1215
        %1319 = vmatprep.subr.mxu0 %v1218
        %1320 = vmatpush1.msra.mxu0 %v1217
        %1321 = vmatprep.subr.mxu0 %v1220
        %1322 = vmatpush1.msra.mxu0 %v1219
        %1323 = vmatprep.subr.mxu0 %v1222
        %1324 = vmatpush1.msra.mxu0 %v1221
        %1325 = vmatprep.subr.mxu0 %v1224
        %1326 = vmatpush1.msra.mxu0 %v1223
        %1327 = vmatprep.subr.mxu0 %v1226
        %1328 = vmatpush1.msra.mxu0 %v1225
        %1329 = vmatprep.subr.mxu0 %v1228
        %1330 = vmatpush1.msra.mxu0 %v1227
        %1331 = vmatprep.mubr.f32.mxu0 %v1255
        %1332 = vmatmul.mubr.f32.gmra.mrb[0].mxu0 %v1163
        %v1333 = vpop.f32.mrb[0].mxu0
        %v1334 = vadd.f32 %v1251, %v1333
        %v1335 = vpop.f32.mrb[0].mxu0
        %v1336 = vadd.f32 %v1251, %v1335
        %1337 = vdwg.mxu0
        %1338 = vmatprep.subr.mxu0 %v1230
        %1339 = vmatpush1.msra.mxu0 %v1229
        %1340 = vmatprep.subr.mxu0 %v1232
        %1341 = vmatpush1.msra.mxu0 %v1231
        %1342 = vmatprep.subr.mxu0 %v1234
        %1343 = vmatpush1.msra.mxu0 %v1233
        %1344 = vmatprep.subr.mxu0 %v1236
        %1345 = vmatpush1.msra.mxu0 %v1235
        %1346 = vmatprep.subr.mxu0 %v1238
        %1347 = vmatpush1.msra.mxu0 %v1237
        %1348 = vmatprep.subr.mxu0 %v1240
        %1349 = vmatpush1.msra.mxu0 %v1239
        %1350 = vmatprep.subr.mxu0 %v1242
        %1351 = vmatpush1.msra.mxu0 %v1241
        %1352 = vmatprep.subr.mxu0 %v1244
        %1353 = vmatpush1.msra.mxu0 %v1243
        %1354 = vmatprep.subr.mxu0 %v1265
        %1355 = vmatpush1.msra.mxu0 %v1262
        %1356 = vmatprep.subr.mxu0 0.0
        %1357 = vmatpush1.msra.mxu0 0.0
        %1358 = vmatprep.subr.mxu0 0.0
        %1359 = vmatpush1.msra.mxu0 0.0
        %1360 = vmatprep.subr.mxu0 0.0
        %1361 = vmatpush1.msra.mxu0 0.0
        %1362 = vmatprep.subr.mxu0 0.0
        %1363 = vmatpush1.msra.mxu0 0.0
        %1364 = vmatprep.subr.mxu0 0.0
        %1365 = vmatpush1.msra.mxu0 0.0
        %1366 = vmatprep.subr.mxu0 0.0
        %1367 = vmatpush1.msra.mxu0 0.0
        %1368 = vmatprep.subr.mxu0 0.0
        %1369 = vmatpush1.msra.mxu0 0.0
        %1370 = vmatprep.subr.mxu0 0.0
        %1371 = vmatpush1.msra.mxu0 0.0
        %1372 = vmatprep.subr.mxu0 0.0
        %1373 = vmatpush1.msra.mxu0 0.0
        %1374 = vmatprep.subr.mxu0 0.0
        %1375 = vmatpush1.msra.mxu0 0.0
        %1376 = vmatprep.subr.mxu0 0.0
        %1377 = vmatpush1.msra.mxu0 0.0
        %1378 = vmatprep.subr.mxu0 0.0
        %1379 = vmatpush1.msra.mxu0 0.0
        %1380 = vmatprep.subr.mxu0 0.0
        %1381 = vmatpush1.msra.mxu0 0.0
        %1382 = vmatprep.subr.mxu0 0.0
        %1383 = vmatpush1.msra.mxu0 0.0
        %1384 = vmatprep.subr.mxu0 0.0
        %1385 = vmatpush1.msra.mxu0 0.0
        %1386 = vmatprep.subr.mxu0 0.0
        %1387 = vmatpush1.msra.mxu0 0.0
        %1388 = vmatprep.subr.mxu0 0.0
        %1389 = vmatpush1.msra.mxu0 0.0
        %1390 = vmatprep.subr.mxu0 0.0
        %1391 = vmatpush1.msra.mxu0 0.0
        %1392 = vmatprep.subr.mxu0 0.0
        %1393 = vmatpush1.msra.mxu0 0.0
        %1394 = vmatprep.subr.mxu0 0.0
        %1395 = vmatpush1.msra.mxu0 0.0
        %1396 = vmatprep.subr.mxu0 0.0
        %1397 = vmatpush1.msra.mxu0 0.0
        %1398 = vmatprep.subr.mxu0 0.0
        %1399 = vmatpush1.msra.mxu0 0.0
        %1400 = vmatprep.subr.mxu0 0.0
        %1401 = vmatpush1.msra.mxu0 0.0
        %1402 = vmatprep.mubr.f32.mxu0 0.0
        %1403 = vmatmul.mubr.f32.gmra.mrb[0].mxu0 %v1258
        %v1404 = vpop.f32.mrb[0].mxu0
        %v1405 = vadd.f32 %v1334, %v1404
        %v1406 = vpop.f32.mrb[0].mxu0
        %v1407 = vadd.f32 %v1336, %v1406
        %1408 = vdwg.mxu0
        %v1409 = vmax.f32 %v1405, 0.0
        %v1410 = vmax.f32 %v1407, 0.0
        %v1413 = vrot.slane %v1409, 4
        %v1414 = vrot.slane %v1410, 4
        %1417 = vst [vmem:[#allocation2] sm:$0xf0] %v1413
        %1418 = vst [vmem:[#allocation2 + $0x8] sm:$0xf0] %v1414
        %v1419 = vld [vmem:[#allocation2] sm:$0xf0]
        %v1420 = vld [vmem:[#allocation2 + $0x8] sm:$0xf0]
        %v1423 = vrot.slane %v1419, 4
        %v1424 = vrot.slane %v1420, 4
        %1425 = vrot.lane.b32.xlu0 %v1423, 73
        %v1426 = vpop.permute.xlu0 %1425
        %1427 = vrot.lane.b32.xlu0 %v1424, 73
        %v1428 = vpop.permute.xlu0 %1427
        %v1429 = vsel %vm513, %v1426, %v1428
        %v1432 = vsel %vm513, 0.0, %v1426
        %v1433 = vmul.f32 %v1432, %v522
        %v1434 = vmul.f32 %v1429, %v526
        %v1437 = vrot.slane %v1433, 4
        %v1438 = vrot.slane %v1434, 4
        %1441 = vst [vmem:[#allocation3] sm:$0xf0] %v1437
        %1442 = vst [vmem:[#allocation3 + $0x8] sm:$0xf0] %v1438
        %1443 = vrot.lane.b32.xlu0 %v1423, 72
        %v1444 = vpop.permute.xlu0 %1443
        %1445 = vrot.lane.b32.xlu0 %v1424, 72
        %v1446 = vpop.permute.xlu0 %1445
        %v1447 = vsel %vm537, %v1444, %v1446
        %v1450 = vsel %vm537, 0.0, %v1444
        %v1451 = vmul.f32 %v1450, %v546
        %v1452 = vmul.f32 %v1447, %v550
        %1453 = vst [vmem:[#allocation3 + $0x20] sm:$0xf] %v1451
        %1454 = vst [vmem:[#allocation3 + $0x28] sm:$0xf] %v1452
        %1455 = vrot.lane.b32.xlu0 %v1423, 71
        %v1456 = vpop.permute.xlu0 %1455
        %1457 = vrot.lane.b32.xlu0 %v1424, 71
        %v1458 = vpop.permute.xlu0 %1457
        %v1459 = vsel %vm567, %v1456, %v1458
        %v1462 = vsel %vm567, 0.0, %v1456
        %v1463 = vmul.f32 %v1462, %v576
        %v1464 = vmul.f32 %v1459, %v580
        %v1467 = vrot.slane %v1463, 4
        %v1468 = vrot.slane %v1464, 4
        %1471 = vst [vmem:[#allocation3 + $0x30] sm:$0xf0] %v1467
        %1472 = vst [vmem:[#allocation3 + $0x38] sm:$0xf0] %v1468
        %1473 = vrot.lane.b32.xlu0 %v1423, 65
        %v1474 = vpop.permute.xlu0 %1473
        %1475 = vrot.lane.b32.xlu0 %v1424, 65
        %v1476 = vpop.permute.xlu0 %1475
        %v1477 = vsel %vm591, %v1474, %v1476
        %v1480 = vsel %vm591, 0.0, %v1474
        %v1481 = vmul.f32 %v1480, %v600
        %v1482 = vmul.f32 %v1477, %v604
        %1483 = vst [vmem:[#allocation3 + $0x50] sm:$0xf] %v1481
        %1484 = vst [vmem:[#allocation3 + $0x58] sm:$0xf] %v1482
        %1485 = vrot.lane.b32.xlu0 %v1423, 64
        %v1486 = vpop.permute.xlu0 %1485
        %1487 = vrot.lane.b32.xlu0 %v1424, 64
        %v1488 = vpop.permute.xlu0 %1487
        %v1489 = vsel %vm621, %v1486, %v1488
        %v1492 = vsel %vm621, 0.0, %v1486
        %v1493 = vmul.f32 %v1492, %v630
        %v1494 = vmul.f32 %v1489, %v634
        %v1497 = vrot.slane %v1493, 4
        %v1498 = vrot.slane %v1494, 4
        %1501 = vst [vmem:[#allocation3 + $0x60] sm:$0xf0] %v1497
        %1502 = vst [vmem:[#allocation3 + $0x68] sm:$0xf0] %v1498
        %1503 = vrot.lane.b32.xlu0 %v1423, 63
        %v1504 = vpop.permute.xlu0 %1503
        %1505 = vrot.lane.b32.xlu0 %v1424, 63
        %v1506 = vpop.permute.xlu0 %1505
        %v1507 = vsel %vm645, %v1504, %v1506
        %v1510 = vsel %vm645, 0.0, %v1504
        %v1511 = vmul.f32 %v1510, %v654
        %v1512 = vmul.f32 %v1507, %v658
        %1513 = vst [vmem:[#allocation3 + $0x80] sm:$0xf] %v1511
        %1514 = vst [vmem:[#allocation3 + $0x88] sm:$0xf] %v1512
        %1515 = vrot.lane.b32.xlu0 %v1423, 57
        %v1516 = vpop.permute.xlu0 %1515
        %1517 = vrot.lane.b32.xlu0 %v1424, 57
        %v1518 = vpop.permute.xlu0 %1517
        %v1519 = vsel %vm675, %v1516, %v1518
        %v1522 = vsel %vm675, 0.0, %v1516
        %v1523 = vmul.f32 %v1522, %v684
        %v1524 = vmul.f32 %v1519, %v688
        %v1527 = vrot.slane %v1523, 4
        %v1528 = vrot.slane %v1524, 4
        %1531 = vst [vmem:[#allocation3 + $0x90] sm:$0xf0] %v1527
        %1532 = vst [vmem:[#allocation3 + $0x98] sm:$0xf0] %v1528
        %1533 = vrot.lane.b32.xlu0 %v1423, 56
        %v1534 = vpop.permute.xlu0 %1533
        %1535 = vrot.lane.b32.xlu0 %v1424, 56
        %v1536 = vpop.permute.xlu0 %1535
        %v1537 = vsel %vm699, %v1534, %v1536
        %v1540 = vsel %vm699, 0.0, %v1534
        %v1541 = vmul.f32 %v1540, %v708
        %v1542 = vmul.f32 %v1537, %v712
        %1543 = vst [vmem:[#allocation3 + $0xb0] sm:$0xf] %v1541
        %1544 = vst [vmem:[#allocation3 + $0xb8] sm:$0xf] %v1542
        %1545 = vrot.lane.b32.xlu0 %v1423, 55
        %v1546 = vpop.permute.xlu0 %1545
        %1547 = vrot.lane.b32.xlu0 %v1424, 55
        %v1548 = vpop.permute.xlu0 %1547
        %v1549 = vsel %vm729, %v1546, %v1548
        %v1552 = vsel %vm729, 0.0, %v1546
        %v1553 = vmul.f32 %v1552, %v738
        %v1554 = vmul.f32 %v1549, %v742
        %v1557 = vrot.slane %v1553, 4
        %v1558 = vrot.slane %v1554, 4
        %1561 = vst [vmem:[#allocation3 + $0xc0] sm:$0xf0] %v1557
        %1562 = vst [vmem:[#allocation3 + $0xc8] sm:$0xf0] %v1558
        %1563 = vrot.lane.b32.xlu0 %v1423, 9
        %v1564 = vpop.permute.xlu0 %1563
        %1565 = vrot.lane.b32.xlu0 %v1424, 9
        %v1566 = vpop.permute.xlu0 %1565
        %v1567 = vsel %vm753, %v1564, %v1566
        %v1570 = vsel %vm753, 0.0, %v1564
        %v1571 = vmul.f32 %v1570, %v762
        %v1572 = vmul.f32 %v1567, %v766
        %1573 = vst [vmem:[#allocation3 + $0xe0] sm:$0xf] %v1571
        %1574 = vst [vmem:[#allocation3 + $0xe8] sm:$0xf] %v1572
        %1575 = vrot.lane.b32.xlu0 %v1423, 8
        %v1576 = vpop.permute.xlu0 %1575
        %1577 = vrot.lane.b32.xlu0 %v1424, 8
        %v1578 = vpop.permute.xlu0 %1577
        %v1579 = vsel %vm783, %v1576, %v1578
        %v1582 = vsel %vm783, 0.0, %v1576
        %v1583 = vmul.f32 %v1582, %v792
        %v1584 = vmul.f32 %v1579, %v796
        %v1587 = vrot.slane %v1583, 4
        %v1588 = vrot.slane %v1584, 4
        %1591 = vst [vmem:[#allocation3 + $0xf0] sm:$0xf0] %v1587
        %1592 = vst [vmem:[#allocation3 + $0xf8] sm:$0xf0] %v1588
        %1593 = vrot.lane.b32.xlu0 %v1423, 7
        %v1594 = vpop.permute.xlu0 %1593
        %1595 = vrot.lane.b32.xlu0 %v1424, 7
        %v1596 = vpop.permute.xlu0 %1595
        %v1597 = vsel %vm807, %v1594, %v1596
        %v1600 = vsel %vm807, 0.0, %v1594
        %v1601 = vmul.f32 %v1600, %v816
        %v1602 = vmul.f32 %v1597, %v820
        %1603 = vst [vmem:[#allocation3 + $0x110] sm:$0xf] %v1601
        %1604 = vst [vmem:[#allocation3 + $0x118] sm:$0xf] %v1602
        %1605 = vrot.lane.b32.xlu0 %v1423, 1
        %v1606 = vpop.permute.xlu0 %1605
        %1607 = vrot.lane.b32.xlu0 %v1424, 1
        %v1608 = vpop.permute.xlu0 %1607
        %v1609 = vsel %vm837, %v1606, %v1608
        %v1612 = vsel %vm837, 0.0, %v1606
        %v1613 = vmul.f32 %v1612, %v846
        %v1614 = vmul.f32 %v1609, %v850
        %v1617 = vrot.slane %v1613, 4
        %v1618 = vrot.slane %v1614, 4
        %1621 = vst [vmem:[#allocation3 + $0x120] sm:$0xf0] %v1617
        %1622 = vst [vmem:[#allocation3 + $0x128] sm:$0xf0] %v1618
        %v1623 = vmul.f32 %v1419, %v861
        %v1624 = vmul.f32 %v1420, %v865
        %v1627 = vrot.slane %v1623, 4
        %v1628 = vrot.slane %v1624, 4
        %1631 = vst [vmem:[#allocation3 + $0x140] sm:$0xf] %v1627
        %1632 = vst [vmem:[#allocation3 + $0x148] sm:$0xf] %v1628
        %1633 = vrot.lane.b32.xlu0 %v1419, 127
        %v1634 = vpop.permute.xlu0 %1633
        %1635 = vrot.lane.b32.xlu0 %v1420, 127
        %v1636 = vpop.permute.xlu0 %1635
        %v1637 = vsel %vm882, %v1634, %v1636
        %v1640 = vsel %vm882, %v1636, 0.0
        %v1641 = vmul.f32 %v1637, %v891
        %v1642 = vmul.f32 %v1640, %v895
        %1643 = vst [vmem:[#allocation3 + $0x150] sm:$0xf0] %v1641
        %1644 = vst [vmem:[#allocation3 + $0x158] sm:$0xf0] %v1642
        %1645 = vrot.lane.b32.xlu0 %v1419, 121
        %v1646 = vpop.permute.xlu0 %1645
        %1647 = vrot.lane.b32.xlu0 %v1420, 121
        %v1648 = vpop.permute.xlu0 %1647
        %v1649 = vsel %vm906, %v1646, %v1648
        %v1652 = vsel %vm906, %v1648, 0.0
        %v1653 = vmul.f32 %v1649, %v915
        %v1654 = vmul.f32 %v1652, %v919
        %v1657 = vrot.slane %v1653, 4
        %v1658 = vrot.slane %v1654, 4
        %1661 = vst [vmem:[#allocation3 + $0x170] sm:$0xf] %v1657
        %1662 = vst [vmem:[#allocation3 + $0x178] sm:$0xf] %v1658
        %1663 = vrot.lane.b32.xlu0 %v1419, 120
        %v1664 = vpop.permute.xlu0 %1663
        %1665 = vrot.lane.b32.xlu0 %v1420, 120
        %v1666 = vpop.permute.xlu0 %1665
        %v1667 = vsel %vm936, %v1664, %v1666
        %v1670 = vsel %vm936, %v1666, 0.0
        %v1671 = vmul.f32 %v1667, %v945
        %v1672 = vmul.f32 %v1670, %v949
        %1673 = vst [vmem:[#allocation3 + $0x180] sm:$0xf0] %v1671
        %1674 = vst [vmem:[#allocation3 + $0x188] sm:$0xf0] %v1672
        %1675 = vrot.lane.b32.xlu0 %v1419, 119
        %v1676 = vpop.permute.xlu0 %1675
        %1677 = vrot.lane.b32.xlu0 %v1420, 119
        %v1678 = vpop.permute.xlu0 %1677
        %v1679 = vsel %vm960, %v1676, %v1678
        %v1682 = vsel %vm960, %v1678, 0.0
        %v1683 = vmul.f32 %v1679, %v969
        %v1684 = vmul.f32 %v1682, %v973
        %v1687 = vrot.slane %v1683, 4
        %v1688 = vrot.slane %v1684, 4
        %1691 = vst [vmem:[#allocation3 + $0x1a0] sm:$0xf] %v1687
        %1692 = vst [vmem:[#allocation3 + $0x1a8] sm:$0xf] %v1688
        %1693 = vrot.lane.b32.xlu0 %v1419, 73
        %v1694 = vpop.permute.xlu0 %1693
        %1695 = vrot.lane.b32.xlu0 %v1420, 73
        %v1696 = vpop.permute.xlu0 %1695
        %v1697 = vsel %vm513, %v1694, %v1696
        %v1700 = vsel %vm513, %v1696, 0.0
        %v1701 = vmul.f32 %v1697, %v992
        %v1702 = vmul.f32 %v1700, %v996
        %1703 = vst [vmem:[#allocation3 + $0x1b0] sm:$0xf0] %v1701
        %1704 = vst [vmem:[#allocation3 + $0x1b8] sm:$0xf0] %v1702
        %1705 = vrot.lane.b32.xlu0 %v1419, 72
        %v1706 = vpop.permute.xlu0 %1705
        %1707 = vrot.lane.b32.xlu0 %v1420, 72
        %v1708 = vpop.permute.xlu0 %1707
        %v1709 = vsel %vm537, %v1706, %v1708
        %v1712 = vsel %vm537, %v1708, 0.0
        %v1713 = vmul.f32 %v1709, %v1009
        %v1714 = vmul.f32 %v1712, %v1013
        %v1717 = vrot.slane %v1713, 4
        %v1718 = vrot.slane %v1714, 4
        %1721 = vst [vmem:[#allocation3 + $0x1d0] sm:$0xf] %v1717
        %1722 = vst [vmem:[#allocation3 + $0x1d8] sm:$0xf] %v1718
        %1723 = vrot.lane.b32.xlu0 %v1419, 71
        %v1724 = vpop.permute.xlu0 %1723
        %1725 = vrot.lane.b32.xlu0 %v1420, 71
        %v1726 = vpop.permute.xlu0 %1725
        %v1727 = vsel %vm567, %v1724, %v1726
        %v1730 = vsel %vm567, %v1726, 0.0
        %v1731 = vmul.f32 %v1727, %v1032
        %v1732 = vmul.f32 %v1730, %v1036
        %1733 = vst [vmem:[#allocation3 + $0x1e0] sm:$0xf0] %v1731
        %1734 = vst [vmem:[#allocation3 + $0x1e8] sm:$0xf0] %v1732
        %1735 = vrot.lane.b32.xlu0 %v1419, 65
        %v1736 = vpop.permute.xlu0 %1735
        %1737 = vrot.lane.b32.xlu0 %v1420, 65
        %v1738 = vpop.permute.xlu0 %1737
        %v1739 = vsel %vm591, %v1736, %v1738
        %v1742 = vsel %vm591, %v1738, 0.0
        %v1743 = vmul.f32 %v1739, %v1049
        %v1744 = vmul.f32 %v1742, %v1053
        %v1747 = vrot.slane %v1743, 4
        %v1748 = vrot.slane %v1744, 4
        %1751 = vst [vmem:[#allocation3 + $0x200] sm:$0xf] %v1747
        %1752 = vst [vmem:[#allocation3 + $0x208] sm:$0xf] %v1748
        %1753 = vrot.lane.b32.xlu0 %v1419, 64
        %v1754 = vpop.permute.xlu0 %1753
        %1755 = vrot.lane.b32.xlu0 %v1420, 64
        %v1756 = vpop.permute.xlu0 %1755
        %v1757 = vsel %vm621, %v1754, %v1756
        %v1760 = vsel %vm621, %v1756, 0.0
        %v1761 = vmul.f32 %v1757, %v1072
        %v1762 = vmul.f32 %v1760, %v1076
        %1763 = vst [vmem:[#allocation3 + $0x210] sm:$0xf0] %v1761
        %1764 = vst [vmem:[#allocation3 + $0x218] sm:$0xf0] %v1762
        %1765 = vrot.lane.b32.xlu0 %v1419, 63
        %v1766 = vpop.permute.xlu0 %1765
        %1767 = vrot.lane.b32.xlu0 %v1420, 63
        %v1768 = vpop.permute.xlu0 %1767
        %v1769 = vsel %vm645, %v1766, %v1768
        %v1772 = vsel %vm645, %v1768, 0.0
        %v1773 = vmul.f32 %v1769, %v1089
        %v1774 = vmul.f32 %v1772, %v1093
        %v1777 = vrot.slane %v1773, 4
        %v1778 = vrot.slane %v1774, 4
        %1781 = vst [vmem:[#allocation3 + $0x230] sm:$0xf] %v1777
        %1782 = vst [vmem:[#allocation3 + $0x238] sm:$0xf] %v1778
        %1783 = vrot.lane.b32.xlu0 %v1419, 57
        %v1784 = vpop.permute.xlu0 %1783
        %1785 = vrot.lane.b32.xlu0 %v1420, 57
        %v1786 = vpop.permute.xlu0 %1785
        %v1787 = vsel %vm675, %v1784, %v1786
        %v1790 = vsel %vm675, %v1786, 0.0
        %v1791 = vmul.f32 %v1787, %v1112
        %v1792 = vmul.f32 %v1790, %v1116
        %1793 = vst [vmem:[#allocation3 + $0x240] sm:$0xf0] %v1791
        %1794 = vst [vmem:[#allocation3 + $0x248] sm:$0xf0] %v1792
        %1795 = vrot.lane.b32.xlu0 %v1419, 56
        %v1796 = vpop.permute.xlu0 %1795
        %1797 = vrot.lane.b32.xlu0 %v1420, 56
        %v1798 = vpop.permute.xlu0 %1797
        %v1799 = vsel %vm699, %v1796, %v1798
        %v1802 = vsel %vm699, %v1798, 0.0
        %v1803 = vmul.f32 %v1799, %v1129
        %v1804 = vmul.f32 %v1802, %v1133
        %v1807 = vrot.slane %v1803, 4
        %v1808 = vrot.slane %v1804, 4
        %1811 = vst [vmem:[#allocation3 + $0x260] sm:$0xf] %v1807
        %1812 = vst [vmem:[#allocation3 + $0x268] sm:$0xf] %v1808
        %1813 = vrot.lane.b32.xlu0 %v1419, 55
        %v1814 = vpop.permute.xlu0 %1813
        %1815 = vrot.lane.b32.xlu0 %v1420, 55
        %v1816 = vpop.permute.xlu0 %1815
        %v1817 = vsel %vm729, %v1814, %v1816
        %v1820 = vsel %vm729, %v1816, 0.0
        %v1821 = vmul.f32 %v1817, %v1152
        %v1822 = vmul.f32 %v1820, %v1156
        %1823 = vst [vmem:[#allocation3 + $0x270] sm:$0xf0] %v1821
        %1824 = vst [vmem:[#allocation3 + $0x278] sm:$0xf0] %v1822
        %v1825 = vld [vmem:[%s4] sm:$0xff]
        %v1826 = vld [vmem:[%s4 + $0x8] sm:$0xf]
        %v1827 = vld [vmem:[#allocation3] sm:$0xff]
        %v1828 = vld [vmem:[#allocation3 + $0x8] sm:$0xff]
        %v1829 = vld [vmem:[#allocation3 + $0x10] sm:$0xff]
        %v1830 = vld [vmem:[#allocation3 + $0x18] sm:$0xff]
        %v1831 = vld [vmem:[#allocation3 + $0x20] sm:$0xff]
        %v1832 = vld [vmem:[#allocation3 + $0x28] sm:$0xff]
        %v1833 = vld [vmem:[#allocation3 + $0x30] sm:$0xff]
        %v1834 = vld [vmem:[#allocation3 + $0x38] sm:$0xff]
        %v1835 = vld [vmem:[#allocation3 + $0x40] sm:$0xff]
        %v1836 = vld [vmem:[#allocation3 + $0x48] sm:$0xff]
        %v1837 = vld [vmem:[#allocation3 + $0x50] sm:$0xff]
        %v1838 = vld [vmem:[#allocation3 + $0x58] sm:$0xff]
        %v1839 = vld [vmem:[#allocation3 + $0x60] sm:$0xff]
        %v1840 = vld [vmem:[#allocation3 + $0x68] sm:$0xff]
        %v1841 = vld [vmem:[#allocation3 + $0x70] sm:$0xff]
        %v1842 = vld [vmem:[#allocation3 + $0x78] sm:$0xff]
        %v1843 = vld [vmem:[#allocation3 + $0x80] sm:$0xff]
        %v1844 = vld [vmem:[#allocation3 + $0x88] sm:$0xff]
        %v1845 = vld [vmem:[#allocation3 + $0x90] sm:$0xff]
        %v1846 = vld [vmem:[#allocation3 + $0x98] sm:$0xff]
        %v1847 = vld [vmem:[#allocation3 + $0xa0] sm:$0xff]
        %v1848 = vld [vmem:[#allocation3 + $0xa8] sm:$0xff]
        %v1849 = vld [vmem:[#allocation3 + $0xb0] sm:$0xff]
        %v1850 = vld [vmem:[#allocation3 + $0xb8] sm:$0xff]
        %v1851 = vld [vmem:[#allocation3 + $0xc0] sm:$0xff]
        %v1852 = vld [vmem:[#allocation3 + $0xc8] sm:$0xff]
        %v1853 = vld [vmem:[#allocation3 + $0xd0] sm:$0xff]
        %v1854 = vld [vmem:[#allocation3 + $0xd8] sm:$0xff]
        %v1855 = vld [vmem:[#allocation3 + $0xe0] sm:$0xff]
        %v1856 = vld [vmem:[#allocation3 + $0xe8] sm:$0xff]
        %v1857 = vld [vmem:[#allocation3 + $0xf0] sm:$0xff]
        %v1858 = vld [vmem:[#allocation3 + $0xf8] sm:$0xff]
        %v1859 = vld [vmem:[#allocation3 + $0x100] sm:$0xff]
        %v1860 = vld [vmem:[#allocation3 + $0x108] sm:$0xff]
        %v1861 = vld [vmem:[#allocation3 + $0x110] sm:$0xff]
        %v1862 = vld [vmem:[#allocation3 + $0x118] sm:$0xff]
        %v1863 = vld [vmem:[#allocation3 + $0x120] sm:$0xff]
        %v1864 = vld [vmem:[#allocation3 + $0x128] sm:$0xff]
        %v1865 = vld [vmem:[#allocation3 + $0x130] sm:$0xff]
        %v1866 = vld [vmem:[#allocation3 + $0x138] sm:$0xff]
        %v1867 = vld [vmem:[#allocation3 + $0x140] sm:$0xff]
        %v1868 = vld [vmem:[#allocation3 + $0x148] sm:$0xff]
        %v1869 = vld [vmem:[#allocation3 + $0x150] sm:$0xff]
        %v1870 = vld [vmem:[#allocation3 + $0x158] sm:$0xff]
        %v1871 = vld [vmem:[#allocation3 + $0x160] sm:$0xff]
        %v1872 = vld [vmem:[#allocation3 + $0x168] sm:$0xff]
        %v1873 = vld [vmem:[#allocation3 + $0x170] sm:$0xff]
        %v1874 = vld [vmem:[#allocation3 + $0x178] sm:$0xff]
        %v1875 = vld [vmem:[#allocation3 + $0x180] sm:$0xff]
        %v1876 = vld [vmem:[#allocation3 + $0x188] sm:$0xff]
        %v1877 = vld [vmem:[#allocation3 + $0x190] sm:$0xff]
        %v1878 = vld [vmem:[#allocation3 + $0x198] sm:$0xff]
        %v1879 = vld [vmem:[#allocation3 + $0x1a0] sm:$0xff]
        %v1880 = vld [vmem:[#allocation3 + $0x1a8] sm:$0xff]
        %v1881 = vld [vmem:[#allocation3 + $0x1b0] sm:$0xff]
        %v1882 = vld [vmem:[#allocation3 + $0x1b8] sm:$0xff]
        %v1883 = vld [vmem:[#allocation3 + $0x1c0] sm:$0xff]
        %v1884 = vld [vmem:[#allocation3 + $0x1c8] sm:$0xff]
        %v1885 = vld [vmem:[#allocation3 + $0x1d0] sm:$0xff]
        %v1886 = vld [vmem:[#allocation3 + $0x1d8] sm:$0xff]
        %v1887 = vld [vmem:[#allocation3 + $0x1e0] sm:$0xff]
        %v1888 = vld [vmem:[#allocation3 + $0x1e8] sm:$0xff]
        %v1889 = vld [vmem:[#allocation3 + $0x1f0] sm:$0xff]
        %v1890 = vld [vmem:[#allocation3 + $0x1f8] sm:$0xff]
        %v1891 = vld [vmem:[#allocation3 + $0x200] sm:$0xff]
        %v1892 = vld [vmem:[#allocation3 + $0x208] sm:$0xff]
        %v1893 = vld [vmem:[#allocation3 + $0x210] sm:$0xff]
        %v1894 = vld [vmem:[#allocation3 + $0x218] sm:$0xff]
        %v1895 = vld [vmem:[#allocation3 + $0x220] sm:$0xff]
        %v1896 = vld [vmem:[#allocation3 + $0x228] sm:$0xff]
        %v1897 = vld [vmem:[#allocation3 + $0x230] sm:$0xff]
        %v1898 = vld [vmem:[#allocation3 + $0x238] sm:$0xff]
        %v1899 = vld [vmem:[#allocation3 + $0x240] sm:$0xff]
        %v1900 = vld [vmem:[#allocation3 + $0x248] sm:$0xff]
        %v1901 = vld [vmem:[#allocation3 + $0x250] sm:$0xff]
        %v1902 = vld [vmem:[#allocation3 + $0x258] sm:$0xff]
        %v1903 = vld [vmem:[#allocation3 + $0x260] sm:$0xff]
        %v1904 = vld [vmem:[#allocation3 + $0x268] sm:$0xff]
        %v1905 = vld [vmem:[#allocation3 + $0x270] sm:$0xff]
        %v1906 = vld [vmem:[#allocation3 + $0x278] sm:$0xff]
        %v1907 = vld [vmem:[#allocation3 + $0x280] sm:$0xf]
        %v1908 = vld [vmem:[#allocation3 + $0x288] sm:$0xf]
        %v1909 = vld [vmem:[%s5] sm:$0xf]
        %1911 = vset.pattern.permute.xlu0 0
        %1912 = vperm.xlu0 %1911, %v1909
        %v1913 = vpop.permute.xlu0 %1912
        %v1917 = vcombine.high %v1825, %v1825
        %v1919 = vsel %vm1257, %v1826, 0
        %v1922 = vsel %vm1260, %v1907, 0
        %v1925 = vsel %vm1260, %v1908, 0
        %1927 = vmatprep.subr.mxu0 %v1828
        %1928 = vmatpush1.msra.mxu0 %v1827
        %1929 = vmatprep.subr.mxu0 %v1830
        %1930 = vmatpush1.msra.mxu0 %v1829
        %1931 = vmatprep.subr.mxu0 %v1832
        %1932 = vmatpush1.msra.mxu0 %v1831
        %1933 = vmatprep.subr.mxu0 %v1834
        %1934 = vmatpush1.msra.mxu0 %v1833
        %1935 = vmatprep.subr.mxu0 %v1836
        %1936 = vmatpush1.msra.mxu0 %v1835
        %1937 = vmatprep.subr.mxu0 %v1838
        %1938 = vmatpush1.msra.mxu0 %v1837
        %1939 = vmatprep.subr.mxu0 %v1840
        %1940 = vmatpush1.msra.mxu0 %v1839
        %1941 = vmatprep.subr.mxu0 %v1842
        %1942 = vmatpush1.msra.mxu0 %v1841
        %1943 = vmatprep.subr.mxu0 %v1844
        %1944 = vmatpush1.msra.mxu0 %v1843
        %1945 = vmatprep.subr.mxu0 %v1846
        %1946 = vmatpush1.msra.mxu0 %v1845
        %1947 = vmatprep.subr.mxu0 %v1848
        %1948 = vmatpush1.msra.mxu0 %v1847
        %1949 = vmatprep.subr.mxu0 %v1850
        %1950 = vmatpush1.msra.mxu0 %v1849
        %1951 = vmatprep.subr.mxu0 %v1852
        %1952 = vmatpush1.msra.mxu0 %v1851
        %1953 = vmatprep.subr.mxu0 %v1854
        %1954 = vmatpush1.msra.mxu0 %v1853
        %1955 = vmatprep.subr.mxu0 %v1856
        %1956 = vmatpush1.msra.mxu0 %v1855
        %1957 = vmatprep.subr.mxu0 %v1858
        %1958 = vmatpush1.msra.mxu0 %v1857
        %1959 = vmatprep.subr.mxu0 %v1860
        %1960 = vmatpush1.msra.mxu0 %v1859
        %1961 = vmatprep.subr.mxu0 %v1862
        %1962 = vmatpush1.msra.mxu0 %v1861
        %1963 = vmatprep.subr.mxu0 %v1864
        %1964 = vmatpush1.msra.mxu0 %v1863
        %1965 = vmatprep.subr.mxu0 %v1866
        %1966 = vmatpush1.msra.mxu0 %v1865
        %1967 = vmatprep.subr.mxu0 %v1868
        %1968 = vmatpush1.msra.mxu0 %v1867
        %1969 = vmatprep.subr.mxu0 %v1870
        %1970 = vmatpush1.msra.mxu0 %v1869
        %1971 = vmatprep.subr.mxu0 %v1872
        %1972 = vmatpush1.msra.mxu0 %v1871
        %1973 = vmatprep.subr.mxu0 %v1874
        %1974 = vmatpush1.msra.mxu0 %v1873
        %1975 = vmatprep.subr.mxu0 %v1876
        %1976 = vmatpush1.msra.mxu0 %v1875
        %1977 = vmatprep.subr.mxu0 %v1878
        %1978 = vmatpush1.msra.mxu0 %v1877
        %1979 = vmatprep.subr.mxu0 %v1880
        %1980 = vmatpush1.msra.mxu0 %v1879
        %1981 = vmatprep.subr.mxu0 %v1882
        %1982 = vmatpush1.msra.mxu0 %v1881
        %1983 = vmatprep.subr.mxu0 %v1884
        %1984 = vmatpush1.msra.mxu0 %v1883
        %1985 = vmatprep.subr.mxu0 %v1886
        %1986 = vmatpush1.msra.mxu0 %v1885
        %1987 = vmatprep.subr.mxu0 %v1888
        %1988 = vmatpush1.msra.mxu0 %v1887
        %1989 = vmatprep.subr.mxu0 %v1890
        %1990 = vmatpush1.msra.mxu0 %v1889
        %1991 = vmatprep.mubr.f32.mxu0 %v1917
        %1992 = vmatmul.mubr.f32.gmra.mrb[0].mxu0 %v1825
        %v1993 = vpop.f32.mrb[0].mxu0
        %v1994 = vadd.f32 %v1913, %v1993
        %v1995 = vpop.f32.mrb[0].mxu0
        %v1996 = vadd.f32 %v1913, %v1995
        %1997 = vdwg.mxu0
        %1998 = vmatprep.subr.mxu0 %v1892
        %1999 = vmatpush1.msra.mxu0 %v1891
        %2000 = vmatprep.subr.mxu0 %v1894
        %2001 = vmatpush1.msra.mxu0 %v1893
        %2002 = vmatprep.subr.mxu0 %v1896
        %2003 = vmatpush1.msra.mxu0 %v1895
        %2004 = vmatprep.subr.mxu0 %v1898
        %2005 = vmatpush1.msra.mxu0 %v1897
        %2006 = vmatprep.subr.mxu0 %v1900
        %2007 = vmatpush1.msra.mxu0 %v1899
        %2008 = vmatprep.subr.mxu0 %v1902
        %2009 = vmatpush1.msra.mxu0 %v1901
        %2010 = vmatprep.subr.mxu0 %v1904
        %2011 = vmatpush1.msra.mxu0 %v1903
        %2012 = vmatprep.subr.mxu0 %v1906
        %2013 = vmatpush1.msra.mxu0 %v1905
        %2014 = vmatprep.subr.mxu0 %v1925
        %2015 = vmatpush1.msra.mxu0 %v1922
        %2016 = vmatprep.subr.mxu0 0.0
        %2017 = vmatpush1.msra.mxu0 0.0
        %2018 = vmatprep.subr.mxu0 0.0
        %2019 = vmatpush1.msra.mxu0 0.0
        %2020 = vmatprep.subr.mxu0 0.0
        %2021 = vmatpush1.msra.mxu0 0.0
        %2022 = vmatprep.subr.mxu0 0.0
        %2023 = vmatpush1.msra.mxu0 0.0
        %2024 = vmatprep.subr.mxu0 0.0
        %2025 = vmatpush1.msra.mxu0 0.0
        %2026 = vmatprep.subr.mxu0 0.0
        %2027 = vmatpush1.msra.mxu0 0.0
        %2028 = vmatprep.subr.mxu0 0.0
        %2029 = vmatpush1.msra.mxu0 0.0
        %2030 = vmatprep.subr.mxu0 0.0
        %2031 = vmatpush1.msra.mxu0 0.0
        %2032 = vmatprep.subr.mxu0 0.0
        %2033 = vmatpush1.msra.mxu0 0.0
        %2034 = vmatprep.subr.mxu0 0.0
        %2035 = vmatpush1.msra.mxu0 0.0
        %2036 = vmatprep.subr.mxu0 0.0
        %2037 = vmatpush1.msra.mxu0 0.0
        %2038 = vmatprep.subr.mxu0 0.0
        %2039 = vmatpush1.msra.mxu0 0.0
        %2040 = vmatprep.subr.mxu0 0.0
        %2041 = vmatpush1.msra.mxu0 0.0
        %2042 = vmatprep.subr.mxu0 0.0
        %2043 = vmatpush1.msra.mxu0 0.0
        %2044 = vmatprep.subr.mxu0 0.0
        %2045 = vmatpush1.msra.mxu0 0.0
        %2046 = vmatprep.subr.mxu0 0.0
        %2047 = vmatpush1.msra.mxu0 0.0
        %2048 = vmatprep.subr.mxu0 0.0
        %2049 = vmatpush1.msra.mxu0 0.0
        %2050 = vmatprep.subr.mxu0 0.0
        %2051 = vmatpush1.msra.mxu0 0.0
        %2052 = vmatprep.subr.mxu0 0.0
        %2053 = vmatpush1.msra.mxu0 0.0
        %2054 = vmatprep.subr.mxu0 0.0
        %2055 = vmatpush1.msra.mxu0 0.0
        %2056 = vmatprep.subr.mxu0 0.0
        %2057 = vmatpush1.msra.mxu0 0.0
        %2058 = vmatprep.subr.mxu0 0.0
        %2059 = vmatpush1.msra.mxu0 0.0
        %2060 = vmatprep.subr.mxu0 0.0
        %2061 = vmatpush1.msra.mxu0 0.0
        %2062 = vmatprep.mubr.f32.mxu0 0.0
        %2063 = vmatmul.mubr.f32.gmra.mrb[0].mxu0 %v1919
        %v2064 = vpop.f32.mrb[0].mxu0
        %v2065 = vadd.f32 %v1994, %v2064
        %v2066 = vpop.f32.mrb[0].mxu0
        %v2067 = vadd.f32 %v1996, %v2066
        %2068 = vdwg.mxu0
        %v2069 = vmax.f32 %v2065, 0.0
        %v2070 = vmax.f32 %v2067, 0.0
        %2071 = vst [vmem:[#allocation2 + $0x10] sm:$0xf] %v2069
        %2072 = vst [vmem:[#allocation2 + $0x18] sm:$0xf] %v2070
        %v2073 = vld [vmem:[#allocation2 + $0x10] sm:$0xf]
        %v2074 = vld [vmem:[#allocation2 + $0x18] sm:$0xf]
        %2077 = vrot.lane.b32.xlu0 %v2073, 73
        %v2078 = vpop.permute.xlu0 %2077
        %2079 = vrot.lane.b32.xlu0 %v2074, 73
        %v2080 = vpop.permute.xlu0 %2079
        %v2081 = vsel %vm513, %v2078, %v2080
        %v2084 = vsel %vm513, 0.0, %v2078
        %v2085 = vmul.f32 %v2084, %v522
        %v2086 = vmul.f32 %v2081, %v526
        %2087 = vst [vmem:[#allocation3 + $0x10] sm:$0xf] %v2085
        %2088 = vst [vmem:[#allocation3 + $0x18] sm:$0xf] %v2086
        %2089 = vrot.lane.b32.xlu0 %v2073, 72
        %v2090 = vpop.permute.xlu0 %2089
        %2091 = vrot.lane.b32.xlu0 %v2074, 72
        %v2092 = vpop.permute.xlu0 %2091
        %v2093 = vsel %vm537, %v2090, %v2092
        %v2096 = vsel %vm537, 0.0, %v2090
        %v2097 = vmul.f32 %v2096, %v546
        %v2098 = vmul.f32 %v2093, %v550
        %v2101 = vrot.slane %v2097, 4
        %v2102 = vrot.slane %v2098, 4
        %2105 = vst [vmem:[#allocation3 + $0x20] sm:$0xf0] %v2101
        %2106 = vst [vmem:[#allocation3 + $0x28] sm:$0xf0] %v2102
        %2107 = vrot.lane.b32.xlu0 %v2073, 71
        %v2108 = vpop.permute.xlu0 %2107
        %2109 = vrot.lane.b32.xlu0 %v2074, 71
        %v2110 = vpop.permute.xlu0 %2109
        %v2111 = vsel %vm567, %v2108, %v2110
        %v2114 = vsel %vm567, 0.0, %v2108
        %v2115 = vmul.f32 %v2114, %v576
        %v2116 = vmul.f32 %v2111, %v580
        %2117 = vst [vmem:[#allocation3 + $0x40] sm:$0xf] %v2115
        %2118 = vst [vmem:[#allocation3 + $0x48] sm:$0xf] %v2116
        %2119 = vrot.lane.b32.xlu0 %v2073, 65
        %v2120 = vpop.permute.xlu0 %2119
        %2121 = vrot.lane.b32.xlu0 %v2074, 65
        %v2122 = vpop.permute.xlu0 %2121
        %v2123 = vsel %vm591, %v2120, %v2122
        %v2126 = vsel %vm591, 0.0, %v2120
        %v2127 = vmul.f32 %v2126, %v600
        %v2128 = vmul.f32 %v2123, %v604
        %v2131 = vrot.slane %v2127, 4
        %v2132 = vrot.slane %v2128, 4
        %2135 = vst [vmem:[#allocation3 + $0x50] sm:$0xf0] %v2131
        %2136 = vst [vmem:[#allocation3 + $0x58] sm:$0xf0] %v2132
        %2137 = vrot.lane.b32.xlu0 %v2073, 64
        %v2138 = vpop.permute.xlu0 %2137
        %2139 = vrot.lane.b32.xlu0 %v2074, 64
        %v2140 = vpop.permute.xlu0 %2139
        %v2141 = vsel %vm621, %v2138, %v2140
        %v2144 = vsel %vm621, 0.0, %v2138
        %v2145 = vmul.f32 %v2144, %v630
        %v2146 = vmul.f32 %v2141, %v634
        %2147 = vst [vmem:[#allocation3 + $0x70] sm:$0xf] %v2145
        %2148 = vst [vmem:[#allocation3 + $0x78] sm:$0xf] %v2146
        %2149 = vrot.lane.b32.xlu0 %v2073, 63
        %v2150 = vpop.permute.xlu0 %2149
        %2151 = vrot.lane.b32.xlu0 %v2074, 63
        %v2152 = vpop.permute.xlu0 %2151
        %v2153 = vsel %vm645, %v2150, %v2152
        %v2156 = vsel %vm645, 0.0, %v2150
        %v2157 = vmul.f32 %v2156, %v654
        %v2158 = vmul.f32 %v2153, %v658
        %v2161 = vrot.slane %v2157, 4
        %v2162 = vrot.slane %v2158, 4
        %2165 = vst [vmem:[#allocation3 + $0x80] sm:$0xf0] %v2161
        %2166 = vst [vmem:[#allocation3 + $0x88] sm:$0xf0] %v2162
        %2167 = vrot.lane.b32.xlu0 %v2073, 57
        %v2168 = vpop.permute.xlu0 %2167
        %2169 = vrot.lane.b32.xlu0 %v2074, 57
        %v2170 = vpop.permute.xlu0 %2169
        %v2171 = vsel %vm675, %v2168, %v2170
        %v2174 = vsel %vm675, 0.0, %v2168
        %v2175 = vmul.f32 %v2174, %v684
        %v2176 = vmul.f32 %v2171, %v688
        %2177 = vst [vmem:[#allocation3 + $0xa0] sm:$0xf] %v2175
        %2178 = vst [vmem:[#allocation3 + $0xa8] sm:$0xf] %v2176
        %2179 = vrot.lane.b32.xlu0 %v2073, 56
        %v2180 = vpop.permute.xlu0 %2179
        %2181 = vrot.lane.b32.xlu0 %v2074, 56
        %v2182 = vpop.permute.xlu0 %2181
        %v2183 = vsel %vm699, %v2180, %v2182
        %v2186 = vsel %vm699, 0.0, %v2180
        %v2187 = vmul.f32 %v2186, %v708
        %v2188 = vmul.f32 %v2183, %v712
        %v2191 = vrot.slane %v2187, 4
        %v2192 = vrot.slane %v2188, 4
        %2195 = vst [vmem:[#allocation3 + $0xb0] sm:$0xf0] %v2191
        %2196 = vst [vmem:[#allocation3 + $0xb8] sm:$0xf0] %v2192
        %2197 = vrot.lane.b32.xlu0 %v2073, 55
        %v2198 = vpop.permute.xlu0 %2197
        %2199 = vrot.lane.b32.xlu0 %v2074, 55
        %v2200 = vpop.permute.xlu0 %2199
        %v2201 = vsel %vm729, %v2198, %v2200
        %v2204 = vsel %vm729, 0.0, %v2198
        %v2205 = vmul.f32 %v2204, %v738
        %v2206 = vmul.f32 %v2201, %v742
        %2207 = vst [vmem:[#allocation3 + $0xd0] sm:$0xf] %v2205
        %2208 = vst [vmem:[#allocation3 + $0xd8] sm:$0xf] %v2206
        %2209 = vrot.lane.b32.xlu0 %v2073, 9
        %v2210 = vpop.permute.xlu0 %2209
        %2211 = vrot.lane.b32.xlu0 %v2074, 9
        %v2212 = vpop.permute.xlu0 %2211
        %v2213 = vsel %vm753, %v2210, %v2212
        %v2216 = vsel %vm753, 0.0, %v2210
        %v2217 = vmul.f32 %v2216, %v762
        %v2218 = vmul.f32 %v2213, %v766
        %v2221 = vrot.slane %v2217, 4
        %v2222 = vrot.slane %v2218, 4
        %2225 = vst [vmem:[#allocation3 + $0xe0] sm:$0xf0] %v2221
        %2226 = vst [vmem:[#allocation3 + $0xe8] sm:$0xf0] %v2222
        %2227 = vrot.lane.b32.xlu0 %v2073, 8
        %v2228 = vpop.permute.xlu0 %2227
        %2229 = vrot.lane.b32.xlu0 %v2074, 8
        %v2230 = vpop.permute.xlu0 %2229
        %v2231 = vsel %vm783, %v2228, %v2230
        %v2234 = vsel %vm783, 0.0, %v2228
        %v2235 = vmul.f32 %v2234, %v792
        %v2236 = vmul.f32 %v2231, %v796
        %2237 = vst [vmem:[#allocation3 + $0x100] sm:$0xf] %v2235
        %2238 = vst [vmem:[#allocation3 + $0x108] sm:$0xf] %v2236
        %2239 = vrot.lane.b32.xlu0 %v2073, 7
        %v2240 = vpop.permute.xlu0 %2239
        %2241 = vrot.lane.b32.xlu0 %v2074, 7
        %v2242 = vpop.permute.xlu0 %2241
        %v2243 = vsel %vm807, %v2240, %v2242
        %v2246 = vsel %vm807, 0.0, %v2240
        %v2247 = vmul.f32 %v2246, %v816
        %v2248 = vmul.f32 %v2243, %v820
        %v2251 = vrot.slane %v2247, 4
        %v2252 = vrot.slane %v2248, 4
        %2255 = vst [vmem:[#allocation3 + $0x110] sm:$0xf0] %v2251
        %2256 = vst [vmem:[#allocation3 + $0x118] sm:$0xf0] %v2252
        %2257 = vrot.lane.b32.xlu0 %v2073, 1
        %v2258 = vpop.permute.xlu0 %2257
        %2259 = vrot.lane.b32.xlu0 %v2074, 1
        %v2260 = vpop.permute.xlu0 %2259
        %v2261 = vsel %vm837, %v2258, %v2260
        %v2264 = vsel %vm837, 0.0, %v2258
        %v2265 = vmul.f32 %v2264, %v846
        %v2266 = vmul.f32 %v2261, %v850
        %2267 = vst [vmem:[#allocation3 + $0x130] sm:$0xf] %v2265
        %2268 = vst [vmem:[#allocation3 + $0x138] sm:$0xf] %v2266
        %v2269 = vmul.f32 %v2073, %v861
        %v2270 = vmul.f32 %v2074, %v865
        %v2273 = vrot.slane %v2269, 4
        %v2274 = vrot.slane %v2270, 4
        %2277 = vst [vmem:[#allocation3 + $0x140] sm:$0xf0] %v2273
        %2278 = vst [vmem:[#allocation3 + $0x148] sm:$0xf0] %v2274
        %2279 = vrot.lane.b32.xlu0 %v2073, 127
        %v2280 = vpop.permute.xlu0 %2279
        %2281 = vrot.lane.b32.xlu0 %v2074, 127
        %v2282 = vpop.permute.xlu0 %2281
        %v2283 = vsel %vm882, %v2280, %v2282
        %v2286 = vsel %vm882, %v2282, 0.0
        %v2287 = vmul.f32 %v2283, %v891
        %v2288 = vmul.f32 %v2286, %v895
        %2289 = vst [vmem:[#allocation3 + $0x160] sm:$0xf] %v2287
        %2290 = vst [vmem:[#allocation3 + $0x168] sm:$0xf] %v2288
        %2291 = vrot.lane.b32.xlu0 %v2073, 121
        %v2292 = vpop.permute.xlu0 %2291
        %2293 = vrot.lane.b32.xlu0 %v2074, 121
        %v2294 = vpop.permute.xlu0 %2293
        %v2295 = vsel %vm906, %v2292, %v2294
        %v2298 = vsel %vm906, %v2294, 0.0
        %v2299 = vmul.f32 %v2295, %v915
        %v2300 = vmul.f32 %v2298, %v919
        %v2303 = vrot.slane %v2299, 4
        %v2304 = vrot.slane %v2300, 4
        %2307 = vst [vmem:[#allocation3 + $0x170] sm:$0xf0] %v2303
        %2308 = vst [vmem:[#allocation3 + $0x178] sm:$0xf0] %v2304
        %2309 = vrot.lane.b32.xlu0 %v2073, 120
        %v2310 = vpop.permute.xlu0 %2309
        %2311 = vrot.lane.b32.xlu0 %v2074, 120
        %v2312 = vpop.permute.xlu0 %2311
        %v2313 = vsel %vm936, %v2310, %v2312
        %v2316 = vsel %vm936, %v2312, 0.0
        %v2317 = vmul.f32 %v2313, %v945
        %v2318 = vmul.f32 %v2316, %v949
        %2319 = vst [vmem:[#allocation3 + $0x190] sm:$0xf] %v2317
        %2320 = vst [vmem:[#allocation3 + $0x198] sm:$0xf] %v2318
        %2321 = vrot.lane.b32.xlu0 %v2073, 119
        %v2322 = vpop.permute.xlu0 %2321
        %2323 = vrot.lane.b32.xlu0 %v2074, 119
        %v2324 = vpop.permute.xlu0 %2323
        %v2325 = vsel %vm960, %v2322, %v2324
        %v2328 = vsel %vm960, %v2324, 0.0
        %v2329 = vmul.f32 %v2325, %v969
        %v2330 = vmul.f32 %v2328, %v973
        %v2333 = vrot.slane %v2329, 4
        %v2334 = vrot.slane %v2330, 4
        %2337 = vst [vmem:[#allocation3 + $0x1a0] sm:$0xf0] %v2333
        %2338 = vst [vmem:[#allocation3 + $0x1a8] sm:$0xf0] %v2334
        %v2340 = vsel %vm513, %v2080, 0.0
        %v2341 = vmul.f32 %v2081, %v992
        %v2342 = vmul.f32 %v2340, %v996
        %2343 = vst [vmem:[#allocation3 + $0x1c0] sm:$0xf] %v2341
        %2344 = vst [vmem:[#allocation3 + $0x1c8] sm:$0xf] %v2342
        %v2346 = vsel %vm537, %v2092, 0.0
        %v2347 = vmul.f32 %v2093, %v1009
        %v2348 = vmul.f32 %v2346, %v1013
        %v2351 = vrot.slane %v2347, 4
        %v2352 = vrot.slane %v2348, 4
        %2355 = vst [vmem:[#allocation3 + $0x1d0] sm:$0xf0] %v2351
        %2356 = vst [vmem:[#allocation3 + $0x1d8] sm:$0xf0] %v2352
        %v2358 = vsel %vm567, %v2110, 0.0
        %v2359 = vmul.f32 %v2111, %v1032
        %v2360 = vmul.f32 %v2358, %v1036
        %2361 = vst [vmem:[#allocation3 + $0x1f0] sm:$0xf] %v2359
        %2362 = vst [vmem:[#allocation3 + $0x1f8] sm:$0xf] %v2360
        %v2364 = vsel %vm591, %v2122, 0.0
        %v2365 = vmul.f32 %v2123, %v1049
        %v2366 = vmul.f32 %v2364, %v1053
        %v2369 = vrot.slane %v2365, 4
        %v2370 = vrot.slane %v2366, 4
        %2373 = vst [vmem:[#allocation3 + $0x200] sm:$0xf0] %v2369
        %2374 = vst [vmem:[#allocation3 + $0x208] sm:$0xf0] %v2370
        %v2376 = vsel %vm621, %v2140, 0.0
        %v2377 = vmul.f32 %v2141, %v1072
        %v2378 = vmul.f32 %v2376, %v1076
        %2379 = vst [vmem:[#allocation3 + $0x220] sm:$0xf] %v2377
        %2380 = vst [vmem:[#allocation3 + $0x228] sm:$0xf] %v2378
        %v2382 = vsel %vm645, %v2152, 0.0
        %v2383 = vmul.f32 %v2153, %v1089
        %v2384 = vmul.f32 %v2382, %v1093
        %v2387 = vrot.slane %v2383, 4
        %v2388 = vrot.slane %v2384, 4
        %2391 = vst [vmem:[#allocation3 + $0x230] sm:$0xf0] %v2387
        %2392 = vst [vmem:[#allocation3 + $0x238] sm:$0xf0] %v2388
        %v2394 = vsel %vm675, %v2170, 0.0
        %v2395 = vmul.f32 %v2171, %v1112
        %v2396 = vmul.f32 %v2394, %v1116
        %2397 = vst [vmem:[#allocation3 + $0x250] sm:$0xf] %v2395
        %2398 = vst [vmem:[#allocation3 + $0x258] sm:$0xf] %v2396
        %v2400 = vsel %vm699, %v2182, 0.0
        %v2401 = vmul.f32 %v2183, %v1129
        %v2402 = vmul.f32 %v2400, %v1133
        %v2405 = vrot.slane %v2401, 4
        %v2406 = vrot.slane %v2402, 4
        %2409 = vst [vmem:[#allocation3 + $0x260] sm:$0xf0] %v2405
        %2410 = vst [vmem:[#allocation3 + $0x268] sm:$0xf0] %v2406
        %v2412 = vsel %vm729, %v2200, 0.0
        %v2413 = vmul.f32 %v2201, %v1152
        %v2414 = vmul.f32 %v2412, %v1156
        %2415 = vst [vmem:[#allocation3 + $0x280] sm:$0xf] %v2413
        %2416 = vst [vmem:[#allocation3 + $0x288] sm:$0xf] %v2414
        %v2417 = vld [vmem:[%s6] sm:$0xff]
        %v2418 = vld [vmem:[%s6 + $0x8] sm:$0xf]
        %v2419 = vld [vmem:[#allocation3] sm:$0xff]
        %v2420 = vld [vmem:[#allocation3 + $0x8] sm:$0xff]
        %v2421 = vld [vmem:[#allocation3 + $0x10] sm:$0xff]
        %v2422 = vld [vmem:[#allocation3 + $0x18] sm:$0xff]
        %v2423 = vld [vmem:[#allocation3 + $0x20] sm:$0xff]
        %v2424 = vld [vmem:[#allocation3 + $0x28] sm:$0xff]
        %v2425 = vld [vmem:[#allocation3 + $0x30] sm:$0xff]
        %v2426 = vld [vmem:[#allocation3 + $0x38] sm:$0xff]
        %v2427 = vld [vmem:[#allocation3 + $0x40] sm:$0xff]
        %v2428 = vld [vmem:[#allocation3 + $0x48] sm:$0xff]
        %v2429 = vld [vmem:[#allocation3 + $0x50] sm:$0xff]
        %v2430 = vld [vmem:[#allocation3 + $0x58] sm:$0xff]
        %v2431 = vld [vmem:[#allocation3 + $0x60] sm:$0xff]
        %v2432 = vld [vmem:[#allocation3 + $0x68] sm:$0xff]
        %v2433 = vld [vmem:[#allocation3 + $0x70] sm:$0xff]
        %v2434 = vld [vmem:[#allocation3 + $0x78] sm:$0xff]
        %v2435 = vld [vmem:[#allocation3 + $0x80] sm:$0xff]
        %v2436 = vld [vmem:[#allocation3 + $0x88] sm:$0xff]
        %v2437 = vld [vmem:[#allocation3 + $0x90] sm:$0xff]
        %v2438 = vld [vmem:[#allocation3 + $0x98] sm:$0xff]
        %v2439 = vld [vmem:[#allocation3 + $0xa0] sm:$0xff]
        %v2440 = vld [vmem:[#allocation3 + $0xa8] sm:$0xff]
        %v2441 = vld [vmem:[#allocation3 + $0xb0] sm:$0xff]
        %v2442 = vld [vmem:[#allocation3 + $0xb8] sm:$0xff]
        %v2443 = vld [vmem:[#allocation3 + $0xc0] sm:$0xff]
        %v2444 = vld [vmem:[#allocation3 + $0xc8] sm:$0xff]
        %v2445 = vld [vmem:[#allocation3 + $0xd0] sm:$0xff]
        %v2446 = vld [vmem:[#allocation3 + $0xd8] sm:$0xff]
        %v2447 = vld [vmem:[#allocation3 + $0xe0] sm:$0xff]
        %v2448 = vld [vmem:[#allocation3 + $0xe8] sm:$0xff]
        %v2449 = vld [vmem:[#allocation3 + $0xf0] sm:$0xff]
        %v2450 = vld [vmem:[#allocation3 + $0xf8] sm:$0xff]
        %v2451 = vld [vmem:[#allocation3 + $0x100] sm:$0xff]
        %v2452 = vld [vmem:[#allocation3 + $0x108] sm:$0xff]
        %v2453 = vld [vmem:[#allocation3 + $0x110] sm:$0xff]
        %v2454 = vld [vmem:[#allocation3 + $0x118] sm:$0xff]
        %v2455 = vld [vmem:[#allocation3 + $0x120] sm:$0xff]
        %v2456 = vld [vmem:[#allocation3 + $0x128] sm:$0xff]
        %v2457 = vld [vmem:[#allocation3 + $0x130] sm:$0xff]
        %v2458 = vld [vmem:[#allocation3 + $0x138] sm:$0xff]
        %v2459 = vld [vmem:[#allocation3 + $0x140] sm:$0xff]
        %v2460 = vld [vmem:[#allocation3 + $0x148] sm:$0xff]
        %v2461 = vld [vmem:[#allocation3 + $0x150] sm:$0xff]
        %v2462 = vld [vmem:[#allocation3 + $0x158] sm:$0xff]
        %v2463 = vld [vmem:[#allocation3 + $0x160] sm:$0xff]
        %v2464 = vld [vmem:[#allocation3 + $0x168] sm:$0xff]
        %v2465 = vld [vmem:[#allocation3 + $0x170] sm:$0xff]
        %v2466 = vld [vmem:[#allocation3 + $0x178] sm:$0xff]
        %v2467 = vld [vmem:[#allocation3 + $0x180] sm:$0xff]
        %v2468 = vld [vmem:[#allocation3 + $0x188] sm:$0xff]
        %v2469 = vld [vmem:[#allocation3 + $0x190] sm:$0xff]
        %v2470 = vld [vmem:[#allocation3 + $0x198] sm:$0xff]
        %v2471 = vld [vmem:[#allocation3 + $0x1a0] sm:$0xff]
        %v2472 = vld [vmem:[#allocation3 + $0x1a8] sm:$0xff]
        %v2473 = vld [vmem:[#allocation3 + $0x1b0] sm:$0xff]
        %v2474 = vld [vmem:[#allocation3 + $0x1b8] sm:$0xff]
        %v2475 = vld [vmem:[#allocation3 + $0x1c0] sm:$0xff]
        %v2476 = vld [vmem:[#allocation3 + $0x1c8] sm:$0xff]
        %v2477 = vld [vmem:[#allocation3 + $0x1d0] sm:$0xff]
        %v2478 = vld [vmem:[#allocation3 + $0x1d8] sm:$0xff]
        %v2479 = vld [vmem:[#allocation3 + $0x1e0] sm:$0xff]
        %v2480 = vld [vmem:[#allocation3 + $0x1e8] sm:$0xff]
        %v2481 = vld [vmem:[#allocation3 + $0x1f0] sm:$0xff]
        %v2482 = vld [vmem:[#allocation3 + $0x1f8] sm:$0xff]
        %v2483 = vld [vmem:[#allocation3 + $0x200] sm:$0xff]
        %v2484 = vld [vmem:[#allocation3 + $0x208] sm:$0xff]
        %v2485 = vld [vmem:[#allocation3 + $0x210] sm:$0xff]
        %v2486 = vld [vmem:[#allocation3 + $0x218] sm:$0xff]
        %v2487 = vld [vmem:[#allocation3 + $0x220] sm:$0xff]
        %v2488 = vld [vmem:[#allocation3 + $0x228] sm:$0xff]
        %v2489 = vld [vmem:[#allocation3 + $0x230] sm:$0xff]
        %v2490 = vld [vmem:[#allocation3 + $0x238] sm:$0xff]
        %v2491 = vld [vmem:[#allocation3 + $0x240] sm:$0xff]
        %v2492 = vld [vmem:[#allocation3 + $0x248] sm:$0xff]
        %v2493 = vld [vmem:[#allocation3 + $0x250] sm:$0xff]
        %v2494 = vld [vmem:[#allocation3 + $0x258] sm:$0xff]
        %v2495 = vld [vmem:[#allocation3 + $0x260] sm:$0xff]
        %v2496 = vld [vmem:[#allocation3 + $0x268] sm:$0xff]
        %v2497 = vld [vmem:[#allocation3 + $0x270] sm:$0xff]
        %v2498 = vld [vmem:[#allocation3 + $0x278] sm:$0xff]
        %v2499 = vld [vmem:[#allocation3 + $0x280] sm:$0xf]
        %v2500 = vld [vmem:[#allocation3 + $0x288] sm:$0xf]
        %v2501 = vld [vmem:[%s7] sm:$0xf]
        %2503 = vset.pattern.permute.xlu0 0
        %2504 = vperm.xlu0 %2503, %v2501
        %v2505 = vpop.permute.xlu0 %2504
        %v2509 = vcombine.high %v2417, %v2417
        %v2511 = vsel %vm1257, %v2418, 0
        %v2514 = vsel %vm1260, %v2499, 0
        %v2517 = vsel %vm1260, %v2500, 0
        %2519 = vmatprep.subr.mxu0 %v2420
        %2520 = vmatpush1.msra.mxu0 %v2419
        %2521 = vmatprep.subr.mxu0 %v2422
        %2522 = vmatpush1.msra.mxu0 %v2421
        %2523 = vmatprep.subr.mxu0 %v2424
        %2524 = vmatpush1.msra.mxu0 %v2423
        %2525 = vmatprep.subr.mxu0 %v2426
        %2526 = vmatpush1.msra.mxu0 %v2425
        %2527 = vmatprep.subr.mxu0 %v2428
        %2528 = vmatpush1.msra.mxu0 %v2427
        %2529 = vmatprep.subr.mxu0 %v2430
        %2530 = vmatpush1.msra.mxu0 %v2429
        %2531 = vmatprep.subr.mxu0 %v2432
        %2532 = vmatpush1.msra.mxu0 %v2431
        %2533 = vmatprep.subr.mxu0 %v2434
        %2534 = vmatpush1.msra.mxu0 %v2433
        %2535 = vmatprep.subr.mxu0 %v2436
        %2536 = vmatpush1.msra.mxu0 %v2435
        %2537 = vmatprep.subr.mxu0 %v2438
        %2538 = vmatpush1.msra.mxu0 %v2437
        %2539 = vmatprep.subr.mxu0 %v2440
        %2540 = vmatpush1.msra.mxu0 %v2439
        %2541 = vmatprep.subr.mxu0 %v2442
        %2542 = vmatpush1.msra.mxu0 %v2441
        %2543 = vmatprep.subr.mxu0 %v2444
        %2544 = vmatpush1.msra.mxu0 %v2443
        %2545 = vmatprep.subr.mxu0 %v2446
        %2546 = vmatpush1.msra.mxu0 %v2445
        %2547 = vmatprep.subr.mxu0 %v2448
        %2548 = vmatpush1.msra.mxu0 %v2447
        %2549 = vmatprep.subr.mxu0 %v2450
        %2550 = vmatpush1.msra.mxu0 %v2449
        %2551 = vmatprep.subr.mxu0 %v2452
        %2552 = vmatpush1.msra.mxu0 %v2451
        %2553 = vmatprep.subr.mxu0 %v2454
        %2554 = vmatpush1.msra.mxu0 %v2453
        %2555 = vmatprep.subr.mxu0 %v2456
        %2556 = vmatpush1.msra.mxu0 %v2455
        %2557 = vmatprep.subr.mxu0 %v2458
        %2558 = vmatpush1.msra.mxu0 %v2457
        %2559 = vmatprep.subr.mxu0 %v2460
        %2560 = vmatpush1.msra.mxu0 %v2459
        %2561 = vmatprep.subr.mxu0 %v2462
        %2562 = vmatpush1.msra.mxu0 %v2461
        %2563 = vmatprep.subr.mxu0 %v2464
        %2564 = vmatpush1.msra.mxu0 %v2463
        %2565 = vmatprep.subr.mxu0 %v2466
        %2566 = vmatpush1.msra.mxu0 %v2465
        %2567 = vmatprep.subr.mxu0 %v2468
        %2568 = vmatpush1.msra.mxu0 %v2467
        %2569 = vmatprep.subr.mxu0 %v2470
        %2570 = vmatpush1.msra.mxu0 %v2469
        %2571 = vmatprep.subr.mxu0 %v2472
        %2572 = vmatpush1.msra.mxu0 %v2471
        %2573 = vmatprep.subr.mxu0 %v2474
        %2574 = vmatpush1.msra.mxu0 %v2473
        %2575 = vmatprep.subr.mxu0 %v2476
        %2576 = vmatpush1.msra.mxu0 %v2475
        %2577 = vmatprep.subr.mxu0 %v2478
        %2578 = vmatpush1.msra.mxu0 %v2477
        %2579 = vmatprep.subr.mxu0 %v2480
        %2580 = vmatpush1.msra.mxu0 %v2479
        %2581 = vmatprep.subr.mxu0 %v2482
        %2582 = vmatpush1.msra.mxu0 %v2481
        %2583 = vmatprep.mubr.f32.mxu0 %v2509
        %2584 = vmatmul.mubr.f32.gmra.mrb[0].mxu0 %v2417
        %v2585 = vpop.f32.mrb[0].mxu0
        %v2586 = vadd.f32 %v2505, %v2585
        %v2587 = vpop.f32.mrb[0].mxu0
        %v2588 = vadd.f32 %v2505, %v2587
        %2589 = vdwg.mxu0
        %2590 = vmatprep.subr.mxu0 %v2484
        %2591 = vmatpush1.msra.mxu0 %v2483
        %2592 = vmatprep.subr.mxu0 %v2486
        %2593 = vmatpush1.msra.mxu0 %v2485
        %2594 = vmatprep.subr.mxu0 %v2488
        %2595 = vmatpush1.msra.mxu0 %v2487
        %2596 = vmatprep.subr.mxu0 %v2490
        %2597 = vmatpush1.msra.mxu0 %v2489
        %2598 = vmatprep.subr.mxu0 %v2492
        %2599 = vmatpush1.msra.mxu0 %v2491
        %2600 = vmatprep.subr.mxu0 %v2494
        %2601 = vmatpush1.msra.mxu0 %v2493
        %2602 = vmatprep.subr.mxu0 %v2496
        %2603 = vmatpush1.msra.mxu0 %v2495
        %2604 = vmatprep.subr.mxu0 %v2498
        %2605 = vmatpush1.msra.mxu0 %v2497
        %2606 = vmatprep.subr.mxu0 %v2517
        %2607 = vmatpush1.msra.mxu0 %v2514
        %2608 = vmatprep.subr.mxu0 0.0
        %2609 = vmatpush1.msra.mxu0 0.0
        %2610 = vmatprep.subr.mxu0 0.0
        %2611 = vmatpush1.msra.mxu0 0.0
        %2612 = vmatprep.subr.mxu0 0.0
        %2613 = vmatpush1.msra.mxu0 0.0
        %2614 = vmatprep.subr.mxu0 0.0
        %2615 = vmatpush1.msra.mxu0 0.0
        %2616 = vmatprep.subr.mxu0 0.0
        %2617 = vmatpush1.msra.mxu0 0.0
        %2618 = vmatprep.subr.mxu0 0.0
        %2619 = vmatpush1.msra.mxu0 0.0
        %2620 = vmatprep.subr.mxu0 0.0
        %2621 = vmatpush1.msra.mxu0 0.0
        %2622 = vmatprep.subr.mxu0 0.0
        %2623 = vmatpush1.msra.mxu0 0.0
        %2624 = vmatprep.subr.mxu0 0.0
        %2625 = vmatpush1.msra.mxu0 0.0
        %2626 = vmatprep.subr.mxu0 0.0
        %2627 = vmatpush1.msra.mxu0 0.0
        %2628 = vmatprep.subr.mxu0 0.0
        %2629 = vmatpush1.msra.mxu0 0.0
        %2630 = vmatprep.subr.mxu0 0.0
        %2631 = vmatpush1.msra.mxu0 0.0
        %2632 = vmatprep.subr.mxu0 0.0
        %2633 = vmatpush1.msra.mxu0 0.0
        %2634 = vmatprep.subr.mxu0 0.0
        %2635 = vmatpush1.msra.mxu0 0.0
        %2636 = vmatprep.subr.mxu0 0.0
        %2637 = vmatpush1.msra.mxu0 0.0
        %2638 = vmatprep.subr.mxu0 0.0
        %2639 = vmatpush1.msra.mxu0 0.0
        %2640 = vmatprep.subr.mxu0 0.0
        %2641 = vmatpush1.msra.mxu0 0.0
        %2642 = vmatprep.subr.mxu0 0.0
        %2643 = vmatpush1.msra.mxu0 0.0
        %2644 = vmatprep.subr.mxu0 0.0
        %2645 = vmatpush1.msra.mxu0 0.0
        %2646 = vmatprep.subr.mxu0 0.0
        %2647 = vmatpush1.msra.mxu0 0.0
        %2648 = vmatprep.subr.mxu0 0.0
        %2649 = vmatpush1.msra.mxu0 0.0
        %2650 = vmatprep.subr.mxu0 0.0
        %2651 = vmatpush1.msra.mxu0 0.0
        %2652 = vmatprep.subr.mxu0 0.0
        %2653 = vmatpush1.msra.mxu0 0.0
        %2654 = vmatprep.mubr.f32.mxu0 0.0
        %2655 = vmatmul.mubr.f32.gmra.mrb[0].mxu0 %v2511
        %v2656 = vpop.f32.mrb[0].mxu0
        %v2657 = vadd.f32 %v2586, %v2656
        %v2658 = vpop.f32.mrb[0].mxu0
        %v2659 = vadd.f32 %v2588, %v2658
        %2660 = vdwg.mxu0
        %v2661 = vmax.f32 %v2657, 0.0
        %v2662 = vmax.f32 %v2659, 0.0
        %v2665 = vrot.slane %v2661, 4
        %v2666 = vrot.slane %v2662, 4
        %2669 = vst [vmem:[#allocation2 + $0x10] sm:$0xf0] %v2665
        %2670 = vst [vmem:[#allocation2 + $0x18] sm:$0xf0] %v2666
        %v2671 = vld [vmem:[%s8] sm:$0xf]
        %v2672 = vld [vmem:[#allocation2] sm:$0xff]
        %v2673 = vld [vmem:[#allocation2 + $0x8] sm:$0xff]
        %v2674 = vld [vmem:[#allocation2 + $0x10] sm:$0xff]
        %v2675 = vld [vmem:[#allocation2 + $0x18] sm:$0xff]
        %vm2676 = vcmask 130048
        %v2678 = vsel %vm2676, %v2671, 0
        %2680 = vmatprep.subr.mxu0 %v2673
        %2681 = vmatpush1.msra.mxu0 %v2672
        %2682 = vmatprep.subr.mxu0 %v2675
        %2683 = vmatpush1.msra.mxu0 %v2674
        %2684 = vmatprep.subr.mxu0 0.0
        %2685 = vmatpush1.msra.mxu0 0.0
        %2686 = vmatprep.subr.mxu0 0.0
        %2687 = vmatpush1.msra.mxu0 0.0
        %2688 = vmatprep.subr.mxu0 0.0
        %2689 = vmatpush1.msra.mxu0 0.0
        %2690 = vmatprep.subr.mxu0 0.0
        %2691 = vmatpush1.msra.mxu0 0.0
        %2692 = vmatprep.subr.mxu0 0.0
        %2693 = vmatpush1.msra.mxu0 0.0
        %2694 = vmatprep.subr.mxu0 0.0
        %2695 = vmatpush1.msra.mxu0 0.0
        %2696 = vmatprep.subr.mxu0 0.0
        %2697 = vmatpush1.msra.mxu0 0.0
        %2698 = vmatprep.subr.mxu0 0.0
        %2699 = vmatpush1.msra.mxu0 0.0
        %2700 = vmatprep.subr.mxu0 0.0
        %2701 = vmatpush1.msra.mxu0 0.0
        %2702 = vmatprep.subr.mxu0 0.0
        %2703 = vmatpush1.msra.mxu0 0.0
        %2704 = vmatprep.subr.mxu0 0.0
        %2705 = vmatpush1.msra.mxu0 0.0
        %2706 = vmatprep.subr.mxu0 0.0
        %2707 = vmatpush1.msra.mxu0 0.0
        %2708 = vmatprep.subr.mxu0 0.0
        %2709 = vmatpush1.msra.mxu0 0.0
        %2710 = vmatprep.subr.mxu0 0.0
        %2711 = vmatpush1.msra.mxu0 0.0
        %2712 = vmatprep.subr.mxu0 0.0
        %2713 = vmatpush1.msra.mxu0 0.0
        %2714 = vmatprep.subr.mxu0 0.0
        %2715 = vmatpush1.msra.mxu0 0.0
        %2716 = vmatprep.subr.mxu0 0.0
        %2717 = vmatpush1.msra.mxu0 0.0
        %2718 = vmatprep.subr.mxu0 0.0
        %2719 = vmatpush1.msra.mxu0 0.0
        %2720 = vmatprep.subr.mxu0 0.0
        %2721 = vmatpush1.msra.mxu0 0.0
        %2722 = vmatprep.subr.mxu0 0.0
        %2723 = vmatpush1.msra.mxu0 0.0
        %2724 = vmatprep.subr.mxu0 0.0
        %2725 = vmatpush1.msra.mxu0 0.0
        %2726 = vmatprep.subr.mxu0 0.0
        %2727 = vmatpush1.msra.mxu0 0.0
        %2728 = vmatprep.subr.mxu0 0.0
        %2729 = vmatpush1.msra.mxu0 0.0
        %2730 = vmatprep.subr.mxu0 0.0
        %2731 = vmatpush1.msra.mxu0 0.0
        %2732 = vmatprep.subr.mxu0 0.0
        %2733 = vmatpush1.msra.mxu0 0.0
        %2734 = vmatprep.subr.mxu0 0.0
        %2735 = vmatpush1.msra.mxu0 0.0
        %2736 = vmatprep.subr.mxu0 0.0
        %2737 = vmatpush1.msra.mxu0 0.0
        %2738 = vmatprep.subr.mxu0 0.0
        %2739 = vmatpush1.msra.mxu0 0.0
        %2740 = vmatprep.subr.mxu0 0.0
        %2741 = vmatpush1.msra.mxu0 0.0
        %2742 = vmatprep.subr.mxu0 0.0
        %2743 = vmatpush1.msra.mxu0 0.0
        %2744 = vmatprep.mubr.f32.mxu0 0.0
        %2745 = vmatmul.mubr.f32.gmra.mrb[0].mxu0 %v2678
        %v2746 = vpop.f32.mrb[0].mxu0
        %v2747 = vadd.f32 0.0, %v2746
        %v2748 = vpop.f32.mrb[0].mxu0
        %v2749 = vadd.f32 0.0, %v2748
        %2750 = vdwg.mxu0
        %v2753 = vcombine.low %v2747, %v2749
        %2755 = vst [vmem:[%s363] sm:$0xff] %v2753
        %s2756 = sand.u32 %s229, 1
        %s2757 = scalar_lea.sflag [#allocation6], %s2756
        %s2758 = sand.u32 %s229, 1
        %s2759 = smul.addr %s2758, 8
        %s2760 = scalar_lea.vmem [#allocation9], %s2759
        // Predicated region
        $region65: #{tpu_custom_call.1} parent=55 // pred_check
          %p2761 = pneg %p239
        $region66: #{tpu_custom_call.1} parent=55 // pred_check_branch
          %2763 = sbr.rel (%p2761) target = $region68
        $region67: #{tpu_custom_call.1} parent=55 // pred_region
          %s2765 = ssub.s32 128, 128
          %2766 = vsyncadd %s2757, %s2765
          %s2767 = smul.addr %s27, 2
          %s2768 = smul.addr %s2767, 64
          %s2769 = scalar_lea.hbm %s9, %s2768
          %s2771 = sshll.u32 %s2760, 4
          %s2772 = int_to_ptr.vmem [resolvable:$true] %s2771
          %2774 = dma.vmem_to_hbm [thread:$0]  %s2772, 128, %s2769, %s2757
        $region68: #{tpu_custom_call.1} parent=55 // pred_fallthru
          _
      $region56: #{tpu_custom_call.1} parent=5 // pred_fallthru
        _
      %p2775 = scmp.le.s32.totalorder 2, %s22
      // Predicated region
      $region69: #{tpu_custom_call.1} parent=5 // pred_check
        %p2776 = pneg %p2775
      $region70: #{tpu_custom_call.1} parent=5 // pred_check_branch
        %2778 = sbr.rel (%p2776) target = $region72
      $region71: #{tpu_custom_call.1} parent=5 // pred_region
        %s2779 = ssub.s32 %s22, 2
        // Predicated region
        $region73: #{tpu_custom_call.1} parent=71 // pred_check
          %p2780 = pneg %p245
        $region74: #{tpu_custom_call.1} parent=71 // pred_check_branch
          %2782 = sbr.rel (%p2780) target = $region76
        $region75: #{tpu_custom_call.1} parent=71 // pred_region
          %s2783 = sand.u32 %s230, 1
          %s2784 = scalar_lea.sflag [#allocation6], %s2783
          %s2785 = sand.u32 %s230, 1
          %s2786 = smul.addr %s2785, 8
          %s2787 = scalar_lea.vmem [#allocation9], %s2786
          %2788 = dma.done %s2784, 128
        $region76: #{tpu_custom_call.1} parent=71 // pred_fallthru
          _
      $region72: #{tpu_custom_call.1} parent=5 // pred_fallthru
        _
    $region6: #{tpu_custom_call.1} parent=1 // loop_footer
      %s26 = sadd.s32 1, %s22
    $region7: #{tpu_custom_call.1} parent=1 // loop_footer_branch
      %21 = sbr.rel target = $region3
    $region8: #{tpu_custom_call.1} parent=1 // loop_exit
      _
    %2789 = vsyncpa [#allocation5], 1
    %s2790 = scalar_lea.sflag [#allocation5], 1
    %2791 = vsyncpa %s2790, 1
    %2792 = vsyncpa [#allocation8], 1
    %2793 = vsyncpa [#allocation6], 1
    %s2794 = scalar_lea.sflag [#allocation6], 1
    %2795 = vsyncpa %s2794, 1

</llo_original>
